<compile_context>
chip_gen: v7x
topology: tpu7x:2x2x1
jax: 0.10.0
libtpu: 0.0.40
codegen_flags: <defaults>
</compile_context>

<pallas_src>
import numpy as np
import jax
import jax.numpy as jnp
from jax.experimental import pallas as pl
from jax.experimental.pallas import tpu as pltpu


# -----------------------------------------------------------------------------
# Host-side operand construction (pure numpy, runs once at build time)
# -----------------------------------------------------------------------------
def _bilinear_matrix(n_in, n_out):
    """Interp matrix matching torch.nn.Upsample(bilinear, align_corners=False)."""
    u = np.zeros((n_out, n_in), dtype=np.float32)
    scale = n_in / n_out
    for j in range(n_out):
        src = max((j + 0.5) * scale - 0.5, 0.0)
        i0 = min(int(np.floor(src)), n_in - 1)
        i1 = min(i0 + 1, n_in - 1)
        frac = src - i0
        u[j, i0] += 1.0 - frac
        u[j, i1] += frac
    return u


def _conv_kh_matrices(w, w_in):
    """3x3 VALID conv in (H, W*C) layout as 3 accumulating right-matmuls.

        out[i] = sum_kh  a[i + kh, :] @ B_kh
        B_kh[(j+kw)*Cin + ci, j*Cout + co] = w[kh, kw, ci, co]
    """
    _, _, cin, cout = w.shape
    wo = w_in - 2
    mats = []
    for kh in range(3):
        m = np.zeros((w_in * cin, wo * cout), np.float32)
        for kw in range(3):
            for j in range(wo):
                m[(j + kw) * cin:(j + kw) * cin + cin,
                  j * cout:(j + 1) * cout] = w[kh, kw]
        mats.append(m)
    return mats


def _pool_row_selectors(n_imgs, stride, h_valid, rows_in):
    """Batch-aware 0/1 row selectors for MaxPool rows (also drop garbage rows)."""
    hp = h_valid // 2
    r_even = np.zeros((n_imgs * hp, rows_in), np.float32)
    r_odd = np.zeros((n_imgs * hp, rows_in), np.float32)
    for b in range(n_imgs):
        for i in range(hp):
            r_even[b * hp + i, b * stride + 2 * i] = 1.0
            r_odd[b * hp + i, b * stride + 2 * i + 1] = 1.0
    return r_even, r_odd


def _pool_col_selectors(w_in, c):
    """Exact 0/1 lane selectors for MaxPool columns (shared across images)."""
    wp = w_in // 2
    eye = np.eye(c, dtype=np.float32)
    c_even = np.zeros((w_in * c, wp * c), np.float32)
    c_odd = np.zeros((w_in * c, wp * c), np.float32)
    for j in range(wp):
        c_even[(2 * j) * c:(2 * j) * c + c, j * c:(j + 1) * c] = eye
        c_odd[(2 * j + 1) * c:(2 * j + 1) * c + c, j * c:(j + 1) * c] = eye
    return c_even, c_odd


def _upsample_row_matrix(n_imgs, stride, h_valid, rows_in):
    """Batch-aware height-interpolation left matrix (also compacts garbage)."""
    u = _bilinear_matrix(h_valid, 2 * h_valid)            # (2h, h)
    m = np.zeros((n_imgs * 2 * h_valid, rows_in), np.float32)
    for b in range(n_imgs):
        m[b * 2 * h_valid:(b + 1) * 2 * h_valid,
          b * stride:b * stride + h_valid] = u
    return m


def _upsample_lane_matrix(w_in, w_out, c):
    """Width-interpolation right matrix acting on the folded W*C lane axis."""
    uw = _bilinear_matrix(w_in, w_out)                    # (w_out, w_in)
    eye = np.eye(c, dtype=np.float32)
    m = np.zeros((w_in * c, w_out * c), np.float32)
    for j in range(w_out):
        for k in range(w_in):
            if uw[j, k] != 0.0:
                m[k * c:(k + 1) * c, j * c:(j + 1) * c] += uw[j, k] * eye
    return m


def build_unet_plan(params, h0, w0, down_up, crs, images_per_step):
    """Precompute every (bf16) kernel operand + the static spatial schedule."""
    c = int(params[0][0].shape[2])
    B = images_per_step
    n_blocks = 2 * down_up + 1
    assert len(params) == n_blocks and all(len(ws) == crs for ws in params)
    assert (B * h0) % 8 == 0, "images_per_step*H must be a multiple of 8"

    conv_mats, extras = [], []
    h, w = h0, w0        # per-image valid spatial dims
    stride = h0          # row distance between image starts in the stacked slab
    rows = B * h0        # total stacked rows (incl. conv boundary garbage)
    for blk in range(n_blocks):
        for r in range(crs):
            assert h > 2 and w > 2
            conv_mats.extend(_conv_kh_matrices(np.asarray(params[blk][r]), w))
            h, w, rows = h - 2, w - 2, rows - 2
        if blk < down_up:
            assert h % 2 == 0 and w % 2 == 0
            extras.extend(_pool_row_selectors(B, stride, h, rows))
            extras.extend(_pool_col_selectors(w, c))
            h, w = h // 2, w // 2
            stride, rows = h, B * h            # compacted again
        else:
            extras.append(_upsample_row_matrix(B, stride, h, rows))
            extras.append(_upsample_lane_matrix(w, 2 * w, c))
            h, w = 2 * h, 2 * w
            stride, rows = h, B * h            # compacted again
    assert (B * h) % 8 == 0

    mats = [jnp.asarray(m, dtype=jnp.bfloat16) for m in conv_mats + extras]
    return dict(c=c, down_up=down_up, crs=crs, h0=h0, w0=w0,
                images_per_step=B, mats=mats, out_hw=(h, w))


# -----------------------------------------------------------------------------
# The fused Pallas kernel (one grid step == images_per_step images, all in VMEM)
# -----------------------------------------------------------------------------
def _make_fused_unet_kernel(h0, w0, c, down_up, crs, images_per_step):
    n_blocks = 2 * down_up + 1
    n_layers = n_blocks * crs
    B = images_per_step

    def mxu(a, b):
        # Native bf16 MXU path (single pass) with f32 accumulation.
        return jnp.dot(a.astype(jnp.bfloat16), b.astype(jnp.bfloat16),
                       preferred_element_type=jnp.float32)

    def kernel(x_ref, *refs):
        conv_refs = refs[:3 * n_layers]
        extra_refs = refs[3 * n_layers:-1]
        o_ref = refs[-1]

        a = x_ref[...]                       # (B*h0, w0*c) stacked, lane-dense
        h, w = h0, w0                        # per-image valid dims
        rows = B * h0                        # stacked row count
        layer, ei = 0, 0
        skips = []
        for blk in range(n_blocks):
            # crs x (3x3 VALID conv + ReLU): three accumulating per-kh dots.
            # Convolving the whole stacked slab leaves garbage rows at image
            # boundaries, but each image's valid rows stay contiguous at
            # [b*stride, b*stride + h); the next left matrix (pool row
            # selector / Uh) drops the garbage and re-compacts.
            for _ in range(crs):
                ro = rows - 2
                acc = mxu(a[0:ro, :], conv_refs[3 * layer][...])
                acc = acc + mxu(a[1:1 + ro, :], conv_refs[3 * layer + 1][...])
                acc = acc + mxu(a[2:2 + ro, :], conv_refs[3 * layer + 2][...])
                a = jnp.maximum(acc, 0.0)
                rows, h, w, layer = ro, h - 2, w - 2, layer + 1
            if blk < down_up:
                # MaxPool2d(2, 2): batch-aware 0/1 row selectors (which also
                # compact) + exact 0/1 column selectors, all bf16-exact.
                r_even = extra_refs[ei][...]
                r_odd = extra_refs[ei + 1][...]
                c_even = extra_refs[ei + 2][...]
                c_odd = extra_refs[ei + 3][...]
                ei += 4
                rmax = jnp.maximum(mxu(r_even, a), mxu(r_odd, a))
                a = jnp.maximum(mxu(rmax, c_even), mxu(rmax, c_odd))
                h, w = h // 2, w // 2
                rows = B * h
                skips.append(a)
            else:
                # Bilinear x2 upsample: batch-aware height interp (compacting)
                # then width interp on the folded W*C lane axis, + skip add.
                uh = extra_refs[ei][...]
                uwe = extra_refs[ei + 1][...]
                ei += 2
                up = mxu(mxu(uh, a), uwe)
                a = skips[::-1][blk % down_up] + up
                h, w = 2 * h, 2 * w
                rows = B * h
        o_ref[...] = a.astype(o_ref.dtype)

    return kernel


def unet_forward_pallas(x_nhwc, plan):
    """Fused UNet forward.  NHWC in / NHWC out (lane-dense layout end to end)."""
    n, h0, w0, c = x_nhwc.shape
    B = plan['images_per_step']
    assert c == plan['c'] and h0 == plan['h0'] and w0 == plan['w0']
    assert n % B == 0, "batch must be a multiple of images_per_step"
    ho, wo = plan['out_hw']

    # NHWC -> stacked lane-dense (N*H, W*C): a free row-major reshape, no
    # transpose launches on the host path.
    x2 = x_nhwc.reshape(n * h0, w0 * c).astype(jnp.float32)

    mats = plan['mats']
    kernel = _make_fused_unet_kernel(h0, w0, c, plan['down_up'], plan['crs'], B)

    in_specs = [pl.BlockSpec((B * h0, w0 * c), lambda i: (i, 0))]
    in_specs += [pl.BlockSpec(m.shape, lambda i: (0, 0)) for m in mats]

    out = pl.pallas_call(
        kernel,
        out_shape=jax.ShapeDtypeStruct((n * ho, wo * c), jnp.float32),
        grid=(n // B,),                      # keep >= 2 so both v7x TCs work
        in_specs=in_specs,
        out_specs=pl.BlockSpec((B * ho, wo * c), lambda i: (i, 0)),
        compiler_params=pltpu.CompilerParams(
            dimension_semantics=("parallel",)),
    )(x2, *mats)

    return out.reshape(n, ho, wo, c)


# -----------------------------------------------------------------------------
# Parameters + pure-JAX f32 reference (lax.conv / reshape-max / bilinear)
# -----------------------------------------------------------------------------
def init_unet_params(key, down_up=1, n_filters=8, kernel_size=3, crs=2):
    n_blocks = 2 * down_up + 1
    scale = float(np.sqrt(2.0 / (n_filters * kernel_size * kernel_size)))
    keys = jax.random.split(key, n_blocks * crs)
    params, k = [], 0
    for _ in range(n_blocks):
        ws = []
        for _ in range(crs):
            # layout (kh, kw, Cin, Cout) == PyTorch (Cout, Cin, kh, kw).transpose(2,3,1,0)
            ws.append(scale * jax.random.normal(
                keys[k], (kernel_size, kernel_size, n_filters, n_filters),
                dtype=jnp.float32))
            k += 1
        params.append(ws)
    return params


def unet_forward_reference(x_nhwc, params, down_up=1):
    """Independent f32 reference using standard conv / pool / upsample ops."""
    hp = jax.lax.Precision.HIGHEST
    x = x_nhwc
    outputs = []
    for i, ws in enumerate(params):
        h = x
        for w in ws:
            h = jax.lax.conv_general_dilated(
                h, w, window_strides=(1, 1), padding='VALID',
                dimension_numbers=('NHWC', 'HWIO', 'NHWC'), precision=hp)
            h = jnp.maximum(h, 0.0)
        if i < down_up:
            n, hh, ww, c = h.shape
            x = h.reshape(n, hh // 2, 2, ww // 2, 2, c).max(axis=(2, 4))
            outputs.append(x)
        else:
            skip = outputs[::-1][i % down_up]
            n, hh, ww, c = h.shape
            uh = jnp.asarray(_bilinear_matrix(hh, 2 * hh))
            uw = jnp.asarray(_bilinear_matrix(ww, 2 * ww))
            t = jnp.einsum('oh,nhwc->nowc', uh, h, precision=hp)
            up = jnp.einsum('pw,nowc->nopc', uw, t, precision=hp)
            x = skip + up
    return x


# -----------------------------------------------------------------------------
if __name__ == "__main__":
    key = jax.random.PRNGKey(0)
    k_x, k_p = jax.random.split(key)

    down_up, n_filters, crs = 1, 8, 2
    # Spatial size chosen so VALID 3x3 convs + x2 down/upsampling line up with
    # the skip connections exactly:
    #   20 -conv-> 18 -conv-> 16 -pool-> 8 -conv-> 6 -conv-> 4 -up-> 8 (+skip 8)
    h0 = w0 = 20
    n_batch, images_per_step = 8, 4          # grid = (2,): both v7x TCs busy

    x = jax.random.normal(k_x, (n_batch, h0, w0, n_filters), dtype=jnp.float32)
    params = init_unet_params(k_p, down_up=down_up, n_filters=n_filters, crs=crs)
    plan = build_unet_plan(params, h0, w0, down_up=down_up, crs=crs,
                           images_per_step=images_per_step)

    fwd = jax.jit(lambda xx: unet_forward_pallas(xx, plan))
    out = jax.block_until_ready(fwd(x))
    assert out.shape == (n_batch, 8, 8, n_filters)

    ref = unet_forward_reference(x, params, down_up=down_up)
    # bf16 MXU operands (per the perf review) vs a HIGHEST-precision f32
    # reference: the 0/1 selector and bilinear matrices are exact in bf16, so
    # the remaining error is bf16 rounding of the conv bands / activations
    # (~1e-2 level over the 4-6 cascaded matmuls); 3e-2 gives safe headroom.
    np.testing.assert_allclose(np.asarray(out), np.asarray(ref),
                               rtol=3e-2, atol=3e-2)
    print("KERNEL_OK")
</pallas_src>

<mosaic_0001>
module attributes {stable_mosaic.version = 11 : i64} {
  func.func @kernel(%arg0: i32, %arg1: memref<80x160xf32, #tpu.memory_space<vmem>>, %arg2: memref<160x144xbf16, #tpu.memory_space<vmem>>, %arg3: memref<160x144xbf16, #tpu.memory_space<vmem>>, %arg4: memref<160x144xbf16, #tpu.memory_space<vmem>>, %arg5: memref<144x128xbf16, #tpu.memory_space<vmem>>, %arg6: memref<144x128xbf16, #tpu.memory_space<vmem>>, %arg7: memref<144x128xbf16, #tpu.memory_space<vmem>>, %arg8: memref<64x48xbf16, #tpu.memory_space<vmem>>, %arg9: memref<64x48xbf16, #tpu.memory_space<vmem>>, %arg10: memref<64x48xbf16, #tpu.memory_space<vmem>>, %arg11: memref<48x32xbf16, #tpu.memory_space<vmem>>, %arg12: memref<48x32xbf16, #tpu.memory_space<vmem>>, %arg13: memref<48x32xbf16, #tpu.memory_space<vmem>>, %arg14: memref<64x48xbf16, #tpu.memory_space<vmem>>, %arg15: memref<64x48xbf16, #tpu.memory_space<vmem>>, %arg16: memref<64x48xbf16, #tpu.memory_space<vmem>>, %arg17: memref<48x32xbf16, #tpu.memory_space<vmem>>, %arg18: memref<48x32xbf16, #tpu.memory_space<vmem>>, %arg19: memref<48x32xbf16, #tpu.memory_space<vmem>>, %arg20: memref<32x76xbf16, #tpu.memory_space<vmem>>, %arg21: memref<32x76xbf16, #tpu.memory_space<vmem>>, %arg22: memref<128x64xbf16, #tpu.memory_space<vmem>>, %arg23: memref<128x64xbf16, #tpu.memory_space<vmem>>, %arg24: memref<32x28xbf16, #tpu.memory_space<vmem>>, %arg25: memref<32x64xbf16, #tpu.memory_space<vmem>>, %arg26: memref<32x28xbf16, #tpu.memory_space<vmem>>, %arg27: memref<32x64xbf16, #tpu.memory_space<vmem>>, %arg28: memref<32x64xf32, #tpu.memory_space<vmem>>) attributes {dimension_semantics = [#tpu.dimension_semantics<parallel>], iteration_bounds = array<i64: 2>, scalar_prefetch = 0 : i64, scratch_operands = 0 : i64, tpu.core_type = #tpu.core_type<tc>, window_params = [{transform_indices = @transform_0, window_bounds = array<i64: 80, 160>}, {pipeline_mode = #tpu.pipeline_mode<synchronous>, transform_indices = @transform_1, window_bounds = array<i64: 160, 144>}, {pipeline_mode = #tpu.pipeline_mode<synchronous>, transform_indices = @transform_2, window_bounds = array<i64: 160, 144>}, {pipeline_mode = #tpu.pipeline_mode<synchronous>, transform_indices = @transform_3, window_bounds = array<i64: 160, 144>}, {pipeline_mode = #tpu.pipeline_mode<synchronous>, transform_indices = @transform_4, window_bounds = array<i64: 144, 128>}, {pipeline_mode = #tpu.pipeline_mode<synchronous>, transform_indices = @transform_5, window_bounds = array<i64: 144, 128>}, {pipeline_mode = #tpu.pipeline_mode<synchronous>, transform_indices = @transform_6, window_bounds = array<i64: 144, 128>}, {pipeline_mode = #tpu.pipeline_mode<synchronous>, transform_indices = @transform_7, window_bounds = array<i64: 64, 48>}, {pipeline_mode = #tpu.pipeline_mode<synchronous>, transform_indices = @transform_8, window_bounds = array<i64: 64, 48>}, {pipeline_mode = #tpu.pipeline_mode<synchronous>, transform_indices = @transform_9, window_bounds = array<i64: 64, 48>}, {pipeline_mode = #tpu.pipeline_mode<synchronous>, transform_indices = @transform_10, window_bounds = array<i64: 48, 32>}, {pipeline_mode = #tpu.pipeline_mode<synchronous>, transform_indices = @transform_11, window_bounds = array<i64: 48, 32>}, {pipeline_mode = #tpu.pipeline_mode<synchronous>, transform_indices = @transform_12, window_bounds = array<i64: 48, 32>}, {pipeline_mode = #tpu.pipeline_mode<synchronous>, transform_indices = @transform_13, window_bounds = array<i64: 64, 48>}, {pipeline_mode = #tpu.pipeline_mode<synchronous>, transform_indices = @transform_14, window_bounds = array<i64: 64, 48>}, {pipeline_mode = #tpu.pipeline_mode<synchronous>, transform_indices = @transform_15, window_bounds = array<i64: 64, 48>}, {pipeline_mode = #tpu.pipeline_mode<synchronous>, transform_indices = @transform_16, window_bounds = array<i64: 48, 32>}, {pipeline_mode = #tpu.pipeline_mode<synchronous>, transform_indices = @transform_17, window_bounds = array<i64: 48, 32>}, {pipeline_mode = #tpu.pipeline_mode<synchronous>, transform_indices = @transform_18, window_bounds = array<i64: 48, 32>}, {pipeline_mode = #tpu.pipeline_mode<synchronous>, transform_indices = @transform_19, window_bounds = array<i64: 32, 76>}, {pipeline_mode = #tpu.pipeline_mode<synchronous>, transform_indices = @transform_20, window_bounds = array<i64: 32, 76>}, {pipeline_mode = #tpu.pipeline_mode<synchronous>, transform_indices = @transform_21, window_bounds = array<i64: 128, 64>}, {pipeline_mode = #tpu.pipeline_mode<synchronous>, transform_indices = @transform_22, window_bounds = array<i64: 128, 64>}, {pipeline_mode = #tpu.pipeline_mode<synchronous>, transform_indices = @transform_23, window_bounds = array<i64: 32, 28>}, {pipeline_mode = #tpu.pipeline_mode<synchronous>, transform_indices = @transform_24, window_bounds = array<i64: 32, 64>}, {pipeline_mode = #tpu.pipeline_mode<synchronous>, transform_indices = @transform_25, window_bounds = array<i64: 32, 28>}, {pipeline_mode = #tpu.pipeline_mode<synchronous>, transform_indices = @transform_26, window_bounds = array<i64: 32, 64>}, {transform_indices = @transform_27, window_bounds = array<i64: 32, 64>}]} {
    %c0 = arith.constant 0 : index
    %c0_0 = arith.constant 0 : index
    %0 = vector.load %arg1[%c0, %c0_0] : memref<80x160xf32, #tpu.memory_space<vmem>>, vector<80x160xf32>
    %1 = vector.extract_strided_slice %0 {offsets = [0, 0], sizes = [78, 160], strides = [1, 1]} : vector<80x160xf32> to vector<78x160xf32>
    %c0_1 = arith.constant 0 : index
    %c0_2 = arith.constant 0 : index
    %2 = vector.load %arg2[%c0_1, %c0_2] : memref<160x144xbf16, #tpu.memory_space<vmem>>, vector<160x144xbf16>
    %3 = arith.truncf %1 : vector<78x160xf32> to vector<78x160xbf16>
    %cst = arith.constant dense<0.000000e+00> : vector<78x144xf32>
    %4 = tpu.matmul %3, %2, %cst {dimension_numbers = #tpu.dot_dimension_numbers<[1], [0], [0], [1], [0, 0, 1, 1], [], []>} : vector<78x160xbf16>, vector<160x144xbf16>, vector<78x144xf32> -> vector<78x144xf32>
    %5 = vector.extract_strided_slice %0 {offsets = [1, 0], sizes = [78, 160], strides = [1, 1]} : vector<80x160xf32> to vector<78x160xf32>
    %c0_3 = arith.constant 0 : index
    %c0_4 = arith.constant 0 : index
    %6 = vector.load %arg3[%c0_3, %c0_4] : memref<160x144xbf16, #tpu.memory_space<vmem>>, vector<160x144xbf16>
    %7 = arith.truncf %5 : vector<78x160xf32> to vector<78x160xbf16>
    %cst_5 = arith.constant dense<0.000000e+00> : vector<78x144xf32>
    %8 = tpu.matmul %7, %6, %cst_5 {dimension_numbers = #tpu.dot_dimension_numbers<[1], [0], [0], [1], [0, 0, 1, 1], [], []>} : vector<78x160xbf16>, vector<160x144xbf16>, vector<78x144xf32> -> vector<78x144xf32>
    %9 = arith.addf %4, %8 : vector<78x144xf32>
    %10 = vector.extract_strided_slice %0 {offsets = [2, 0], sizes = [78, 160], strides = [1, 1]} : vector<80x160xf32> to vector<78x160xf32>
    %c0_6 = arith.constant 0 : index
    %c0_7 = arith.constant 0 : index
    %11 = vector.load %arg4[%c0_6, %c0_7] : memref<160x144xbf16, #tpu.memory_space<vmem>>, vector<160x144xbf16>
    %12 = arith.truncf %10 : vector<78x160xf32> to vector<78x160xbf16>
    %cst_8 = arith.constant dense<0.000000e+00> : vector<78x144xf32>
    %13 = tpu.matmul %12, %11, %cst_8 {dimension_numbers = #tpu.dot_dimension_numbers<[1], [0], [0], [1], [0, 0, 1, 1], [], []>} : vector<78x160xbf16>, vector<160x144xbf16>, vector<78x144xf32> -> vector<78x144xf32>
    %14 = arith.addf %9, %13 : vector<78x144xf32>
    %cst_9 = arith.constant 0.000000e+00 : f32
    %15 = vector.broadcast %cst_9 : f32 to vector<78x144xf32>
    %16 = arith.maximumf %14, %15 : vector<78x144xf32>
    %17 = vector.extract_strided_slice %16 {offsets = [0, 0], sizes = [76, 144], strides = [1, 1]} : vector<78x144xf32> to vector<76x144xf32>
    %c0_10 = arith.constant 0 : index
    %c0_11 = arith.constant 0 : index
    %18 = vector.load %arg5[%c0_10, %c0_11] : memref<144x128xbf16, #tpu.memory_space<vmem>>, vector<144x128xbf16>
    %19 = arith.truncf %17 : vector<76x144xf32> to vector<76x144xbf16>
    %cst_12 = arith.constant dense<0.000000e+00> : vector<76x128xf32>
    %20 = tpu.matmul %19, %18, %cst_12 {dimension_numbers = #tpu.dot_dimension_numbers<[1], [0], [0], [1], [0, 0, 1, 1], [], []>} : vector<76x144xbf16>, vector<144x128xbf16>, vector<76x128xf32> -> vector<76x128xf32>
    %21 = vector.extract_strided_slice %16 {offsets = [1, 0], sizes = [76, 144], strides = [1, 1]} : vector<78x144xf32> to vector<76x144xf32>
    %c0_13 = arith.constant 0 : index
    %c0_14 = arith.constant 0 : index
    %22 = vector.load %arg6[%c0_13, %c0_14] : memref<144x128xbf16, #tpu.memory_space<vmem>>, vector<144x128xbf16>
    %23 = arith.truncf %21 : vector<76x144xf32> to vector<76x144xbf16>
    %cst_15 = arith.constant dense<0.000000e+00> : vector<76x128xf32>
    %24 = tpu.matmul %23, %22, %cst_15 {dimension_numbers = #tpu.dot_dimension_numbers<[1], [0], [0], [1], [0, 0, 1, 1], [], []>} : vector<76x144xbf16>, vector<144x128xbf16>, vector<76x128xf32> -> vector<76x128xf32>
    %25 = arith.addf %20, %24 : vector<76x128xf32>
    %26 = vector.extract_strided_slice %16 {offsets = [2, 0], sizes = [76, 144], strides = [1, 1]} : vector<78x144xf32> to vector<76x144xf32>
    %c0_16 = arith.constant 0 : index
    %c0_17 = arith.constant 0 : index
    %27 = vector.load %arg7[%c0_16, %c0_17] : memref<144x128xbf16, #tpu.memory_space<vmem>>, vector<144x128xbf16>
    %28 = arith.truncf %26 : vector<76x144xf32> to vector<76x144xbf16>
    %cst_18 = arith.constant dense<0.000000e+00> : vector<76x128xf32>
    %29 = tpu.matmul %28, %27, %cst_18 {dimension_numbers = #tpu.dot_dimension_numbers<[1], [0], [0], [1], [0, 0, 1, 1], [], []>} : vector<76x144xbf16>, vector<144x128xbf16>, vector<76x128xf32> -> vector<76x128xf32>
    %30 = arith.addf %25, %29 : vector<76x128xf32>
    %cst_19 = arith.constant 0.000000e+00 : f32
    %31 = vector.broadcast %cst_19 : f32 to vector<76x128xf32>
    %32 = arith.maximumf %30, %31 : vector<76x128xf32>
    %c0_20 = arith.constant 0 : index
    %c0_21 = arith.constant 0 : index
    %33 = vector.load %arg20[%c0_20, %c0_21] : memref<32x76xbf16, #tpu.memory_space<vmem>>, vector<32x76xbf16>
    %c0_22 = arith.constant 0 : index
    %c0_23 = arith.constant 0 : index
    %34 = vector.load %arg21[%c0_22, %c0_23] : memref<32x76xbf16, #tpu.memory_space<vmem>>, vector<32x76xbf16>
    %c0_24 = arith.constant 0 : index
    %c0_25 = arith.constant 0 : index
    %35 = vector.load %arg22[%c0_24, %c0_25] : memref<128x64xbf16, #tpu.memory_space<vmem>>, vector<128x64xbf16>
    %c0_26 = arith.constant 0 : index
    %c0_27 = arith.constant 0 : index
    %36 = vector.load %arg23[%c0_26, %c0_27] : memref<128x64xbf16, #tpu.memory_space<vmem>>, vector<128x64xbf16>
    %37 = arith.truncf %32 : vector<76x128xf32> to vector<76x128xbf16>
    %cst_28 = arith.constant dense<0.000000e+00> : vector<32x128xf32>
    %38 = tpu.matmul %33, %37, %cst_28 {dimension_numbers = #tpu.dot_dimension_numbers<[1], [0], [0], [1], [0, 0, 1, 1], [], []>} : vector<32x76xbf16>, vector<76x128xbf16>, vector<32x128xf32> -> vector<32x128xf32>
    %39 = arith.truncf %32 : vector<76x128xf32> to vector<76x128xbf16>
    %cst_29 = arith.constant dense<0.000000e+00> : vector<32x128xf32>
    %40 = tpu.matmul %34, %39, %cst_29 {dimension_numbers = #tpu.dot_dimension_numbers<[1], [0], [0], [1], [0, 0, 1, 1], [], []>} : vector<32x76xbf16>, vector<76x128xbf16>, vector<32x128xf32> -> vector<32x128xf32>
    %41 = arith.maximumf %38, %40 : vector<32x128xf32>
    %42 = arith.truncf %41 : vector<32x128xf32> to vector<32x128xbf16>
    %cst_30 = arith.constant dense<0.000000e+00> : vector<32x64xf32>
    %43 = tpu.matmul %42, %35, %cst_30 {dimension_numbers = #tpu.dot_dimension_numbers<[1], [0], [0], [1], [0, 0, 1, 1], [], []>} : vector<32x128xbf16>, vector<128x64xbf16>, vector<32x64xf32> -> vector<32x64xf32>
    %44 = arith.truncf %41 : vector<32x128xf32> to vector<32x128xbf16>
    %cst_31 = arith.constant dense<0.000000e+00> : vector<32x64xf32>
    %45 = tpu.matmul %44, %36, %cst_31 {dimension_numbers = #tpu.dot_dimension_numbers<[1], [0], [0], [1], [0, 0, 1, 1], [], []>} : vector<32x128xbf16>, vector<128x64xbf16>, vector<32x64xf32> -> vector<32x64xf32>
    %46 = arith.maximumf %43, %45 : vector<32x64xf32>
    %47 = vector.extract_strided_slice %46 {offsets = [0, 0], sizes = [30, 64], strides = [1, 1]} : vector<32x64xf32> to vector<30x64xf32>
    %c0_32 = arith.constant 0 : index
    %c0_33 = arith.constant 0 : index
    %48 = vector.load %arg8[%c0_32, %c0_33] : memref<64x48xbf16, #tpu.memory_space<vmem>>, vector<64x48xbf16>
    %49 = arith.truncf %47 : vector<30x64xf32> to vector<30x64xbf16>
    %cst_34 = arith.constant dense<0.000000e+00> : vector<30x48xf32>
    %50 = tpu.matmul %49, %48, %cst_34 {dimension_numbers = #tpu.dot_dimension_numbers<[1], [0], [0], [1], [0, 0, 1, 1], [], []>} : vector<30x64xbf16>, vector<64x48xbf16>, vector<30x48xf32> -> vector<30x48xf32>
    %51 = vector.extract_strided_slice %46 {offsets = [1, 0], sizes = [30, 64], strides = [1, 1]} : vector<32x64xf32> to vector<30x64xf32>
    %c0_35 = arith.constant 0 : index
    %c0_36 = arith.constant 0 : index
    %52 = vector.load %arg9[%c0_35, %c0_36] : memref<64x48xbf16, #tpu.memory_space<vmem>>, vector<64x48xbf16>
    %53 = arith.truncf %51 : vector<30x64xf32> to vector<30x64xbf16>
    %cst_37 = arith.constant dense<0.000000e+00> : vector<30x48xf32>
    %54 = tpu.matmul %53, %52, %cst_37 {dimension_numbers = #tpu.dot_dimension_numbers<[1], [0], [0], [1], [0, 0, 1, 1], [], []>} : vector<30x64xbf16>, vector<64x48xbf16>, vector<30x48xf32> -> vector<30x48xf32>
    %55 = arith.addf %50, %54 : vector<30x48xf32>
    %56 = vector.extract_strided_slice %46 {offsets = [2, 0], sizes = [30, 64], strides = [1, 1]} : vector<32x64xf32> to vector<30x64xf32>
    %c0_38 = arith.constant 0 : index
    %c0_39 = arith.constant 0 : index
    %57 = vector.load %arg10[%c0_38, %c0_39] : memref<64x48xbf16, #tpu.memory_space<vmem>>, vector<64x48xbf16>
    %58 = arith.truncf %56 : vector<30x64xf32> to vector<30x64xbf16>
    %cst_40 = arith.constant dense<0.000000e+00> : vector<30x48xf32>
    %59 = tpu.matmul %58, %57, %cst_40 {dimension_numbers = #tpu.dot_dimension_numbers<[1], [0], [0], [1], [0, 0, 1, 1], [], []>} : vector<30x64xbf16>, vector<64x48xbf16>, vector<30x48xf32> -> vector<30x48xf32>
    %60 = arith.addf %55, %59 : vector<30x48xf32>
    %cst_41 = arith.constant 0.000000e+00 : f32
    %61 = vector.broadcast %cst_41 : f32 to vector<30x48xf32>
    %62 = arith.maximumf %60, %61 : vector<30x48xf32>
    %63 = vector.extract_strided_slice %62 {offsets = [0, 0], sizes = [28, 48], strides = [1, 1]} : vector<30x48xf32> to vector<28x48xf32>
    %c0_42 = arith.constant 0 : index
    %c0_43 = arith.constant 0 : index
    %64 = vector.load %arg11[%c0_42, %c0_43] : memref<48x32xbf16, #tpu.memory_space<vmem>>, vector<48x32xbf16>
    %65 = arith.truncf %63 : vector<28x48xf32> to vector<28x48xbf16>
    %cst_44 = arith.constant dense<0.000000e+00> : vector<28x32xf32>
    %66 = tpu.matmul %65, %64, %cst_44 {dimension_numbers = #tpu.dot_dimension_numbers<[1], [0], [0], [1], [0, 0, 1, 1], [], []>} : vector<28x48xbf16>, vector<48x32xbf16>, vector<28x32xf32> -> vector<28x32xf32>
    %67 = vector.extract_strided_slice %62 {offsets = [1, 0], sizes = [28, 48], strides = [1, 1]} : vector<30x48xf32> to vector<28x48xf32>
    %c0_45 = arith.constant 0 : index
    %c0_46 = arith.constant 0 : index
    %68 = vector.load %arg12[%c0_45, %c0_46] : memref<48x32xbf16, #tpu.memory_space<vmem>>, vector<48x32xbf16>
    %69 = arith.truncf %67 : vector<28x48xf32> to vector<28x48xbf16>
    %cst_47 = arith.constant dense<0.000000e+00> : vector<28x32xf32>
    %70 = tpu.matmul %69, %68, %cst_47 {dimension_numbers = #tpu.dot_dimension_numbers<[1], [0], [0], [1], [0, 0, 1, 1], [], []>} : vector<28x48xbf16>, vector<48x32xbf16>, vector<28x32xf32> -> vector<28x32xf32>
    %71 = arith.addf %66, %70 : vector<28x32xf32>
    %72 = vector.extract_strided_slice %62 {offsets = [2, 0], sizes = [28, 48], strides = [1, 1]} : vector<30x48xf32> to vector<28x48xf32>
    %c0_48 = arith.constant 0 : index
    %c0_49 = arith.constant 0 : index
    %73 = vector.load %arg13[%c0_48, %c0_49] : memref<48x32xbf16, #tpu.memory_space<vmem>>, vector<48x32xbf16>
    %74 = arith.truncf %72 : vector<28x48xf32> to vector<28x48xbf16>
    %cst_50 = arith.constant dense<0.000000e+00> : vector<28x32xf32>
    %75 = tpu.matmul %74, %73, %cst_50 {dimension_numbers = #tpu.dot_dimension_numbers<[1], [0], [0], [1], [0, 0, 1, 1], [], []>} : vector<28x48xbf16>, vector<48x32xbf16>, vector<28x32xf32> -> vector<28x32xf32>
    %76 = arith.addf %71, %75 : vector<28x32xf32>
    %cst_51 = arith.constant 0.000000e+00 : f32
    %77 = vector.broadcast %cst_51 : f32 to vector<28x32xf32>
    %78 = arith.maximumf %76, %77 : vector<28x32xf32>
    %c0_52 = arith.constant 0 : index
    %c0_53 = arith.constant 0 : index
    %79 = vector.load %arg24[%c0_52, %c0_53] : memref<32x28xbf16, #tpu.memory_space<vmem>>, vector<32x28xbf16>
    %c0_54 = arith.constant 0 : index
    %c0_55 = arith.constant 0 : index
    %80 = vector.load %arg25[%c0_54, %c0_55] : memref<32x64xbf16, #tpu.memory_space<vmem>>, vector<32x64xbf16>
    %81 = arith.truncf %78 : vector<28x32xf32> to vector<28x32xbf16>
    %cst_56 = arith.constant dense<0.000000e+00> : vector<32x32xf32>
    %82 = tpu.matmul %79, %81, %cst_56 {dimension_numbers = #tpu.dot_dimension_numbers<[1], [0], [0], [1], [0, 0, 1, 1], [], []>} : vector<32x28xbf16>, vector<28x32xbf16>, vector<32x32xf32> -> vector<32x32xf32>
    %83 = arith.truncf %82 : vector<32x32xf32> to vector<32x32xbf16>
    %cst_57 = arith.constant dense<0.000000e+00> : vector<32x64xf32>
    %84 = tpu.matmul %83, %80, %cst_57 {dimension_numbers = #tpu.dot_dimension_numbers<[1], [0], [0], [1], [0, 0, 1, 1], [], []>} : vector<32x32xbf16>, vector<32x64xbf16>, vector<32x64xf32> -> vector<32x64xf32>
    %85 = arith.addf %46, %84 : vector<32x64xf32>
    %86 = vector.extract_strided_slice %85 {offsets = [0, 0], sizes = [30, 64], strides = [1, 1]} : vector<32x64xf32> to vector<30x64xf32>
    %c0_58 = arith.constant 0 : index
    %c0_59 = arith.constant 0 : index
    %87 = vector.load %arg14[%c0_58, %c0_59] : memref<64x48xbf16, #tpu.memory_space<vmem>>, vector<64x48xbf16>
    %88 = arith.truncf %86 : vector<30x64xf32> to vector<30x64xbf16>
    %cst_60 = arith.constant dense<0.000000e+00> : vector<30x48xf32>
    %89 = tpu.matmul %88, %87, %cst_60 {dimension_numbers = #tpu.dot_dimension_numbers<[1], [0], [0], [1], [0, 0, 1, 1], [], []>} : vector<30x64xbf16>, vector<64x48xbf16>, vector<30x48xf32> -> vector<30x48xf32>
    %90 = vector.extract_strided_slice %85 {offsets = [1, 0], sizes = [30, 64], strides = [1, 1]} : vector<32x64xf32> to vector<30x64xf32>
    %c0_61 = arith.constant 0 : index
    %c0_62 = arith.constant 0 : index
    %91 = vector.load %arg15[%c0_61, %c0_62] : memref<64x48xbf16, #tpu.memory_space<vmem>>, vector<64x48xbf16>
    %92 = arith.truncf %90 : vector<30x64xf32> to vector<30x64xbf16>
    %cst_63 = arith.constant dense<0.000000e+00> : vector<30x48xf32>
    %93 = tpu.matmul %92, %91, %cst_63 {dimension_numbers = #tpu.dot_dimension_numbers<[1], [0], [0], [1], [0, 0, 1, 1], [], []>} : vector<30x64xbf16>, vector<64x48xbf16>, vector<30x48xf32> -> vector<30x48xf32>
    %94 = arith.addf %89, %93 : vector<30x48xf32>
    %95 = vector.extract_strided_slice %85 {offsets = [2, 0], sizes = [30, 64], strides = [1, 1]} : vector<32x64xf32> to vector<30x64xf32>
    %c0_64 = arith.constant 0 : index
    %c0_65 = arith.constant 0 : index
    %96 = vector.load %arg16[%c0_64, %c0_65] : memref<64x48xbf16, #tpu.memory_space<vmem>>, vector<64x48xbf16>
    %97 = arith.truncf %95 : vector<30x64xf32> to vector<30x64xbf16>
    %cst_66 = arith.constant dense<0.000000e+00> : vector<30x48xf32>
    %98 = tpu.matmul %97, %96, %cst_66 {dimension_numbers = #tpu.dot_dimension_numbers<[1], [0], [0], [1], [0, 0, 1, 1], [], []>} : vector<30x64xbf16>, vector<64x48xbf16>, vector<30x48xf32> -> vector<30x48xf32>
    %99 = arith.addf %94, %98 : vector<30x48xf32>
    %cst_67 = arith.constant 0.000000e+00 : f32
    %100 = vector.broadcast %cst_67 : f32 to vector<30x48xf32>
    %101 = arith.maximumf %99, %100 : vector<30x48xf32>
    %102 = vector.extract_strided_slice %101 {offsets = [0, 0], sizes = [28, 48], strides = [1, 1]} : vector<30x48xf32> to vector<28x48xf32>
    %c0_68 = arith.constant 0 : index
    %c0_69 = arith.constant 0 : index
    %103 = vector.load %arg17[%c0_68, %c0_69] : memref<48x32xbf16, #tpu.memory_space<vmem>>, vector<48x32xbf16>
    %104 = arith.truncf %102 : vector<28x48xf32> to vector<28x48xbf16>
    %cst_70 = arith.constant dense<0.000000e+00> : vector<28x32xf32>
    %105 = tpu.matmul %104, %103, %cst_70 {dimension_numbers = #tpu.dot_dimension_numbers<[1], [0], [0], [1], [0, 0, 1, 1], [], []>} : vector<28x48xbf16>, vector<48x32xbf16>, vector<28x32xf32> -> vector<28x32xf32>
    %106 = vector.extract_strided_slice %101 {offsets = [1, 0], sizes = [28, 48], strides = [1, 1]} : vector<30x48xf32> to vector<28x48xf32>
    %c0_71 = arith.constant 0 : index
    %c0_72 = arith.constant 0 : index
    %107 = vector.load %arg18[%c0_71, %c0_72] : memref<48x32xbf16, #tpu.memory_space<vmem>>, vector<48x32xbf16>
    %108 = arith.truncf %106 : vector<28x48xf32> to vector<28x48xbf16>
    %cst_73 = arith.constant dense<0.000000e+00> : vector<28x32xf32>
    %109 = tpu.matmul %108, %107, %cst_73 {dimension_numbers = #tpu.dot_dimension_numbers<[1], [0], [0], [1], [0, 0, 1, 1], [], []>} : vector<28x48xbf16>, vector<48x32xbf16>, vector<28x32xf32> -> vector<28x32xf32>
    %110 = arith.addf %105, %109 : vector<28x32xf32>
    %111 = vector.extract_strided_slice %101 {offsets = [2, 0], sizes = [28, 48], strides = [1, 1]} : vector<30x48xf32> to vector<28x48xf32>
    %c0_74 = arith.constant 0 : index
    %c0_75 = arith.constant 0 : index
    %112 = vector.load %arg19[%c0_74, %c0_75] : memref<48x32xbf16, #tpu.memory_space<vmem>>, vector<48x32xbf16>
    %113 = arith.truncf %111 : vector<28x48xf32> to vector<28x48xbf16>
    %cst_76 = arith.constant dense<0.000000e+00> : vector<28x32xf32>
    %114 = tpu.matmul %113, %112, %cst_76 {dimension_numbers = #tpu.dot_dimension_numbers<[1], [0], [0], [1], [0, 0, 1, 1], [], []>} : vector<28x48xbf16>, vector<48x32xbf16>, vector<28x32xf32> -> vector<28x32xf32>
    %115 = arith.addf %110, %114 : vector<28x32xf32>
    %cst_77 = arith.constant 0.000000e+00 : f32
    %116 = vector.broadcast %cst_77 : f32 to vector<28x32xf32>
    %117 = arith.maximumf %115, %116 : vector<28x32xf32>
    %c0_78 = arith.constant 0 : index
    %c0_79 = arith.constant 0 : index
    %118 = vector.load %arg26[%c0_78, %c0_79] : memref<32x28xbf16, #tpu.memory_space<vmem>>, vector<32x28xbf16>
    %c0_80 = arith.constant 0 : index
    %c0_81 = arith.constant 0 : index
    %119 = vector.load %arg27[%c0_80, %c0_81] : memref<32x64xbf16, #tpu.memory_space<vmem>>, vector<32x64xbf16>
    %120 = arith.truncf %117 : vector<28x32xf32> to vector<28x32xbf16>
    %cst_82 = arith.constant dense<0.000000e+00> : vector<32x32xf32>
    %121 = tpu.matmul %118, %120, %cst_82 {dimension_numbers = #tpu.dot_dimension_numbers<[1], [0], [0], [1], [0, 0, 1, 1], [], []>} : vector<32x28xbf16>, vector<28x32xbf16>, vector<32x32xf32> -> vector<32x32xf32>
    %122 = arith.truncf %121 : vector<32x32xf32> to vector<32x32xbf16>
    %cst_83 = arith.constant dense<0.000000e+00> : vector<32x64xf32>
    %123 = tpu.matmul %122, %119, %cst_83 {dimension_numbers = #tpu.dot_dimension_numbers<[1], [0], [0], [1], [0, 0, 1, 1], [], []>} : vector<32x32xbf16>, vector<32x64xbf16>, vector<32x64xf32> -> vector<32x64xf32>
    %124 = arith.addf %46, %123 : vector<32x64xf32>
    %c0_84 = arith.constant 0 : index
    %c0_85 = arith.constant 0 : index
    %125 = vector.load %arg28[%c0_84, %c0_85] : memref<32x64xf32, #tpu.memory_space<vmem>>, vector<32x64xf32>
    tpu.vector_store %arg28[%c0_84, %c0_85], %124 {strides = array<i32>} : memref<32x64xf32, #tpu.memory_space<vmem>>, vector<32x64xf32>,
    return
  }
  func.func @transform_0(%arg0: i32) -> (i32, i32) {
    %c0_i32 = arith.constant 0 : i32
    %c0_i32_0 = arith.constant 0 : i32
    return %arg0, %c0_i32 : i32, i32
  }
  func.func @transform_1(%arg0: i32) -> (i32, i32) {
    %c0_i32 = arith.constant 0 : i32
    %c0_i32_0 = arith.constant 0 : i32
    %c0_i32_1 = arith.constant 0 : i32
    return %c0_i32, %c0_i32_0 : i32, i32
  }
  func.func @transform_2(%arg0: i32) -> (i32, i32) {
    %c0_i32 = arith.constant 0 : i32
    %c0_i32_0 = arith.constant 0 : i32
    %c0_i32_1 = arith.constant 0 : i32
    return %c0_i32, %c0_i32_0 : i32, i32
  }
  func.func @transform_3(%arg0: i32) -> (i32, i32) {
    %c0_i32 = arith.constant 0 : i32
    %c0_i32_0 = arith.constant 0 : i32
    %c0_i32_1 = arith.constant 0 : i32
    return %c0_i32, %c0_i32_0 : i32, i32
  }
  func.func @transform_4(%arg0: i32) -> (i32, i32) {
    %c0_i32 = arith.constant 0 : i32
    %c0_i32_0 = arith.constant 0 : i32
    %c0_i32_1 = arith.constant 0 : i32
    return %c0_i32, %c0_i32_0 : i32, i32
  }
  func.func @transform_5(%arg0: i32) -> (i32, i32) {
    %c0_i32 = arith.constant 0 : i32
    %c0_i32_0 = arith.constant 0 : i32
    %c0_i32_1 = arith.constant 0 : i32
    return %c0_i32, %c0_i32_0 : i32, i32
  }
  func.func @transform_6(%arg0: i32) -> (i32, i32) {
    %c0_i32 = arith.constant 0 : i32
    %c0_i32_0 = arith.constant 0 : i32
    %c0_i32_1 = arith.constant 0 : i32
    return %c0_i32, %c0_i32_0 : i32, i32
  }
  func.func @transform_7(%arg0: i32) -> (i32, i32) {
    %c0_i32 = arith.constant 0 : i32
    %c0_i32_0 = arith.constant 0 : i32
    %c0_i32_1 = arith.constant 0 : i32
    return %c0_i32, %c0_i32_0 : i32, i32
  }
  func.func @transform_8(%arg0: i32) -> (i32, i32) {
    %c0_i32 = arith.constant 0 : i32
    %c0_i32_0 = arith.constant 0 : i32
    %c0_i32_1 = arith.constant 0 : i32
    return %c0_i32, %c0_i32_0 : i32, i32
  }
  func.func @transform_9(%arg0: i32) -> (i32, i32) {
    %c0_i32 = arith.constant 0 : i32
    %c0_i32_0 = arith.constant 0 : i32
    %c0_i32_1 = arith.constant 0 : i32
    return %c0_i32, %c0_i32_0 : i32, i32
  }
  func.func @transform_10(%arg0: i32) -> (i32, i32) {
    %c0_i32 = arith.constant 0 : i32
    %c0_i32_0 = arith.constant 0 : i32
    %c0_i32_1 = arith.constant 0 : i32
    return %c0_i32, %c0_i32_0 : i32, i32
  }
  func.func @transform_11(%arg0: i32) -> (i32, i32) {
    %c0_i32 = arith.constant 0 : i32
    %c0_i32_0 = arith.constant 0 : i32
    %c0_i32_1 = arith.constant 0 : i32
    return %c0_i32, %c0_i32_0 : i32, i32
  }
  func.func @transform_12(%arg0: i32) -> (i32, i32) {
    %c0_i32 = arith.constant 0 : i32
    %c0_i32_0 = arith.constant 0 : i32
    %c0_i32_1 = arith.constant 0 : i32
    return %c0_i32, %c0_i32_0 : i32, i32
  }
  func.func @transform_13(%arg0: i32) -> (i32, i32) {
    %c0_i32 = arith.constant 0 : i32
    %c0_i32_0 = arith.constant 0 : i32
    %c0_i32_1 = arith.constant 0 : i32
    return %c0_i32, %c0_i32_0 : i32, i32
  }
  func.func @transform_14(%arg0: i32) -> (i32, i32) {
    %c0_i32 = arith.constant 0 : i32
    %c0_i32_0 = arith.constant 0 : i32
    %c0_i32_1 = arith.constant 0 : i32
    return %c0_i32, %c0_i32_0 : i32, i32
  }
  func.func @transform_15(%arg0: i32) -> (i32, i32) {
    %c0_i32 = arith.constant 0 : i32
    %c0_i32_0 = arith.constant 0 : i32
    %c0_i32_1 = arith.constant 0 : i32
    return %c0_i32, %c0_i32_0 : i32, i32
  }
  func.func @transform_16(%arg0: i32) -> (i32, i32) {
    %c0_i32 = arith.constant 0 : i32
    %c0_i32_0 = arith.constant 0 : i32
    %c0_i32_1 = arith.constant 0 : i32
    return %c0_i32, %c0_i32_0 : i32, i32
  }
  func.func @transform_17(%arg0: i32) -> (i32, i32) {
    %c0_i32 = arith.constant 0 : i32
    %c0_i32_0 = arith.constant 0 : i32
    %c0_i32_1 = arith.constant 0 : i32
    return %c0_i32, %c0_i32_0 : i32, i32
  }
  func.func @transform_18(%arg0: i32) -> (i32, i32) {
    %c0_i32 = arith.constant 0 : i32
    %c0_i32_0 = arith.constant 0 : i32
    %c0_i32_1 = arith.constant 0 : i32
    return %c0_i32, %c0_i32_0 : i32, i32
  }
  func.func @transform_19(%arg0: i32) -> (i32, i32) {
    %c0_i32 = arith.constant 0 : i32
    %c0_i32_0 = arith.constant 0 : i32
    %c0_i32_1 = arith.constant 0 : i32
    return %c0_i32, %c0_i32_0 : i32, i32
  }
  func.func @transform_20(%arg0: i32) -> (i32, i32) {
    %c0_i32 = arith.constant 0 : i32
    %c0_i32_0 = arith.constant 0 : i32
    %c0_i32_1 = arith.constant 0 : i32
    return %c0_i32, %c0_i32_0 : i32, i32
  }
  func.func @transform_21(%arg0: i32) -> (i32, i32) {
    %c0_i32 = arith.constant 0 : i32
    %c0_i32_0 = arith.constant 0 : i32
    %c0_i32_1 = arith.constant 0 : i32
    return %c0_i32, %c0_i32_0 : i32, i32
  }
  func.func @transform_22(%arg0: i32) -> (i32, i32) {
    %c0_i32 = arith.constant 0 : i32
    %c0_i32_0 = arith.constant 0 : i32
    %c0_i32_1 = arith.constant 0 : i32
    return %c0_i32, %c0_i32_0 : i32, i32
  }
  func.func @transform_23(%arg0: i32) -> (i32, i32) {
    %c0_i32 = arith.constant 0 : i32
    %c0_i32_0 = arith.constant 0 : i32
    %c0_i32_1 = arith.constant 0 : i32
    return %c0_i32, %c0_i32_0 : i32, i32
  }
  func.func @transform_24(%arg0: i32) -> (i32, i32) {
    %c0_i32 = arith.constant 0 : i32
    %c0_i32_0 = arith.constant 0 : i32
    %c0_i32_1 = arith.constant 0 : i32
    return %c0_i32, %c0_i32_0 : i32, i32
  }
  func.func @transform_25(%arg0: i32) -> (i32, i32) {
    %c0_i32 = arith.constant 0 : i32
    %c0_i32_0 = arith.constant 0 : i32
    %c0_i32_1 = arith.constant 0 : i32
    return %c0_i32, %c0_i32_0 : i32, i32
  }
  func.func @transform_26(%arg0: i32) -> (i32, i32) {
    %c0_i32 = arith.constant 0 : i32
    %c0_i32_0 = arith.constant 0 : i32
    %c0_i32_1 = arith.constant 0 : i32
    return %c0_i32, %c0_i32_0 : i32, i32
  }
  func.func @transform_27(%arg0: i32) -> (i32, i32) {
    %c0_i32 = arith.constant 0 : i32
    %c0_i32_0 = arith.constant 0 : i32
    return %arg0, %c0_i32 : i32, i32
  }
}

</mosaic_0001>

<llo_original>
// kernel: _lambda_.1
$region0: #{_lambda_.1}
  #allocation0 [shape = 'u32[]', space=smem, size = 0x4, offset = 0x4, fixed_abs, tag = 'smem constant byte address 0x4 - core index']
  #allocation1 [shape = 'u32[144,128]{1,0:T(1,128)}', space=vmem, size = 0x12000, scoped, tag = 'internal scratch']
  %s0 = inlined_call_operand.vmem [shape: f32[160,160], index: 0, kind: input, shape index: {}]
  %s1 = inlined_call_operand.vmem [shape: bf16[160,144], index: 1, kind: input, shape index: {}]
  %s2 = inlined_call_operand.vmem [shape: bf16[160,144], index: 2, kind: input, shape index: {}]
  %s3 = inlined_call_operand.vmem [shape: bf16[160,144], index: 3, kind: input, shape index: {}]
  %s4 = inlined_call_operand.vmem [shape: bf16[144,128], index: 4, kind: input, shape index: {}]
  %s5 = inlined_call_operand.vmem [shape: bf16[144,128], index: 5, kind: input, shape index: {}]
  %s6 = inlined_call_operand.vmem [shape: bf16[144,128], index: 6, kind: input, shape index: {}]
  %s7 = inlined_call_operand.vmem [shape: bf16[64,48], index: 7, kind: input, shape index: {}]
  %s8 = inlined_call_operand.vmem [shape: bf16[64,48], index: 8, kind: input, shape index: {}]
  %s9 = inlined_call_operand.vmem [shape: bf16[64,48], index: 9, kind: input, shape index: {}]
  %s10 = inlined_call_operand.vmem [shape: bf16[48,32], index: 10, kind: input, shape index: {}]
  %s11 = inlined_call_operand.vmem [shape: bf16[48,32], index: 11, kind: input, shape index: {}]
  %s12 = inlined_call_operand.vmem [shape: bf16[48,32], index: 12, kind: input, shape index: {}]
  %s13 = inlined_call_operand.vmem [shape: bf16[64,48], index: 13, kind: input, shape index: {}]
  %s14 = inlined_call_operand.vmem [shape: bf16[64,48], index: 14, kind: input, shape index: {}]
  %s15 = inlined_call_operand.vmem [shape: bf16[64,48], index: 15, kind: input, shape index: {}]
  %s16 = inlined_call_operand.vmem [shape: bf16[48,32], index: 16, kind: input, shape index: {}]
  %s17 = inlined_call_operand.vmem [shape: bf16[48,32], index: 17, kind: input, shape index: {}]
  %s18 = inlined_call_operand.vmem [shape: bf16[48,32], index: 18, kind: input, shape index: {}]
  %s19 = inlined_call_operand.vmem [shape: bf16[32,76], index: 19, kind: input, shape index: {}]
  %s20 = inlined_call_operand.vmem [shape: bf16[32,76], index: 20, kind: input, shape index: {}]
  %s21 = inlined_call_operand.vmem [shape: bf16[128,64], index: 21, kind: input, shape index: {}]
  %s22 = inlined_call_operand.vmem [shape: bf16[128,64], index: 22, kind: input, shape index: {}]
  %s23 = inlined_call_operand.vmem [shape: bf16[32,28], index: 23, kind: input, shape index: {}, may-alias: {23,25}]
  %s24 = inlined_call_operand.vmem [shape: bf16[32,64], index: 24, kind: input, shape index: {}, may-alias: {24,26}]
  %s25 = inlined_call_operand.vmem [shape: bf16[32,28], index: 25, kind: input, shape index: {}, may-alias: {23,25}]
  %s26 = inlined_call_operand.vmem [shape: bf16[32,64], index: 26, kind: input, shape index: {}, may-alias: {24,26}]
  %s27 = inlined_call_operand.vmem [shape: f32[64,64], index: 27, kind: output, shape index: {}]
  %s28 = sld [smem:[#allocation0]]
  $region141: #{_lambda_.1} parent=0
    _
  %s30 = ssub.s32 1, %s28
  %s31 = scalar_select 0, %s30, %s28
  loop: start=0, step=1, limit=4
  $region2: #{_lambda_.1} parent=0 // loop_pre_header
    _
  $region3: #{_lambda_.1} parent=0 // loop_header
    %s33 = sphi 0, %s37
    %p34 = scmp.ge.s32.totalorder %s33, 4
    %s43 = sphi 0, %s45
    %s46 = sphi 0, %s43
    %s47 = sphi 0, %s46
    %s63 = sphi 0, %s47
    %s67 = sphi 0, %s67
    %s69 = sphi 0, %s67
    %s70 = sphi 0, %s69
    %s84 = sphi 0, %s70
    %s88 = sphi 0, %s88
    %s90 = sphi 0, %s88
    %s91 = sphi 0, %s90
    %s105 = sphi 0, %s91
    %s109 = sphi 0, %s109
    %s111 = sphi 0, %s109
    %s112 = sphi 0, %s111
    %s126 = sphi 0, %s112
    %s130 = sphi 0, %s130
    %s132 = sphi 0, %s130
    %s133 = sphi 0, %s132
    %s147 = sphi 0, %s133
    %s151 = sphi 0, %s151
    %s153 = sphi 0, %s151
    %s154 = sphi 0, %s153
    %s168 = sphi 0, %s154
    %s172 = sphi 0, %s172
    %s174 = sphi 0, %s172
    %s175 = sphi 0, %s174
    %s189 = sphi 0, %s175
    %s193 = sphi 0, %s193
    %s195 = sphi 0, %s193
    %s196 = sphi 0, %s195
    %s210 = sphi 0, %s196
    %s214 = sphi 0, %s214
    %s216 = sphi 0, %s214
    %s217 = sphi 0, %s216
    %s231 = sphi 0, %s217
    %s235 = sphi 0, %s235
    %s237 = sphi 0, %s235
    %s238 = sphi 0, %s237
    %s252 = sphi 0, %s238
    %s256 = sphi 0, %s256
    %s258 = sphi 0, %s256
    %s259 = sphi 0, %s258
    %s273 = sphi 0, %s259
    %s277 = sphi 0, %s277
    %s279 = sphi 0, %s277
    %s280 = sphi 0, %s279
    %s294 = sphi 0, %s280
    %s298 = sphi 0, %s298
    %s300 = sphi 0, %s298
    %s301 = sphi 0, %s300
    %s315 = sphi 0, %s301
    %s319 = sphi 0, %s319
    %s321 = sphi 0, %s319
    %s322 = sphi 0, %s321
    %s336 = sphi 0, %s322
    %s340 = sphi 0, %s340
    %s342 = sphi 0, %s340
    %s343 = sphi 0, %s342
    %s357 = sphi 0, %s343
    %s361 = sphi 0, %s361
    %s363 = sphi 0, %s361
    %s364 = sphi 0, %s363
    %s378 = sphi 0, %s364
    %s382 = sphi 0, %s382
    %s384 = sphi 0, %s382
    %s385 = sphi 0, %s384
    %s399 = sphi 0, %s385
    %s403 = sphi 0, %s403
    %s405 = sphi 0, %s403
    %s406 = sphi 0, %s405
    %s420 = sphi 0, %s406
    %s424 = sphi 0, %s424
    %s426 = sphi 0, %s424
    %s427 = sphi 0, %s426
    %s441 = sphi 0, %s427
    %s445 = sphi 0, %s445
    %s447 = sphi 0, %s445
    %s448 = sphi 0, %s447
    %s462 = sphi 0, %s448
    %s466 = sphi 0, %s466
    %s468 = sphi 0, %s466
    %s469 = sphi 0, %s468
    %s483 = sphi 0, %s469
    %s487 = sphi 0, %s487
    %s489 = sphi 0, %s487
    %s490 = sphi 0, %s489
    %s504 = sphi 0, %s490
    %s508 = sphi 0, %s508
    %s510 = sphi 0, %s508
    %s511 = sphi 0, %s510
    %s525 = sphi 0, %s511
    %s529 = sphi 0, %s529
    %s531 = sphi 0, %s529
    %s532 = sphi 0, %s531
    %s546 = sphi 0, %s532
    %s550 = sphi 0, %s550
    %s552 = sphi 0, %s550
    %s553 = sphi 0, %s552
    %s567 = sphi 0, %s553
    %s571 = sphi 0, %s571
    %s573 = sphi 0, %s571
    %s574 = sphi 0, %s573
    %s588 = sphi 0, %s574
    %s592 = sphi 0, %s592
    %s594 = sphi 0, %s592
    %s595 = sphi 0, %s594
    %s609 = sphi 0, %s595
    %s615 = sphi 0, %s617
    %s618 = sphi 0, %s615
    %s619 = sphi 0, %s618
    %s635 = sphi 0, %s619
  $region4: #{_lambda_.1} parent=0 // loop_header_branch
    %36 = sbr.rel (%p34) target = $region8
  $region5: #{_lambda_.1} parent=0 // loop_body
    %s38 = ssub.s32 %s33, 1
    %s39 = ssub.s32 %s33, 2
    %s40 = sadd.s32 %s33, 1
    %s41 = ssub.s32 %s33, %s40
    %p42 = scmp.eq.s32.totalorder %s41, 0
    %s44 = sadd.s32 %s43, 1
    %s45 = scalar_select %p42, %s43, %s44
    %p48 = pneg %p42
    %p49 = scmp.eq.s32.totalorder %s33, 1
    %p50 = por %p48, %p49
    %p51 = scmp.ne.s32.totalorder %s43, %s46
    %p52 = scmp.eq.s32.totalorder %s33, 0
    %p53 = por %p51, %p52
    %p54 = scmp.ne.s32.totalorder %s43, %s46
    %p55 = scmp.eq.s32.totalorder %s38, 1
    %p56 = por %p54, %p55
    %p57 = scmp.ne.s32.totalorder %s46, %s47
    %p58 = scmp.eq.s32.totalorder %s38, 0
    %p59 = por %p57, %p58
    %p60 = scmp.ne.s32.totalorder %s46, %s47
    %p61 = scmp.eq.s32.totalorder %s39, 1
    %p62 = por %p60, %p61
    %p64 = scmp.ne.s32.totalorder %s47, %s63
    %p65 = scmp.eq.s32.totalorder %s39, 0
    %p66 = por %p64, %p65
    %s68 = sadd.s32 %s67, 1
    %p71 = scmp.eq.s32.totalorder %s33, 1
    %p72 = scmp.ne.s32.totalorder %s67, %s69
    %p73 = scmp.eq.s32.totalorder %s33, 0
    %p74 = por %p72, %p73
    %p75 = scmp.ne.s32.totalorder %s67, %s69
    %p76 = scmp.eq.s32.totalorder %s38, 1
    %p77 = por %p75, %p76
    %p78 = scmp.ne.s32.totalorder %s69, %s70
    %p79 = scmp.eq.s32.totalorder %s38, 0
    %p80 = por %p78, %p79
    %p81 = scmp.ne.s32.totalorder %s69, %s70
    %p82 = scmp.eq.s32.totalorder %s39, 1
    %p83 = por %p81, %p82
    %p85 = scmp.ne.s32.totalorder %s70, %s84
    %p86 = scmp.eq.s32.totalorder %s39, 0
    %p87 = por %p85, %p86
    %s89 = sadd.s32 %s88, 1
    %p92 = scmp.eq.s32.totalorder %s33, 1
    %p93 = scmp.ne.s32.totalorder %s88, %s90
    %p94 = scmp.eq.s32.totalorder %s33, 0
    %p95 = por %p93, %p94
    %p96 = scmp.ne.s32.totalorder %s88, %s90
    %p97 = scmp.eq.s32.totalorder %s38, 1
    %p98 = por %p96, %p97
    %p99 = scmp.ne.s32.totalorder %s90, %s91
    %p100 = scmp.eq.s32.totalorder %s38, 0
    %p101 = por %p99, %p100
    %p102 = scmp.ne.s32.totalorder %s90, %s91
    %p103 = scmp.eq.s32.totalorder %s39, 1
    %p104 = por %p102, %p103
    %p106 = scmp.ne.s32.totalorder %s91, %s105
    %p107 = scmp.eq.s32.totalorder %s39, 0
    %p108 = por %p106, %p107
    %s110 = sadd.s32 %s109, 1
    %p113 = scmp.eq.s32.totalorder %s33, 1
    %p114 = scmp.ne.s32.totalorder %s109, %s111
    %p115 = scmp.eq.s32.totalorder %s33, 0
    %p116 = por %p114, %p115
    %p117 = scmp.ne.s32.totalorder %s109, %s111
    %p118 = scmp.eq.s32.totalorder %s38, 1
    %p119 = por %p117, %p118
    %p120 = scmp.ne.s32.totalorder %s111, %s112
    %p121 = scmp.eq.s32.totalorder %s38, 0
    %p122 = por %p120, %p121
    %p123 = scmp.ne.s32.totalorder %s111, %s112
    %p124 = scmp.eq.s32.totalorder %s39, 1
    %p125 = por %p123, %p124
    %p127 = scmp.ne.s32.totalorder %s112, %s126
    %p128 = scmp.eq.s32.totalorder %s39, 0
    %p129 = por %p127, %p128
    %s131 = sadd.s32 %s130, 1
    %p134 = scmp.eq.s32.totalorder %s33, 1
    %p135 = scmp.ne.s32.totalorder %s130, %s132
    %p136 = scmp.eq.s32.totalorder %s33, 0
    %p137 = por %p135, %p136
    %p138 = scmp.ne.s32.totalorder %s130, %s132
    %p139 = scmp.eq.s32.totalorder %s38, 1
    %p140 = por %p138, %p139
    %p141 = scmp.ne.s32.totalorder %s132, %s133
    %p142 = scmp.eq.s32.totalorder %s38, 0
    %p143 = por %p141, %p142
    %p144 = scmp.ne.s32.totalorder %s132, %s133
    %p145 = scmp.eq.s32.totalorder %s39, 1
    %p146 = por %p144, %p145
    %p148 = scmp.ne.s32.totalorder %s133, %s147
    %p149 = scmp.eq.s32.totalorder %s39, 0
    %p150 = por %p148, %p149
    %s152 = sadd.s32 %s151, 1
    %p155 = scmp.eq.s32.totalorder %s33, 1
    %p156 = scmp.ne.s32.totalorder %s151, %s153
    %p157 = scmp.eq.s32.totalorder %s33, 0
    %p158 = por %p156, %p157
    %p159 = scmp.ne.s32.totalorder %s151, %s153
    %p160 = scmp.eq.s32.totalorder %s38, 1
    %p161 = por %p159, %p160
    %p162 = scmp.ne.s32.totalorder %s153, %s154
    %p163 = scmp.eq.s32.totalorder %s38, 0
    %p164 = por %p162, %p163
    %p165 = scmp.ne.s32.totalorder %s153, %s154
    %p166 = scmp.eq.s32.totalorder %s39, 1
    %p167 = por %p165, %p166
    %p169 = scmp.ne.s32.totalorder %s154, %s168
    %p170 = scmp.eq.s32.totalorder %s39, 0
    %p171 = por %p169, %p170
    %s173 = sadd.s32 %s172, 1
    %p176 = scmp.eq.s32.totalorder %s33, 1
    %p177 = scmp.ne.s32.totalorder %s172, %s174
    %p178 = scmp.eq.s32.totalorder %s33, 0
    %p179 = por %p177, %p178
    %p180 = scmp.ne.s32.totalorder %s172, %s174
    %p181 = scmp.eq.s32.totalorder %s38, 1
    %p182 = por %p180, %p181
    %p183 = scmp.ne.s32.totalorder %s174, %s175
    %p184 = scmp.eq.s32.totalorder %s38, 0
    %p185 = por %p183, %p184
    %p186 = scmp.ne.s32.totalorder %s174, %s175
    %p187 = scmp.eq.s32.totalorder %s39, 1
    %p188 = por %p186, %p187
    %p190 = scmp.ne.s32.totalorder %s175, %s189
    %p191 = scmp.eq.s32.totalorder %s39, 0
    %p192 = por %p190, %p191
    %s194 = sadd.s32 %s193, 1
    %p197 = scmp.eq.s32.totalorder %s33, 1
    %p198 = scmp.ne.s32.totalorder %s193, %s195
    %p199 = scmp.eq.s32.totalorder %s33, 0
    %p200 = por %p198, %p199
    %p201 = scmp.ne.s32.totalorder %s193, %s195
    %p202 = scmp.eq.s32.totalorder %s38, 1
    %p203 = por %p201, %p202
    %p204 = scmp.ne.s32.totalorder %s195, %s196
    %p205 = scmp.eq.s32.totalorder %s38, 0
    %p206 = por %p204, %p205
    %p207 = scmp.ne.s32.totalorder %s195, %s196
    %p208 = scmp.eq.s32.totalorder %s39, 1
    %p209 = por %p207, %p208
    %p211 = scmp.ne.s32.totalorder %s196, %s210
    %p212 = scmp.eq.s32.totalorder %s39, 0
    %p213 = por %p211, %p212
    %s215 = sadd.s32 %s214, 1
    %p218 = scmp.eq.s32.totalorder %s33, 1
    %p219 = scmp.ne.s32.totalorder %s214, %s216
    %p220 = scmp.eq.s32.totalorder %s33, 0
    %p221 = por %p219, %p220
    %p222 = scmp.ne.s32.totalorder %s214, %s216
    %p223 = scmp.eq.s32.totalorder %s38, 1
    %p224 = por %p222, %p223
    %p225 = scmp.ne.s32.totalorder %s216, %s217
    %p226 = scmp.eq.s32.totalorder %s38, 0
    %p227 = por %p225, %p226
    %p228 = scmp.ne.s32.totalorder %s216, %s217
    %p229 = scmp.eq.s32.totalorder %s39, 1
    %p230 = por %p228, %p229
    %p232 = scmp.ne.s32.totalorder %s217, %s231
    %p233 = scmp.eq.s32.totalorder %s39, 0
    %p234 = por %p232, %p233
    %s236 = sadd.s32 %s235, 1
    %p239 = scmp.eq.s32.totalorder %s33, 1
    %p240 = scmp.ne.s32.totalorder %s235, %s237
    %p241 = scmp.eq.s32.totalorder %s33, 0
    %p242 = por %p240, %p241
    %p243 = scmp.ne.s32.totalorder %s235, %s237
    %p244 = scmp.eq.s32.totalorder %s38, 1
    %p245 = por %p243, %p244
    %p246 = scmp.ne.s32.totalorder %s237, %s238
    %p247 = scmp.eq.s32.totalorder %s38, 0
    %p248 = por %p246, %p247
    %p249 = scmp.ne.s32.totalorder %s237, %s238
    %p250 = scmp.eq.s32.totalorder %s39, 1
    %p251 = por %p249, %p250
    %p253 = scmp.ne.s32.totalorder %s238, %s252
    %p254 = scmp.eq.s32.totalorder %s39, 0
    %p255 = por %p253, %p254
    %s257 = sadd.s32 %s256, 1
    %p260 = scmp.eq.s32.totalorder %s33, 1
    %p261 = scmp.ne.s32.totalorder %s256, %s258
    %p262 = scmp.eq.s32.totalorder %s33, 0
    %p263 = por %p261, %p262
    %p264 = scmp.ne.s32.totalorder %s256, %s258
    %p265 = scmp.eq.s32.totalorder %s38, 1
    %p266 = por %p264, %p265
    %p267 = scmp.ne.s32.totalorder %s258, %s259
    %p268 = scmp.eq.s32.totalorder %s38, 0
    %p269 = por %p267, %p268
    %p270 = scmp.ne.s32.totalorder %s258, %s259
    %p271 = scmp.eq.s32.totalorder %s39, 1
    %p272 = por %p270, %p271
    %p274 = scmp.ne.s32.totalorder %s259, %s273
    %p275 = scmp.eq.s32.totalorder %s39, 0
    %p276 = por %p274, %p275
    %s278 = sadd.s32 %s277, 1
    %p281 = scmp.eq.s32.totalorder %s33, 1
    %p282 = scmp.ne.s32.totalorder %s277, %s279
    %p283 = scmp.eq.s32.totalorder %s33, 0
    %p284 = por %p282, %p283
    %p285 = scmp.ne.s32.totalorder %s277, %s279
    %p286 = scmp.eq.s32.totalorder %s38, 1
    %p287 = por %p285, %p286
    %p288 = scmp.ne.s32.totalorder %s279, %s280
    %p289 = scmp.eq.s32.totalorder %s38, 0
    %p290 = por %p288, %p289
    %p291 = scmp.ne.s32.totalorder %s279, %s280
    %p292 = scmp.eq.s32.totalorder %s39, 1
    %p293 = por %p291, %p292
    %p295 = scmp.ne.s32.totalorder %s280, %s294
    %p296 = scmp.eq.s32.totalorder %s39, 0
    %p297 = por %p295, %p296
    %s299 = sadd.s32 %s298, 1
    %p302 = scmp.eq.s32.totalorder %s33, 1
    %p303 = scmp.ne.s32.totalorder %s298, %s300
    %p304 = scmp.eq.s32.totalorder %s33, 0
    %p305 = por %p303, %p304
    %p306 = scmp.ne.s32.totalorder %s298, %s300
    %p307 = scmp.eq.s32.totalorder %s38, 1
    %p308 = por %p306, %p307
    %p309 = scmp.ne.s32.totalorder %s300, %s301
    %p310 = scmp.eq.s32.totalorder %s38, 0
    %p311 = por %p309, %p310
    %p312 = scmp.ne.s32.totalorder %s300, %s301
    %p313 = scmp.eq.s32.totalorder %s39, 1
    %p314 = por %p312, %p313
    %p316 = scmp.ne.s32.totalorder %s301, %s315
    %p317 = scmp.eq.s32.totalorder %s39, 0
    %p318 = por %p316, %p317
    %s320 = sadd.s32 %s319, 1
    %p323 = scmp.eq.s32.totalorder %s33, 1
    %p324 = scmp.ne.s32.totalorder %s319, %s321
    %p325 = scmp.eq.s32.totalorder %s33, 0
    %p326 = por %p324, %p325
    %p327 = scmp.ne.s32.totalorder %s319, %s321
    %p328 = scmp.eq.s32.totalorder %s38, 1
    %p329 = por %p327, %p328
    %p330 = scmp.ne.s32.totalorder %s321, %s322
    %p331 = scmp.eq.s32.totalorder %s38, 0
    %p332 = por %p330, %p331
    %p333 = scmp.ne.s32.totalorder %s321, %s322
    %p334 = scmp.eq.s32.totalorder %s39, 1
    %p335 = por %p333, %p334
    %p337 = scmp.ne.s32.totalorder %s322, %s336
    %p338 = scmp.eq.s32.totalorder %s39, 0
    %p339 = por %p337, %p338
    %s341 = sadd.s32 %s340, 1
    %p344 = scmp.eq.s32.totalorder %s33, 1
    %p345 = scmp.ne.s32.totalorder %s340, %s342
    %p346 = scmp.eq.s32.totalorder %s33, 0
    %p347 = por %p345, %p346
    %p348 = scmp.ne.s32.totalorder %s340, %s342
    %p349 = scmp.eq.s32.totalorder %s38, 1
    %p350 = por %p348, %p349
    %p351 = scmp.ne.s32.totalorder %s342, %s343
    %p352 = scmp.eq.s32.totalorder %s38, 0
    %p353 = por %p351, %p352
    %p354 = scmp.ne.s32.totalorder %s342, %s343
    %p355 = scmp.eq.s32.totalorder %s39, 1
    %p356 = por %p354, %p355
    %p358 = scmp.ne.s32.totalorder %s343, %s357
    %p359 = scmp.eq.s32.totalorder %s39, 0
    %p360 = por %p358, %p359
    %s362 = sadd.s32 %s361, 1
    %p365 = scmp.eq.s32.totalorder %s33, 1
    %p366 = scmp.ne.s32.totalorder %s361, %s363
    %p367 = scmp.eq.s32.totalorder %s33, 0
    %p368 = por %p366, %p367
    %p369 = scmp.ne.s32.totalorder %s361, %s363
    %p370 = scmp.eq.s32.totalorder %s38, 1
    %p371 = por %p369, %p370
    %p372 = scmp.ne.s32.totalorder %s363, %s364
    %p373 = scmp.eq.s32.totalorder %s38, 0
    %p374 = por %p372, %p373
    %p375 = scmp.ne.s32.totalorder %s363, %s364
    %p376 = scmp.eq.s32.totalorder %s39, 1
    %p377 = por %p375, %p376
    %p379 = scmp.ne.s32.totalorder %s364, %s378
    %p380 = scmp.eq.s32.totalorder %s39, 0
    %p381 = por %p379, %p380
    %s383 = sadd.s32 %s382, 1
    %p386 = scmp.eq.s32.totalorder %s33, 1
    %p387 = scmp.ne.s32.totalorder %s382, %s384
    %p388 = scmp.eq.s32.totalorder %s33, 0
    %p389 = por %p387, %p388
    %p390 = scmp.ne.s32.totalorder %s382, %s384
    %p391 = scmp.eq.s32.totalorder %s38, 1
    %p392 = por %p390, %p391
    %p393 = scmp.ne.s32.totalorder %s384, %s385
    %p394 = scmp.eq.s32.totalorder %s38, 0
    %p395 = por %p393, %p394
    %p396 = scmp.ne.s32.totalorder %s384, %s385
    %p397 = scmp.eq.s32.totalorder %s39, 1
    %p398 = por %p396, %p397
    %p400 = scmp.ne.s32.totalorder %s385, %s399
    %p401 = scmp.eq.s32.totalorder %s39, 0
    %p402 = por %p400, %p401
    %s404 = sadd.s32 %s403, 1
    %p407 = scmp.eq.s32.totalorder %s33, 1
    %p408 = scmp.ne.s32.totalorder %s403, %s405
    %p409 = scmp.eq.s32.totalorder %s33, 0
    %p410 = por %p408, %p409
    %p411 = scmp.ne.s32.totalorder %s403, %s405
    %p412 = scmp.eq.s32.totalorder %s38, 1
    %p413 = por %p411, %p412
    %p414 = scmp.ne.s32.totalorder %s405, %s406
    %p415 = scmp.eq.s32.totalorder %s38, 0
    %p416 = por %p414, %p415
    %p417 = scmp.ne.s32.totalorder %s405, %s406
    %p418 = scmp.eq.s32.totalorder %s39, 1
    %p419 = por %p417, %p418
    %p421 = scmp.ne.s32.totalorder %s406, %s420
    %p422 = scmp.eq.s32.totalorder %s39, 0
    %p423 = por %p421, %p422
    %s425 = sadd.s32 %s424, 1
    %p428 = scmp.eq.s32.totalorder %s33, 1
    %p429 = scmp.ne.s32.totalorder %s424, %s426
    %p430 = scmp.eq.s32.totalorder %s33, 0
    %p431 = por %p429, %p430
    %p432 = scmp.ne.s32.totalorder %s424, %s426
    %p433 = scmp.eq.s32.totalorder %s38, 1
    %p434 = por %p432, %p433
    %p435 = scmp.ne.s32.totalorder %s426, %s427
    %p436 = scmp.eq.s32.totalorder %s38, 0
    %p437 = por %p435, %p436
    %p438 = scmp.ne.s32.totalorder %s426, %s427
    %p439 = scmp.eq.s32.totalorder %s39, 1
    %p440 = por %p438, %p439
    %p442 = scmp.ne.s32.totalorder %s427, %s441
    %p443 = scmp.eq.s32.totalorder %s39, 0
    %p444 = por %p442, %p443
    %s446 = sadd.s32 %s445, 1
    %p449 = scmp.eq.s32.totalorder %s33, 1
    %p450 = scmp.ne.s32.totalorder %s445, %s447
    %p451 = scmp.eq.s32.totalorder %s33, 0
    %p452 = por %p450, %p451
    %p453 = scmp.ne.s32.totalorder %s445, %s447
    %p454 = scmp.eq.s32.totalorder %s38, 1
    %p455 = por %p453, %p454
    %p456 = scmp.ne.s32.totalorder %s447, %s448
    %p457 = scmp.eq.s32.totalorder %s38, 0
    %p458 = por %p456, %p457
    %p459 = scmp.ne.s32.totalorder %s447, %s448
    %p460 = scmp.eq.s32.totalorder %s39, 1
    %p461 = por %p459, %p460
    %p463 = scmp.ne.s32.totalorder %s448, %s462
    %p464 = scmp.eq.s32.totalorder %s39, 0
    %p465 = por %p463, %p464
    %s467 = sadd.s32 %s466, 1
    %p470 = scmp.eq.s32.totalorder %s33, 1
    %p471 = scmp.ne.s32.totalorder %s466, %s468
    %p472 = scmp.eq.s32.totalorder %s33, 0
    %p473 = por %p471, %p472
    %p474 = scmp.ne.s32.totalorder %s466, %s468
    %p475 = scmp.eq.s32.totalorder %s38, 1
    %p476 = por %p474, %p475
    %p477 = scmp.ne.s32.totalorder %s468, %s469
    %p478 = scmp.eq.s32.totalorder %s38, 0
    %p479 = por %p477, %p478
    %p480 = scmp.ne.s32.totalorder %s468, %s469
    %p481 = scmp.eq.s32.totalorder %s39, 1
    %p482 = por %p480, %p481
    %p484 = scmp.ne.s32.totalorder %s469, %s483
    %p485 = scmp.eq.s32.totalorder %s39, 0
    %p486 = por %p484, %p485
    %s488 = sadd.s32 %s487, 1
    %p491 = scmp.eq.s32.totalorder %s33, 1
    %p492 = scmp.ne.s32.totalorder %s487, %s489
    %p493 = scmp.eq.s32.totalorder %s33, 0
    %p494 = por %p492, %p493
    %p495 = scmp.ne.s32.totalorder %s487, %s489
    %p496 = scmp.eq.s32.totalorder %s38, 1
    %p497 = por %p495, %p496
    %p498 = scmp.ne.s32.totalorder %s489, %s490
    %p499 = scmp.eq.s32.totalorder %s38, 0
    %p500 = por %p498, %p499
    %p501 = scmp.ne.s32.totalorder %s489, %s490
    %p502 = scmp.eq.s32.totalorder %s39, 1
    %p503 = por %p501, %p502
    %p505 = scmp.ne.s32.totalorder %s490, %s504
    %p506 = scmp.eq.s32.totalorder %s39, 0
    %p507 = por %p505, %p506
    %s509 = sadd.s32 %s508, 1
    %p512 = scmp.eq.s32.totalorder %s33, 1
    %p513 = scmp.ne.s32.totalorder %s508, %s510
    %p514 = scmp.eq.s32.totalorder %s33, 0
    %p515 = por %p513, %p514
    %p516 = scmp.ne.s32.totalorder %s508, %s510
    %p517 = scmp.eq.s32.totalorder %s38, 1
    %p518 = por %p516, %p517
    %p519 = scmp.ne.s32.totalorder %s510, %s511
    %p520 = scmp.eq.s32.totalorder %s38, 0
    %p521 = por %p519, %p520
    %p522 = scmp.ne.s32.totalorder %s510, %s511
    %p523 = scmp.eq.s32.totalorder %s39, 1
    %p524 = por %p522, %p523
    %p526 = scmp.ne.s32.totalorder %s511, %s525
    %p527 = scmp.eq.s32.totalorder %s39, 0
    %p528 = por %p526, %p527
    %s530 = sadd.s32 %s529, 1
    %p533 = scmp.eq.s32.totalorder %s33, 1
    %p534 = scmp.ne.s32.totalorder %s529, %s531
    %p535 = scmp.eq.s32.totalorder %s33, 0
    %p536 = por %p534, %p535
    %p537 = scmp.ne.s32.totalorder %s529, %s531
    %p538 = scmp.eq.s32.totalorder %s38, 1
    %p539 = por %p537, %p538
    %p540 = scmp.ne.s32.totalorder %s531, %s532
    %p541 = scmp.eq.s32.totalorder %s38, 0
    %p542 = por %p540, %p541
    %p543 = scmp.ne.s32.totalorder %s531, %s532
    %p544 = scmp.eq.s32.totalorder %s39, 1
    %p545 = por %p543, %p544
    %p547 = scmp.ne.s32.totalorder %s532, %s546
    %p548 = scmp.eq.s32.totalorder %s39, 0
    %p549 = por %p547, %p548
    %s551 = sadd.s32 %s550, 1
    %p554 = scmp.eq.s32.totalorder %s33, 1
    %p555 = scmp.ne.s32.totalorder %s550, %s552
    %p556 = scmp.eq.s32.totalorder %s33, 0
    %p557 = por %p555, %p556
    %p558 = scmp.ne.s32.totalorder %s550, %s552
    %p559 = scmp.eq.s32.totalorder %s38, 1
    %p560 = por %p558, %p559
    %p561 = scmp.ne.s32.totalorder %s552, %s553
    %p562 = scmp.eq.s32.totalorder %s38, 0
    %p563 = por %p561, %p562
    %p564 = scmp.ne.s32.totalorder %s552, %s553
    %p565 = scmp.eq.s32.totalorder %s39, 1
    %p566 = por %p564, %p565
    %p568 = scmp.ne.s32.totalorder %s553, %s567
    %p569 = scmp.eq.s32.totalorder %s39, 0
    %p570 = por %p568, %p569
    %s572 = sadd.s32 %s571, 1
    %p575 = scmp.eq.s32.totalorder %s33, 1
    %p576 = scmp.ne.s32.totalorder %s571, %s573
    %p577 = scmp.eq.s32.totalorder %s33, 0
    %p578 = por %p576, %p577
    %p579 = scmp.ne.s32.totalorder %s571, %s573
    %p580 = scmp.eq.s32.totalorder %s38, 1
    %p581 = por %p579, %p580
    %p582 = scmp.ne.s32.totalorder %s573, %s574
    %p583 = scmp.eq.s32.totalorder %s38, 0
    %p584 = por %p582, %p583
    %p585 = scmp.ne.s32.totalorder %s573, %s574
    %p586 = scmp.eq.s32.totalorder %s39, 1
    %p587 = por %p585, %p586
    %p589 = scmp.ne.s32.totalorder %s574, %s588
    %p590 = scmp.eq.s32.totalorder %s39, 0
    %p591 = por %p589, %p590
    %s593 = sadd.s32 %s592, 1
    %p596 = scmp.eq.s32.totalorder %s33, 1
    %p597 = scmp.ne.s32.totalorder %s592, %s594
    %p598 = scmp.eq.s32.totalorder %s33, 0
    %p599 = por %p597, %p598
    %p600 = scmp.ne.s32.totalorder %s592, %s594
    %p601 = scmp.eq.s32.totalorder %s38, 1
    %p602 = por %p600, %p601
    %p603 = scmp.ne.s32.totalorder %s594, %s595
    %p604 = scmp.eq.s32.totalorder %s38, 0
    %p605 = por %p603, %p604
    %p606 = scmp.ne.s32.totalorder %s594, %s595
    %p607 = scmp.eq.s32.totalorder %s39, 1
    %p608 = por %p606, %p607
    %p610 = scmp.ne.s32.totalorder %s595, %s609
    %p611 = scmp.eq.s32.totalorder %s39, 0
    %p612 = por %p610, %p611
    %s613 = ssub.s32 %s33, %s40
    %p614 = scmp.eq.s32.totalorder %s613, 0
    %s616 = sadd.s32 %s615, 1
    %s617 = scalar_select %p614, %s615, %s616
    %p620 = pneg %p614
    %p621 = scmp.eq.s32.totalorder %s33, 1
    %p622 = por %p620, %p621
    %p623 = scmp.ne.s32.totalorder %s615, %s618
    %p624 = scmp.eq.s32.totalorder %s33, 0
    %p625 = por %p623, %p624
    %p626 = scmp.ne.s32.totalorder %s615, %s618
    %p627 = scmp.eq.s32.totalorder %s38, 1
    %p628 = por %p626, %p627
    %p629 = scmp.ne.s32.totalorder %s618, %s619
    %p630 = scmp.eq.s32.totalorder %s38, 0
    %p631 = por %p629, %p630
    %p632 = scmp.ne.s32.totalorder %s618, %s619
    %p633 = scmp.eq.s32.totalorder %s39, 1
    %p634 = por %p632, %p633
    %p636 = scmp.ne.s32.totalorder %s619, %s635
    %p637 = scmp.eq.s32.totalorder %s39, 0
    %p638 = por %p636, %p637
    %p639 = scmp.le.s32.totalorder 1, %s33
    %p640 = scmp.lt.s32.totalorder %s33, 3
    %p641 = pnand %p639, %p640
    %p642 = pneg %p641
    // Predicated region
    $region9: #{_lambda_.1} parent=5 // pred_check
      _
    $region10: #{_lambda_.1} parent=5 // pred_check_branch
      %644 = sbr.rel (%p641) target = $region12
    $region11: #{_lambda_.1} parent=5 // pred_region
      %s645 = ssub.s32 %s33, 1
      // Predicated region
      $region13: #{_lambda_.1} parent=11 // pred_check
        %p646 = pneg %p80
      $region14: #{_lambda_.1} parent=11 // pred_check_branch
        %648 = sbr.rel (%p646) target = $region16
      $region15: #{_lambda_.1} parent=11 // pred_region
        _
      $region16: #{_lambda_.1} parent=11 // pred_fallthru
        _
      // Predicated region
      $region17: #{_lambda_.1} parent=11 // pred_check
        %p649 = pneg %p101
      $region18: #{_lambda_.1} parent=11 // pred_check_branch
        %651 = sbr.rel (%p649) target = $region20
      $region19: #{_lambda_.1} parent=11 // pred_region
        _
      $region20: #{_lambda_.1} parent=11 // pred_fallthru
        _
      // Predicated region
      $region21: #{_lambda_.1} parent=11 // pred_check
        %p652 = pneg %p122
      $region22: #{_lambda_.1} parent=11 // pred_check_branch
        %654 = sbr.rel (%p652) target = $region24
      $region23: #{_lambda_.1} parent=11 // pred_region
        _
      $region24: #{_lambda_.1} parent=11 // pred_fallthru
        _
      // Predicated region
      $region25: #{_lambda_.1} parent=11 // pred_check
        %p655 = pneg %p143
      $region26: #{_lambda_.1} parent=11 // pred_check_branch
        %657 = sbr.rel (%p655) target = $region28
      $region27: #{_lambda_.1} parent=11 // pred_region
        _
      $region28: #{_lambda_.1} parent=11 // pred_fallthru
        _
      // Predicated region
      $region29: #{_lambda_.1} parent=11 // pred_check
        %p658 = pneg %p164
      $region30: #{_lambda_.1} parent=11 // pred_check_branch
        %660 = sbr.rel (%p658) target = $region32
      $region31: #{_lambda_.1} parent=11 // pred_region
        _
      $region32: #{_lambda_.1} parent=11 // pred_fallthru
        _
      // Predicated region
      $region33: #{_lambda_.1} parent=11 // pred_check
        %p661 = pneg %p185
      $region34: #{_lambda_.1} parent=11 // pred_check_branch
        %663 = sbr.rel (%p661) target = $region36
      $region35: #{_lambda_.1} parent=11 // pred_region
        _
      $region36: #{_lambda_.1} parent=11 // pred_fallthru
        _
      // Predicated region
      $region37: #{_lambda_.1} parent=11 // pred_check
        %p664 = pneg %p206
      $region38: #{_lambda_.1} parent=11 // pred_check_branch
        %666 = sbr.rel (%p664) target = $region40
      $region39: #{_lambda_.1} parent=11 // pred_region
        _
      $region40: #{_lambda_.1} parent=11 // pred_fallthru
        _
      // Predicated region
      $region41: #{_lambda_.1} parent=11 // pred_check
        %p667 = pneg %p227
      $region42: #{_lambda_.1} parent=11 // pred_check_branch
        %669 = sbr.rel (%p667) target = $region44
      $region43: #{_lambda_.1} parent=11 // pred_region
        _
      $region44: #{_lambda_.1} parent=11 // pred_fallthru
        _
      // Predicated region
      $region45: #{_lambda_.1} parent=11 // pred_check
        %p670 = pneg %p248
      $region46: #{_lambda_.1} parent=11 // pred_check_branch
        %672 = sbr.rel (%p670) target = $region48
      $region47: #{_lambda_.1} parent=11 // pred_region
        _
      $region48: #{_lambda_.1} parent=11 // pred_fallthru
        _
      // Predicated region
      $region49: #{_lambda_.1} parent=11 // pred_check
        %p673 = pneg %p269
      $region50: #{_lambda_.1} parent=11 // pred_check_branch
        %675 = sbr.rel (%p673) target = $region52
      $region51: #{_lambda_.1} parent=11 // pred_region
        _
      $region52: #{_lambda_.1} parent=11 // pred_fallthru
        _
      // Predicated region
      $region53: #{_lambda_.1} parent=11 // pred_check
        %p676 = pneg %p290
      $region54: #{_lambda_.1} parent=11 // pred_check_branch
        %678 = sbr.rel (%p676) target = $region56
      $region55: #{_lambda_.1} parent=11 // pred_region
        _
      $region56: #{_lambda_.1} parent=11 // pred_fallthru
        _
      // Predicated region
      $region57: #{_lambda_.1} parent=11 // pred_check
        %p679 = pneg %p311
      $region58: #{_lambda_.1} parent=11 // pred_check_branch
        %681 = sbr.rel (%p679) target = $region60
      $region59: #{_lambda_.1} parent=11 // pred_region
        _
      $region60: #{_lambda_.1} parent=11 // pred_fallthru
        _
      // Predicated region
      $region61: #{_lambda_.1} parent=11 // pred_check
        %p682 = pneg %p332
      $region62: #{_lambda_.1} parent=11 // pred_check_branch
        %684 = sbr.rel (%p682) target = $region64
      $region63: #{_lambda_.1} parent=11 // pred_region
        _
      $region64: #{_lambda_.1} parent=11 // pred_fallthru
        _
      // Predicated region
      $region65: #{_lambda_.1} parent=11 // pred_check
        %p685 = pneg %p353
      $region66: #{_lambda_.1} parent=11 // pred_check_branch
        %687 = sbr.rel (%p685) target = $region68
      $region67: #{_lambda_.1} parent=11 // pred_region
        _
      $region68: #{_lambda_.1} parent=11 // pred_fallthru
        _
      // Predicated region
      $region69: #{_lambda_.1} parent=11 // pred_check
        %p688 = pneg %p374
      $region70: #{_lambda_.1} parent=11 // pred_check_branch
        %690 = sbr.rel (%p688) target = $region72
      $region71: #{_lambda_.1} parent=11 // pred_region
        _
      $region72: #{_lambda_.1} parent=11 // pred_fallthru
        _
      // Predicated region
      $region73: #{_lambda_.1} parent=11 // pred_check
        %p691 = pneg %p395
      $region74: #{_lambda_.1} parent=11 // pred_check_branch
        %693 = sbr.rel (%p691) target = $region76
      $region75: #{_lambda_.1} parent=11 // pred_region
        _
      $region76: #{_lambda_.1} parent=11 // pred_fallthru
        _
      // Predicated region
      $region77: #{_lambda_.1} parent=11 // pred_check
        %p694 = pneg %p416
      $region78: #{_lambda_.1} parent=11 // pred_check_branch
        %696 = sbr.rel (%p694) target = $region80
      $region79: #{_lambda_.1} parent=11 // pred_region
        _
      $region80: #{_lambda_.1} parent=11 // pred_fallthru
        _
      // Predicated region
      $region81: #{_lambda_.1} parent=11 // pred_check
        %p697 = pneg %p437
      $region82: #{_lambda_.1} parent=11 // pred_check_branch
        %699 = sbr.rel (%p697) target = $region84
      $region83: #{_lambda_.1} parent=11 // pred_region
        _
      $region84: #{_lambda_.1} parent=11 // pred_fallthru
        _
      // Predicated region
      $region85: #{_lambda_.1} parent=11 // pred_check
        %p700 = pneg %p458
      $region86: #{_lambda_.1} parent=11 // pred_check_branch
        %702 = sbr.rel (%p700) target = $region88
      $region87: #{_lambda_.1} parent=11 // pred_region
        _
      $region88: #{_lambda_.1} parent=11 // pred_fallthru
        _
      // Predicated region
      $region89: #{_lambda_.1} parent=11 // pred_check
        %p703 = pneg %p479
      $region90: #{_lambda_.1} parent=11 // pred_check_branch
        %705 = sbr.rel (%p703) target = $region92
      $region91: #{_lambda_.1} parent=11 // pred_region
        _
      $region92: #{_lambda_.1} parent=11 // pred_fallthru
        _
      // Predicated region
      $region93: #{_lambda_.1} parent=11 // pred_check
        %p706 = pneg %p500
      $region94: #{_lambda_.1} parent=11 // pred_check_branch
        %708 = sbr.rel (%p706) target = $region96
      $region95: #{_lambda_.1} parent=11 // pred_region
        _
      $region96: #{_lambda_.1} parent=11 // pred_fallthru
        _
      // Predicated region
      $region97: #{_lambda_.1} parent=11 // pred_check
        %p709 = pneg %p521
      $region98: #{_lambda_.1} parent=11 // pred_check_branch
        %711 = sbr.rel (%p709) target = $region100
      $region99: #{_lambda_.1} parent=11 // pred_region
        _
      $region100: #{_lambda_.1} parent=11 // pred_fallthru
        _
      // Predicated region
      $region101: #{_lambda_.1} parent=11 // pred_check
        %p712 = pneg %p542
      $region102: #{_lambda_.1} parent=11 // pred_check_branch
        %714 = sbr.rel (%p712) target = $region104
      $region103: #{_lambda_.1} parent=11 // pred_region
        _
      $region104: #{_lambda_.1} parent=11 // pred_fallthru
        _
      // Predicated region
      $region105: #{_lambda_.1} parent=11 // pred_check
        %p715 = pneg %p563
      $region106: #{_lambda_.1} parent=11 // pred_check_branch
        %717 = sbr.rel (%p715) target = $region108
      $region107: #{_lambda_.1} parent=11 // pred_region
        _
      $region108: #{_lambda_.1} parent=11 // pred_fallthru
        _
      // Predicated region
      $region109: #{_lambda_.1} parent=11 // pred_check
        %p718 = pneg %p584
      $region110: #{_lambda_.1} parent=11 // pred_check_branch
        %720 = sbr.rel (%p718) target = $region112
      $region111: #{_lambda_.1} parent=11 // pred_region
        _
      $region112: #{_lambda_.1} parent=11 // pred_fallthru
        _
      // Predicated region
      $region113: #{_lambda_.1} parent=11 // pred_check
        %p721 = pneg %p605
      $region114: #{_lambda_.1} parent=11 // pred_check_branch
        %723 = sbr.rel (%p721) target = $region116
      $region115: #{_lambda_.1} parent=11 // pred_region
        _
      $region116: #{_lambda_.1} parent=11 // pred_fallthru
        _
    $region12: #{_lambda_.1} parent=5 // pred_fallthru
      _
    %p724 = scmp.lt.s32.totalorder %s33, 2
    // Predicated region
    $region117: #{_lambda_.1} parent=5 // pred_check
      %p725 = pneg %p724
    $region118: #{_lambda_.1} parent=5 // pred_check_branch
      %727 = sbr.rel (%p725) target = $region120
    $region119: #{_lambda_.1} parent=5 // pred_region
      // Predicated region
      $region121: #{_lambda_.1} parent=119 // pred_check
        %p728 = pneg %p53
      $region122: #{_lambda_.1} parent=119 // pred_check_branch
        %730 = sbr.rel (%p728) target = $region124
      $region123: #{_lambda_.1} parent=119 // pred_region
        %s731 = smul.u32 10, %s33
        %p732 = scmp.lt.s32.totalorder %s731, 19
        %s733 = scalar_select %p732, %s731, 19
        %s734 = smul.addr %s733, 2
        %s735 = smul.addr %s734, 8
        %s736 = scalar_lea.vmem %s0, %s735
        %s737 = smul.u32 10, %s33
      $region124: #{_lambda_.1} parent=119 // pred_fallthru
        _
    $region120: #{_lambda_.1} parent=5 // pred_fallthru
      _
    %p738 = scmp.le.s32.totalorder 1, %s33
    %p739 = scmp.lt.s32.totalorder %s33, 3
    %p740 = pnand %p738, %p739
    %p741 = pneg %p740
    // Predicated region
    $region125: #{_lambda_.1} parent=5 // pred_check
      _
    $region126: #{_lambda_.1} parent=5 // pred_check_branch
      %743 = sbr.rel (%p740) target = $region128
    $region127: #{_lambda_.1} parent=5 // pred_region
      %s744 = ssub.s32 %s33, 1
      %s745 = smul.u32 10, %s38
      %p746 = scmp.lt.s32.totalorder %s745, 19
      %s747 = scalar_select %p746, %s745, 19
      %s748 = smul.addr %s747, 2
      %s749 = smul.addr %s748, 8
      %s750 = scalar_lea.vmem %s0, %s749
      %p751 = pneg %p59
      %p752 = pneg %p56
      %p753 = pneg %p80
      %p754 = pneg %p77
      %p755 = pneg %p101
      %p756 = pneg %p98
      %p757 = pneg %p122
      %p758 = pneg %p119
      %p759 = pneg %p143
      %p760 = pneg %p140
      %p761 = pneg %p164
      %p762 = pneg %p161
      %p763 = pneg %p185
      %p764 = pneg %p182
      %p765 = pneg %p206
      %p766 = pneg %p203
      %p767 = pneg %p227
      %p768 = pneg %p224
      %p769 = pneg %p248
      %p770 = pneg %p245
      %p771 = pneg %p269
      %p772 = pneg %p266
      %p773 = pneg %p290
      %p774 = pneg %p287
      %p775 = pneg %p311
      %p776 = pneg %p308
      %p777 = pneg %p332
      %p778 = pneg %p329
      %p779 = pneg %p353
      %p780 = pneg %p350
      %p781 = pneg %p374
      %p782 = pneg %p371
      %p783 = pneg %p395
      %p784 = pneg %p392
      %p785 = pneg %p416
      %p786 = pneg %p413
      %p787 = pneg %p437
      %p788 = pneg %p434
      %p789 = pneg %p458
      %p790 = pneg %p455
      %p791 = pneg %p479
      %p792 = pneg %p476
      %p793 = pneg %p500
      %p794 = pneg %p497
      %p795 = pneg %p521
      %p796 = pneg %p518
      %p797 = pneg %p542
      %p798 = pneg %p539
      %p799 = pneg %p563
      %p800 = pneg %p560
      %p801 = pneg %p584
      %p802 = pneg %p581
      %p803 = pneg %p605
      %p804 = pneg %p602
      %p805 = pneg %p631
      %p806 = pneg %p628
      %s807 = smul.u32 4, %s38
      %p808 = scmp.lt.s32.totalorder %s807, 7
      %s809 = scalar_select %p808, %s807, 7
      %s810 = smul.addr %s809, 8
      %s811 = scalar_lea.vmem %s27, %s810
      %s812 = smul.u32 10, %s38
      %p813 = scmp.lt.s32.totalorder %s812, 19
      %s814 = scalar_select %p813, %s812, 19
      %s815 = smul.addr %s814, 2
      %s816 = smul.addr %s815, 8
      %s817 = scalar_lea.vmem %s0, %s816
      %s818 = smul.u32 10, %s38
      %s819 = smul.u32 4, %s38
      %p820 = scmp.lt.s32.totalorder %s819, 7
      %s821 = scalar_select %p820, %s819, 7
      %s822 = smul.addr %s821, 8
      %s823 = scalar_lea.vmem %s27, %s822
      %s824 = smul.u32 4, %s38
      %v826 = vld [vmem:[%s817] sm:$0xff]
      %v827 = vld [vmem:[%s817 + $0x8] sm:$0xff]
      %v828 = vld [vmem:[%s817 + $0x10] sm:$0xff]
      %v829 = vld [vmem:[%s817 + $0x18] sm:$0xff]
      %v830 = vld [vmem:[%s817 + $0x20] sm:$0xff]
      %v831 = vld [vmem:[%s817 + $0x28] sm:$0xff]
      %v832 = vld [vmem:[%s817 + $0x30] sm:$0xff]
      %v833 = vld [vmem:[%s817 + $0x38] sm:$0xff]
      %v834 = vld [vmem:[%s817 + $0x40] sm:$0xff]
      %v835 = vld [vmem:[%s817 + $0x48] sm:$0xff]
      %v836 = vld [vmem:[%s817 + $0x50] sm:$0xff]
      %v837 = vld [vmem:[%s817 + $0x58] sm:$0xff]
      %v838 = vld [vmem:[%s817 + $0x60] sm:$0xff]
      %v839 = vld [vmem:[%s817 + $0x68] sm:$0xff]
      %v840 = vld [vmem:[%s817 + $0x70] sm:$0xff]
      %v841 = vld [vmem:[%s817 + $0x78] sm:$0xff]
      %v842 = vld [vmem:[%s817 + $0x80] sm:$0xff]
      %v843 = vld [vmem:[%s817 + $0x88] sm:$0xff]
      %v844 = vld [vmem:[%s817 + $0x90] sm:$0xff]
      %v845 = vld [vmem:[%s817 + $0x98] sm:$0xff]
      %v846 = vld [vmem:[%s1] sm:$0xff]
      %v847 = vld [vmem:[%s1 + $0x8] sm:$0xff]
      %v848 = vld [vmem:[%s1 + $0x10] sm:$0xff]
      %v849 = vld [vmem:[%s1 + $0x18] sm:$0xff]
      %v850 = vld [vmem:[%s1 + $0x20] sm:$0xff]
      %v851 = vld [vmem:[%s1 + $0x28] sm:$0xff]
      %v852 = vld [vmem:[%s1 + $0x30] sm:$0xff]
      %v853 = vld [vmem:[%s1 + $0x38] sm:$0xff]
      %v854 = vld [vmem:[%s1 + $0x40] sm:$0xff]
      %v855 = vld [vmem:[%s1 + $0x48] sm:$0xff]
      %v856 = vld [vmem:[%s1 + $0x50] sm:$0xff]
      %v857 = vld [vmem:[%s1 + $0x58] sm:$0xff]
      %v858 = vld [vmem:[%s1 + $0x60] sm:$0xff]
      %v859 = vld [vmem:[%s1 + $0x68] sm:$0xff]
      %v860 = vld [vmem:[%s1 + $0x70] sm:$0xff]
      %v861 = vld [vmem:[%s1 + $0x78] sm:$0xff]
      %v862 = vld [vmem:[%s1 + $0x80] sm:$0xff]
      %v863 = vld [vmem:[%s1 + $0x88] sm:$0xff]
      %v864 = vld [vmem:[%s1 + $0x90] sm:$0xff]
      %v865 = vld [vmem:[%s1 + $0x98] sm:$0xff]
      %v866 = vpack.c.bf16 %v828, %v826
      %v867 = vpack.c.bf16 %v829, %v827
      %v868 = vpack.c.bf16 %v832, %v830
      %v869 = vpack.c.bf16 %v833, %v831
      %v870 = vpack.c.bf16 %v836, %v834
      %v871 = vpack.c.bf16 %v837, %v835
      %v872 = vpack.c.bf16 %v840, %v838
      %v873 = vpack.c.bf16 %v841, %v839
      %v874 = vpack.c.bf16 %v844, %v842
      %v875 = vpack.c.bf16 %v845, %v843
      %v876 = vld [vmem:[%s2] sm:$0xff]
      %v877 = vld [vmem:[%s2 + $0x8] sm:$0xff]
      %v878 = vld [vmem:[%s2 + $0x10] sm:$0xff]
      %v879 = vld [vmem:[%s2 + $0x18] sm:$0xff]
      %v880 = vld [vmem:[%s2 + $0x20] sm:$0xff]
      %v881 = vld [vmem:[%s2 + $0x28] sm:$0xff]
      %v882 = vld [vmem:[%s2 + $0x30] sm:$0xff]
      %v883 = vld [vmem:[%s2 + $0x38] sm:$0xff]
      %v884 = vld [vmem:[%s2 + $0x40] sm:$0xff]
      %v885 = vld [vmem:[%s2 + $0x48] sm:$0xff]
      %v886 = vld [vmem:[%s2 + $0x50] sm:$0xff]
      %v887 = vld [vmem:[%s2 + $0x58] sm:$0xff]
      %v888 = vld [vmem:[%s2 + $0x60] sm:$0xff]
      %v889 = vld [vmem:[%s2 + $0x68] sm:$0xff]
      %v890 = vld [vmem:[%s2 + $0x70] sm:$0xff]
      %v891 = vld [vmem:[%s2 + $0x78] sm:$0xff]
      %v892 = vld [vmem:[%s2 + $0x80] sm:$0xff]
      %v893 = vld [vmem:[%s2 + $0x88] sm:$0xff]
      %v894 = vld [vmem:[%s2 + $0x90] sm:$0xff]
      %v895 = vld [vmem:[%s2 + $0x98] sm:$0xff]
      %vm896 = vsmask.f32 7424
      %v898 = vshrl.u32 %v866, 16
      %v900 = vshll.u32 %v866, 16
      %v902 = vrot.slane %v900, 1
      %v903 = vor.u32 %v898, %v902
      %v905 = vshll.u32 %v868, 16
      %v907 = vrot.slane %v905, 1
      %v908 = vsel %vm896, %v903, %v907
      %v910 = vshrl.u32 %v867, 16
      %v912 = vshll.u32 %v867, 16
      %v914 = vrot.slane %v912, 1
      %v915 = vor.u32 %v910, %v914
      %v917 = vshll.u32 %v869, 16
      %v919 = vrot.slane %v917, 1
      %v920 = vsel %vm896, %v915, %v919
      %v921 = vshrl.u32 %v868, 16
      %v923 = vor.u32 %v921, %v907
      %v925 = vshll.u32 %v870, 16
      %v927 = vrot.slane %v925, 1
      %v928 = vsel %vm896, %v923, %v927
      %v929 = vshrl.u32 %v869, 16
      %v931 = vor.u32 %v929, %v919
      %v933 = vshll.u32 %v871, 16
      %v935 = vrot.slane %v933, 1
      %v936 = vsel %vm896, %v931, %v935
      %v937 = vshrl.u32 %v870, 16
      %v939 = vor.u32 %v937, %v927
      %v941 = vshll.u32 %v872, 16
      %v943 = vrot.slane %v941, 1
      %v944 = vsel %vm896, %v939, %v943
      %v945 = vshrl.u32 %v871, 16
      %v947 = vor.u32 %v945, %v935
      %v949 = vshll.u32 %v873, 16
      %v951 = vrot.slane %v949, 1
      %v952 = vsel %vm896, %v947, %v951
      %v953 = vshrl.u32 %v872, 16
      %v955 = vor.u32 %v953, %v943
      %v957 = vshll.u32 %v874, 16
      %v959 = vrot.slane %v957, 1
      %v960 = vsel %vm896, %v955, %v959
      %v961 = vshrl.u32 %v873, 16
      %v963 = vor.u32 %v961, %v951
      %v965 = vshll.u32 %v875, 16
      %v967 = vrot.slane %v965, 1
      %v968 = vsel %vm896, %v963, %v967
      %v969 = vshrl.u32 %v874, 16
      %v971 = vor.u32 %v969, %v959
      %v972 = vshrl.u32 %v875, 16
      %v974 = vor.u32 %v972, %v967
      %v1000 = vunpack.c.l.b16 %v876
      %v1001 = vunpack.c.h.b16 %v876
      %v1002 = vunpack.c.l.b16 %v877
      %v1003 = vunpack.c.h.b16 %v877
      %v1004 = vunpack.c.l.b16 %v878
      %v1005 = vunpack.c.h.b16 %v878
      %v1006 = vunpack.c.l.b16 %v879
      %v1007 = vunpack.c.h.b16 %v879
      %v1008 = vunpack.c.l.b16 %v880
      %v1009 = vunpack.c.h.b16 %v880
      %v1010 = vunpack.c.l.b16 %v881
      %v1011 = vunpack.c.h.b16 %v881
      %v1012 = vunpack.c.l.b16 %v882
      %v1013 = vunpack.c.h.b16 %v882
      %v1014 = vunpack.c.l.b16 %v883
      %v1015 = vunpack.c.h.b16 %v883
      %v1016 = vunpack.c.l.b16 %v884
      %v1017 = vunpack.c.h.b16 %v884
      %v1018 = vunpack.c.l.b16 %v885
      %v1019 = vunpack.c.h.b16 %v885
      %v1020 = vunpack.c.l.b16 %v886
      %v1021 = vunpack.c.h.b16 %v886
      %v1022 = vunpack.c.l.b16 %v887
      %v1023 = vunpack.c.h.b16 %v887
      %v1024 = vunpack.c.l.b16 %v888
      %v1025 = vunpack.c.h.b16 %v888
      %v1026 = vunpack.c.l.b16 %v889
      %v1027 = vunpack.c.h.b16 %v889
      %v1028 = vunpack.c.l.b16 %v890
      %v1029 = vunpack.c.h.b16 %v890
      %v1030 = vunpack.c.l.b16 %v891
      %v1031 = vunpack.c.h.b16 %v891
      %v1032 = vunpack.c.l.b16 %v892
      %v1033 = vunpack.c.h.b16 %v892
      %v1034 = vunpack.c.l.b16 %v893
      %v1035 = vunpack.c.h.b16 %v893
      %v1036 = vunpack.c.l.b16 %v894
      %v1037 = vunpack.c.h.b16 %v894
      %v1038 = vunpack.c.l.b16 %v895
      %v1039 = vunpack.c.h.b16 %v895
      %v1040 = vpack.c.b16 %v1002, %v1000
      %v1041 = vpack.c.b16 %v1003, %v1001
      %v1042 = vpack.c.b16 %v1006, %v1004
      %v1043 = vpack.c.b16 %v1007, %v1005
      %v1044 = vpack.c.b16 %v1010, %v1008
      %v1045 = vpack.c.b16 %v1011, %v1009
      %v1046 = vpack.c.b16 %v1014, %v1012
      %v1047 = vpack.c.b16 %v1015, %v1013
      %v1048 = vpack.c.b16 %v1018, %v1016
      %v1049 = vpack.c.b16 %v1019, %v1017
      %v1050 = vpack.c.b16 %v1022, %v1020
      %v1051 = vpack.c.b16 %v1023, %v1021
      %v1052 = vpack.c.b16 %v1026, %v1024
      %v1053 = vpack.c.b16 %v1027, %v1025
      %v1054 = vpack.c.b16 %v1030, %v1028
      %v1055 = vpack.c.b16 %v1031, %v1029
      %v1056 = vpack.c.b16 %v1034, %v1032
      %v1057 = vpack.c.b16 %v1035, %v1033
      %v1058 = vpack.c.b16 %v1038, %v1036
      %v1059 = vpack.c.b16 %v1039, %v1037
      %vm1080 = vcmask 261120
      %v1082 = vsel %vm1080, %v920, 0
      %v1085 = vsel %vm1080, %v936, 0
      %v1088 = vsel %vm1080, %v952, 0
      %v1091 = vsel %vm1080, %v968, 0
      %v1094 = vsel %vm1080, %v974, 0
      %1096 = vmatprep.subr.bf16.mxu0 %v1041
      %1097 = vmatpush1.bf16.msra.mxu0 %v1040
      %1098 = vmatprep.subr.bf16.mxu0 %v1043
      %1099 = vmatpush1.bf16.msra.mxu0 %v1042
      %1100 = vmatprep.subr.bf16.mxu0 %v1045
      %1101 = vmatpush1.bf16.msra.mxu0 %v1044
      %1102 = vmatprep.subr.bf16.mxu0 %v1047
      %1103 = vmatpush1.bf16.msra.mxu0 %v1046
      %1104 = vmatprep.subr.bf16.mxu0 %v1049
      %1105 = vmatpush1.bf16.msra.mxu0 %v1048
      %1106 = vmatprep.subr.bf16.mxu0 %v1051
      %1107 = vmatpush1.bf16.msra.mxu0 %v1050
      %1108 = vmatprep.subr.bf16.mxu0 %v1053
      %1109 = vmatpush1.bf16.msra.mxu0 %v1052
      %1110 = vmatprep.subr.bf16.mxu0 %v1055
      %1111 = vmatpush1.bf16.msra.mxu0 %v1054
      %1112 = vmatprep.subr.bf16.mxu0 %v1057
      %1113 = vmatpush1.bf16.msra.mxu0 %v1056
      %1114 = vmatprep.subr.bf16.mxu0 %v1059
      %1115 = vmatpush1.bf16.msra.mxu0 %v1058
      %1116 = vmatprep.subr.bf16.mxu0 0
      %1117 = vmatpush1.bf16.msra.mxu0 0
      %1118 = vmatprep.subr.bf16.mxu0 0
      %1119 = vmatpush1.bf16.msra.mxu0 0
      %1120 = vmatprep.subr.bf16.mxu0 0
      %1121 = vmatpush1.bf16.msra.mxu0 0
      %1122 = vmatprep.subr.bf16.mxu0 0
      %1123 = vmatpush1.bf16.msra.mxu0 0
      %1124 = vmatprep.subr.bf16.mxu0 0
      %1125 = vmatpush1.bf16.msra.mxu0 0
      %1126 = vmatprep.subr.bf16.mxu0 0
      %1127 = vmatpush1.bf16.msra.mxu0 0
      %1128 = vmatprep.mubr.bf16.mxu0 %v1082
      %1129 = vmatmul.mubr.bf16.gmra.mrb[0].mxu0 %v908
      %v1130 = vpop.f32.mrb[0].mxu0
      %v1131 = vadd.f32 0.0, %v1130
      %v1132 = vpop.f32.mrb[0].mxu0
      %v1133 = vadd.f32 0.0, %v1132
      %v1134 = vpop.f32.mrb[0].mxu0
      %v1135 = vadd.f32 0.0, %v1134
      %v1136 = vpop.f32.mrb[0].mxu0
      %v1137 = vadd.f32 0.0, %v1136
      %1138 = vmatprep.mubr.bf16.mxu0 %v1085
      %1139 = vmatmul.mubr.bf16.gmra.mrb[0].mxu0 %v928
      %v1140 = vpop.f32.mrb[0].mxu0
      %v1141 = vadd.f32 0.0, %v1140
      %v1142 = vpop.f32.mrb[0].mxu0
      %v1143 = vadd.f32 0.0, %v1142
      %v1144 = vpop.f32.mrb[0].mxu0
      %v1145 = vadd.f32 0.0, %v1144
      %v1146 = vpop.f32.mrb[0].mxu0
      %v1147 = vadd.f32 0.0, %v1146
      %1148 = vmatprep.mubr.bf16.mxu0 %v1088
      %1149 = vmatmul.mubr.bf16.gmra.mrb[0].mxu0 %v944
      %v1150 = vpop.f32.mrb[0].mxu0
      %v1151 = vadd.f32 0.0, %v1150
      %v1152 = vpop.f32.mrb[0].mxu0
      %v1153 = vadd.f32 0.0, %v1152
      %v1154 = vpop.f32.mrb[0].mxu0
      %v1155 = vadd.f32 0.0, %v1154
      %v1156 = vpop.f32.mrb[0].mxu0
      %v1157 = vadd.f32 0.0, %v1156
      %1158 = vmatprep.mubr.bf16.mxu0 %v1091
      %1159 = vmatmul.mubr.bf16.gmra.mrb[0].mxu0 %v960
      %v1160 = vpop.f32.mrb[0].mxu0
      %v1161 = vadd.f32 0.0, %v1160
      %v1162 = vpop.f32.mrb[0].mxu0
      %v1163 = vadd.f32 0.0, %v1162
      %v1164 = vpop.f32.mrb[0].mxu0
      %v1165 = vadd.f32 0.0, %v1164
      %v1166 = vpop.f32.mrb[0].mxu0
      %v1167 = vadd.f32 0.0, %v1166
      %1168 = vmatprep.mubr.bf16.mxu0 %v1094
      %1169 = vmatmul.mubr.bf16.gmra.mrb[0].mxu0 %v971
      %v1170 = vpop.f32.mrb[0].mxu0
      %v1171 = vadd.f32 0.0, %v1170
      %v1172 = vpop.f32.mrb[0].mxu0
      %v1173 = vadd.f32 0.0, %v1172
      %v1174 = vpop.f32.mrb[0].mxu0
      %v1175 = vadd.f32 0.0, %v1174
      %v1176 = vpop.f32.mrb[0].mxu0
      %v1177 = vadd.f32 0.0, %v1176
      %1178 = vdwg.mxu0
      %v1199 = vunpack.c.l.b16 %v846
      %v1200 = vunpack.c.h.b16 %v846
      %v1201 = vunpack.c.l.b16 %v847
      %v1202 = vunpack.c.h.b16 %v847
      %v1203 = vunpack.c.l.b16 %v848
      %v1204 = vunpack.c.h.b16 %v848
      %v1205 = vunpack.c.l.b16 %v849
      %v1206 = vunpack.c.h.b16 %v849
      %v1207 = vunpack.c.l.b16 %v850
      %v1208 = vunpack.c.h.b16 %v850
      %v1209 = vunpack.c.l.b16 %v851
      %v1210 = vunpack.c.h.b16 %v851
      %v1211 = vunpack.c.l.b16 %v852
      %v1212 = vunpack.c.h.b16 %v852
      %v1213 = vunpack.c.l.b16 %v853
      %v1214 = vunpack.c.h.b16 %v853
      %v1215 = vunpack.c.l.b16 %v854
      %v1216 = vunpack.c.h.b16 %v854
      %v1217 = vunpack.c.l.b16 %v855
      %v1218 = vunpack.c.h.b16 %v855
      %v1219 = vunpack.c.l.b16 %v856
      %v1220 = vunpack.c.h.b16 %v856
      %v1221 = vunpack.c.l.b16 %v857
      %v1222 = vunpack.c.h.b16 %v857
      %v1223 = vunpack.c.l.b16 %v858
      %v1224 = vunpack.c.h.b16 %v858
      %v1225 = vunpack.c.l.b16 %v859
      %v1226 = vunpack.c.h.b16 %v859
      %v1227 = vunpack.c.l.b16 %v860
      %v1228 = vunpack.c.h.b16 %v860
      %v1229 = vunpack.c.l.b16 %v861
      %v1230 = vunpack.c.h.b16 %v861
      %v1231 = vunpack.c.l.b16 %v862
      %v1232 = vunpack.c.h.b16 %v862
      %v1233 = vunpack.c.l.b16 %v863
      %v1234 = vunpack.c.h.b16 %v863
      %v1235 = vunpack.c.l.b16 %v864
      %v1236 = vunpack.c.h.b16 %v864
      %v1237 = vunpack.c.l.b16 %v865
      %v1238 = vunpack.c.h.b16 %v865
      %v1239 = vpack.c.b16 %v1201, %v1199
      %v1240 = vpack.c.b16 %v1202, %v1200
      %v1241 = vpack.c.b16 %v1205, %v1203
      %v1242 = vpack.c.b16 %v1206, %v1204
      %v1243 = vpack.c.b16 %v1209, %v1207
      %v1244 = vpack.c.b16 %v1210, %v1208
      %v1245 = vpack.c.b16 %v1213, %v1211
      %v1246 = vpack.c.b16 %v1214, %v1212
      %v1247 = vpack.c.b16 %v1217, %v1215
      %v1248 = vpack.c.b16 %v1218, %v1216
      %v1249 = vpack.c.b16 %v1221, %v1219
      %v1250 = vpack.c.b16 %v1222, %v1220
      %v1251 = vpack.c.b16 %v1225, %v1223
      %v1252 = vpack.c.b16 %v1226, %v1224
      %v1253 = vpack.c.b16 %v1229, %v1227
      %v1254 = vpack.c.b16 %v1230, %v1228
      %v1255 = vpack.c.b16 %v1233, %v1231
      %v1256 = vpack.c.b16 %v1234, %v1232
      %v1257 = vpack.c.b16 %v1237, %v1235
      %v1258 = vpack.c.b16 %v1238, %v1236
      %v1279 = vsel %vm1080, %v867, 0
      %v1281 = vsel %vm1080, %v869, 0
      %v1283 = vsel %vm1080, %v871, 0
      %v1285 = vsel %vm1080, %v873, 0
      %v1287 = vsel %vm1080, %v875, 0
      %1289 = vmatprep.subr.bf16.mxu0 %v1240
      %1290 = vmatpush1.bf16.msra.mxu0 %v1239
      %1291 = vmatprep.subr.bf16.mxu0 %v1242
      %1292 = vmatpush1.bf16.msra.mxu0 %v1241
      %1293 = vmatprep.subr.bf16.mxu0 %v1244
      %1294 = vmatpush1.bf16.msra.mxu0 %v1243
      %1295 = vmatprep.subr.bf16.mxu0 %v1246
      %1296 = vmatpush1.bf16.msra.mxu0 %v1245
      %1297 = vmatprep.subr.bf16.mxu0 %v1248
      %1298 = vmatpush1.bf16.msra.mxu0 %v1247
      %1299 = vmatprep.subr.bf16.mxu0 %v1250
      %1300 = vmatpush1.bf16.msra.mxu0 %v1249
      %1301 = vmatprep.subr.bf16.mxu0 %v1252
      %1302 = vmatpush1.bf16.msra.mxu0 %v1251
      %1303 = vmatprep.subr.bf16.mxu0 %v1254
      %1304 = vmatpush1.bf16.msra.mxu0 %v1253
      %1305 = vmatprep.subr.bf16.mxu0 %v1256
      %1306 = vmatpush1.bf16.msra.mxu0 %v1255
      %1307 = vmatprep.subr.bf16.mxu0 %v1258
      %1308 = vmatpush1.bf16.msra.mxu0 %v1257
      %1309 = vmatprep.subr.bf16.mxu0 0
      %1310 = vmatpush1.bf16.msra.mxu0 0
      %1311 = vmatprep.subr.bf16.mxu0 0
      %1312 = vmatpush1.bf16.msra.mxu0 0
      %1313 = vmatprep.subr.bf16.mxu0 0
      %1314 = vmatpush1.bf16.msra.mxu0 0
      %1315 = vmatprep.subr.bf16.mxu0 0
      %1316 = vmatpush1.bf16.msra.mxu0 0
      %1317 = vmatprep.subr.bf16.mxu0 0
      %1318 = vmatpush1.bf16.msra.mxu0 0
      %1319 = vmatprep.subr.bf16.mxu0 0
      %1320 = vmatpush1.bf16.msra.mxu0 0
      %1321 = vmatprep.mubr.bf16.mxu0 %v1279
      %1322 = vmatmul.mubr.bf16.gmra.mrb[0].mxu0 %v866
      %v1323 = vpop.f32.mrb[0].mxu0
      %v1324 = vadd.f32 %v1131, %v1323
      %v1325 = vpop.f32.mrb[0].mxu0
      %v1326 = vadd.f32 %v1133, %v1325
      %v1327 = vpop.f32.mrb[0].mxu0
      %v1328 = vadd.f32 %v1135, %v1327
      %v1329 = vpop.f32.mrb[0].mxu0
      %v1330 = vadd.f32 %v1137, %v1329
      %1331 = vmatprep.mubr.bf16.mxu0 %v1281
      %1332 = vmatmul.mubr.bf16.gmra.mrb[0].mxu0 %v868
      %v1333 = vpop.f32.mrb[0].mxu0
      %v1334 = vadd.f32 %v1141, %v1333
      %v1335 = vpop.f32.mrb[0].mxu0
      %v1336 = vadd.f32 %v1143, %v1335
      %v1337 = vpop.f32.mrb[0].mxu0
      %v1338 = vadd.f32 %v1145, %v1337
      %v1339 = vpop.f32.mrb[0].mxu0
      %v1340 = vadd.f32 %v1147, %v1339
      %1341 = vmatprep.mubr.bf16.mxu0 %v1283
      %1342 = vmatmul.mubr.bf16.gmra.mrb[0].mxu0 %v870
      %v1343 = vpop.f32.mrb[0].mxu0
      %v1344 = vadd.f32 %v1151, %v1343
      %v1345 = vpop.f32.mrb[0].mxu0
      %v1346 = vadd.f32 %v1153, %v1345
      %v1347 = vpop.f32.mrb[0].mxu0
      %v1348 = vadd.f32 %v1155, %v1347
      %v1349 = vpop.f32.mrb[0].mxu0
      %v1350 = vadd.f32 %v1157, %v1349
      %1351 = vmatprep.mubr.bf16.mxu0 %v1285
      %1352 = vmatmul.mubr.bf16.gmra.mrb[0].mxu0 %v872
      %v1353 = vpop.f32.mrb[0].mxu0
      %v1354 = vadd.f32 %v1161, %v1353
      %v1355 = vpop.f32.mrb[0].mxu0
      %v1356 = vadd.f32 %v1163, %v1355
      %v1357 = vpop.f32.mrb[0].mxu0
      %v1358 = vadd.f32 %v1165, %v1357
      %v1359 = vpop.f32.mrb[0].mxu0
      %v1360 = vadd.f32 %v1167, %v1359
      %1361 = vmatprep.mubr.bf16.mxu0 %v1287
      %1362 = vmatmul.mubr.bf16.gmra.mrb[0].mxu0 %v874
      %v1363 = vpop.f32.mrb[0].mxu0
      %v1364 = vadd.f32 %v1171, %v1363
      %v1365 = vpop.f32.mrb[0].mxu0
      %v1366 = vadd.f32 %v1173, %v1365
      %v1367 = vpop.f32.mrb[0].mxu0
      %v1368 = vadd.f32 %v1175, %v1367
      %v1369 = vpop.f32.mrb[0].mxu0
      %v1370 = vadd.f32 %v1177, %v1369
      %1371 = vdwg.mxu0
      %v1372 = vld [vmem:[%s3] sm:$0xff]
      %v1373 = vld [vmem:[%s3 + $0x8] sm:$0xff]
      %v1374 = vld [vmem:[%s3 + $0x10] sm:$0xff]
      %v1375 = vld [vmem:[%s3 + $0x18] sm:$0xff]
      %v1376 = vld [vmem:[%s3 + $0x20] sm:$0xff]
      %v1377 = vld [vmem:[%s3 + $0x28] sm:$0xff]
      %v1378 = vld [vmem:[%s3 + $0x30] sm:$0xff]
      %v1379 = vld [vmem:[%s3 + $0x38] sm:$0xff]
      %v1380 = vld [vmem:[%s3 + $0x40] sm:$0xff]
      %v1381 = vld [vmem:[%s3 + $0x48] sm:$0xff]
      %v1382 = vld [vmem:[%s3 + $0x50] sm:$0xff]
      %v1383 = vld [vmem:[%s3 + $0x58] sm:$0xff]
      %v1384 = vld [vmem:[%s3 + $0x60] sm:$0xff]
      %v1385 = vld [vmem:[%s3 + $0x68] sm:$0xff]
      %v1386 = vld [vmem:[%s3 + $0x70] sm:$0xff]
      %v1387 = vld [vmem:[%s3 + $0x78] sm:$0xff]
      %v1388 = vld [vmem:[%s3 + $0x80] sm:$0xff]
      %v1389 = vld [vmem:[%s3 + $0x88] sm:$0xff]
      %v1390 = vld [vmem:[%s3 + $0x90] sm:$0xff]
      %v1391 = vld [vmem:[%s3 + $0x98] sm:$0xff]
      %vm1402 = vcmask 1046528
      %v1403 = vrot.slane %v866, 1
      %v1404 = vrot.slane %v868, 1
      %v1405 = vsel %vm1402, %v1403, %v1404
      %v1406 = vrot.slane %v867, 1
      %v1407 = vrot.slane %v869, 1
      %v1408 = vsel %vm1402, %v1406, %v1407
      %v1409 = vrot.slane %v870, 1
      %v1410 = vsel %vm1402, %v1404, %v1409
      %v1411 = vrot.slane %v871, 1
      %v1412 = vsel %vm1402, %v1407, %v1411
      %v1413 = vrot.slane %v872, 1
      %v1414 = vsel %vm1402, %v1409, %v1413
      %v1415 = vrot.slane %v873, 1
      %v1416 = vsel %vm1402, %v1411, %v1415
      %v1417 = vrot.slane %v874, 1
      %v1418 = vsel %vm1402, %v1413, %v1417
      %v1419 = vrot.slane %v875, 1
      %v1420 = vsel %vm1402, %v1415, %v1419
      %v1446 = vunpack.c.l.b16 %v1372
      %v1447 = vunpack.c.h.b16 %v1372
      %v1448 = vunpack.c.l.b16 %v1373
      %v1449 = vunpack.c.h.b16 %v1373
      %v1450 = vunpack.c.l.b16 %v1374
      %v1451 = vunpack.c.h.b16 %v1374
      %v1452 = vunpack.c.l.b16 %v1375
      %v1453 = vunpack.c.h.b16 %v1375
      %v1454 = vunpack.c.l.b16 %v1376
      %v1455 = vunpack.c.h.b16 %v1376
      %v1456 = vunpack.c.l.b16 %v1377
      %v1457 = vunpack.c.h.b16 %v1377
      %v1458 = vunpack.c.l.b16 %v1378
      %v1459 = vunpack.c.h.b16 %v1378
      %v1460 = vunpack.c.l.b16 %v1379
      %v1461 = vunpack.c.h.b16 %v1379
      %v1462 = vunpack.c.l.b16 %v1380
      %v1463 = vunpack.c.h.b16 %v1380
      %v1464 = vunpack.c.l.b16 %v1381
      %v1465 = vunpack.c.h.b16 %v1381
      %v1466 = vunpack.c.l.b16 %v1382
      %v1467 = vunpack.c.h.b16 %v1382
      %v1468 = vunpack.c.l.b16 %v1383
      %v1469 = vunpack.c.h.b16 %v1383
      %v1470 = vunpack.c.l.b16 %v1384
      %v1471 = vunpack.c.h.b16 %v1384
      %v1472 = vunpack.c.l.b16 %v1385
      %v1473 = vunpack.c.h.b16 %v1385
      %v1474 = vunpack.c.l.b16 %v1386
      %v1475 = vunpack.c.h.b16 %v1386
      %v1476 = vunpack.c.l.b16 %v1387
      %v1477 = vunpack.c.h.b16 %v1387
      %v1478 = vunpack.c.l.b16 %v1388
      %v1479 = vunpack.c.h.b16 %v1388
      %v1480 = vunpack.c.l.b16 %v1389
      %v1481 = vunpack.c.h.b16 %v1389
      %v1482 = vunpack.c.l.b16 %v1390
      %v1483 = vunpack.c.h.b16 %v1390
      %v1484 = vunpack.c.l.b16 %v1391
      %v1485 = vunpack.c.h.b16 %v1391
      %v1486 = vpack.c.b16 %v1448, %v1446
      %v1487 = vpack.c.b16 %v1449, %v1447
      %v1488 = vpack.c.b16 %v1452, %v1450
      %v1489 = vpack.c.b16 %v1453, %v1451
      %v1490 = vpack.c.b16 %v1456, %v1454
      %v1491 = vpack.c.b16 %v1457, %v1455
      %v1492 = vpack.c.b16 %v1460, %v1458
      %v1493 = vpack.c.b16 %v1461, %v1459
      %v1494 = vpack.c.b16 %v1464, %v1462
      %v1495 = vpack.c.b16 %v1465, %v1463
      %v1496 = vpack.c.b16 %v1468, %v1466
      %v1497 = vpack.c.b16 %v1469, %v1467
      %v1498 = vpack.c.b16 %v1472, %v1470
      %v1499 = vpack.c.b16 %v1473, %v1471
      %v1500 = vpack.c.b16 %v1476, %v1474
      %v1501 = vpack.c.b16 %v1477, %v1475
      %v1502 = vpack.c.b16 %v1480, %v1478
      %v1503 = vpack.c.b16 %v1481, %v1479
      %v1504 = vpack.c.b16 %v1484, %v1482
      %v1505 = vpack.c.b16 %v1485, %v1483
      %v1527 = vsel %vm1080, %v1408, 0
      %v1530 = vsel %vm1080, %v1412, 0
      %v1533 = vsel %vm1080, %v1416, 0
      %v1536 = vsel %vm1080, %v1420, 0
      %v1539 = vsel %vm1080, %v1419, 0
      %1541 = vmatprep.subr.bf16.mxu0 %v1487
      %1542 = vmatpush1.bf16.msra.mxu0 %v1486
      %1543 = vmatprep.subr.bf16.mxu0 %v1489
      %1544 = vmatpush1.bf16.msra.mxu0 %v1488
      %1545 = vmatprep.subr.bf16.mxu0 %v1491
      %1546 = vmatpush1.bf16.msra.mxu0 %v1490
      %1547 = vmatprep.subr.bf16.mxu0 %v1493
      %1548 = vmatpush1.bf16.msra.mxu0 %v1492
      %1549 = vmatprep.subr.bf16.mxu0 %v1495
      %1550 = vmatpush1.bf16.msra.mxu0 %v1494
      %1551 = vmatprep.subr.bf16.mxu0 %v1497
      %1552 = vmatpush1.bf16.msra.mxu0 %v1496
      %1553 = vmatprep.subr.bf16.mxu0 %v1499
      %1554 = vmatpush1.bf16.msra.mxu0 %v1498
      %1555 = vmatprep.subr.bf16.mxu0 %v1501
      %1556 = vmatpush1.bf16.msra.mxu0 %v1500
      %1557 = vmatprep.subr.bf16.mxu0 %v1503
      %1558 = vmatpush1.bf16.msra.mxu0 %v1502
      %1559 = vmatprep.subr.bf16.mxu0 %v1505
      %1560 = vmatpush1.bf16.msra.mxu0 %v1504
      %1561 = vmatprep.subr.bf16.mxu0 0
      %1562 = vmatpush1.bf16.msra.mxu0 0
      %1563 = vmatprep.subr.bf16.mxu0 0
      %1564 = vmatpush1.bf16.msra.mxu0 0
      %1565 = vmatprep.subr.bf16.mxu0 0
      %1566 = vmatpush1.bf16.msra.mxu0 0
      %1567 = vmatprep.subr.bf16.mxu0 0
      %1568 = vmatpush1.bf16.msra.mxu0 0
      %1569 = vmatprep.subr.bf16.mxu0 0
      %1570 = vmatpush1.bf16.msra.mxu0 0
      %1571 = vmatprep.subr.bf16.mxu0 0
      %1572 = vmatpush1.bf16.msra.mxu0 0
      %1573 = vmatprep.mubr.bf16.mxu0 %v1527
      %1574 = vmatmul.mubr.bf16.gmra.mrb[0].mxu0 %v1405
      %v1575 = vpop.f32.mrb[0].mxu0
      %v1576 = vadd.f32 0.0, %v1575
      %v1577 = vpop.f32.mrb[0].mxu0
      %v1578 = vadd.f32 0.0, %v1577
      %v1579 = vpop.f32.mrb[0].mxu0
      %v1580 = vadd.f32 0.0, %v1579
      %v1581 = vpop.f32.mrb[0].mxu0
      %v1582 = vadd.f32 0.0, %v1581
      %1583 = vmatprep.mubr.bf16.mxu0 %v1530
      %1584 = vmatmul.mubr.bf16.gmra.mrb[0].mxu0 %v1410
      %v1585 = vpop.f32.mrb[0].mxu0
      %v1586 = vadd.f32 0.0, %v1585
      %v1587 = vpop.f32.mrb[0].mxu0
      %v1588 = vadd.f32 0.0, %v1587
      %v1589 = vpop.f32.mrb[0].mxu0
      %v1590 = vadd.f32 0.0, %v1589
      %v1591 = vpop.f32.mrb[0].mxu0
      %v1592 = vadd.f32 0.0, %v1591
      %1593 = vmatprep.mubr.bf16.mxu0 %v1533
      %1594 = vmatmul.mubr.bf16.gmra.mrb[0].mxu0 %v1414
      %v1595 = vpop.f32.mrb[0].mxu0
      %v1596 = vadd.f32 0.0, %v1595
      %v1597 = vpop.f32.mrb[0].mxu0
      %v1598 = vadd.f32 0.0, %v1597
      %v1599 = vpop.f32.mrb[0].mxu0
      %v1600 = vadd.f32 0.0, %v1599
      %v1601 = vpop.f32.mrb[0].mxu0
      %v1602 = vadd.f32 0.0, %v1601
      %1603 = vmatprep.mubr.bf16.mxu0 %v1536
      %1604 = vmatmul.mubr.bf16.gmra.mrb[0].mxu0 %v1418
      %v1605 = vpop.f32.mrb[0].mxu0
      %v1606 = vadd.f32 0.0, %v1605
      %v1607 = vpop.f32.mrb[0].mxu0
      %v1608 = vadd.f32 0.0, %v1607
      %v1609 = vpop.f32.mrb[0].mxu0
      %v1610 = vadd.f32 0.0, %v1609
      %v1611 = vpop.f32.mrb[0].mxu0
      %v1612 = vadd.f32 0.0, %v1611
      %1613 = vmatprep.mubr.bf16.mxu0 %v1539
      %1614 = vmatmul.mubr.bf16.gmra.mrb[0].mxu0 %v1417
      %v1615 = vpop.f32.mrb[0].mxu0
      %v1616 = vadd.f32 0.0, %v1615
      %v1617 = vpop.f32.mrb[0].mxu0
      %v1618 = vadd.f32 0.0, %v1617
      %v1619 = vpop.f32.mrb[0].mxu0
      %v1620 = vadd.f32 0.0, %v1619
      %v1621 = vpop.f32.mrb[0].mxu0
      %v1622 = vadd.f32 0.0, %v1621
      %1623 = vdwg.mxu0
      %v1624 = vadd.f32 %v1324, %v1576
      %v1625 = vadd.f32 %v1326, %v1578
      %v1626 = vadd.f32 %v1328, %v1580
      %v1627 = vadd.f32 %v1330, %v1582
      %v1628 = vadd.f32 %v1334, %v1586
      %v1629 = vadd.f32 %v1336, %v1588
      %v1630 = vadd.f32 %v1338, %v1590
      %v1631 = vadd.f32 %v1340, %v1592
      %v1632 = vadd.f32 %v1344, %v1596
      %v1633 = vadd.f32 %v1346, %v1598
      %v1634 = vadd.f32 %v1348, %v1600
      %v1635 = vadd.f32 %v1350, %v1602
      %v1636 = vadd.f32 %v1354, %v1606
      %v1637 = vadd.f32 %v1356, %v1608
      %v1638 = vadd.f32 %v1358, %v1610
      %v1639 = vadd.f32 %v1360, %v1612
      %v1640 = vadd.f32 %v1364, %v1616
      %v1641 = vadd.f32 %v1366, %v1618
      %v1642 = vadd.f32 %v1368, %v1620
      %v1643 = vadd.f32 %v1370, %v1622
      %v1644 = vmax.f32 %v1624, 0.0
      %v1645 = vmax.f32 %v1625, 0.0
      %v1646 = vmax.f32 %v1626, 0.0
      %v1647 = vmax.f32 %v1627, 0.0
      %v1648 = vmax.f32 %v1628, 0.0
      %v1649 = vmax.f32 %v1629, 0.0
      %v1650 = vmax.f32 %v1630, 0.0
      %v1651 = vmax.f32 %v1631, 0.0
      %v1652 = vmax.f32 %v1632, 0.0
      %v1653 = vmax.f32 %v1633, 0.0
      %v1654 = vmax.f32 %v1634, 0.0
      %v1655 = vmax.f32 %v1635, 0.0
      %v1656 = vmax.f32 %v1636, 0.0
      %v1657 = vmax.f32 %v1637, 0.0
      %v1658 = vmax.f32 %v1638, 0.0
      %v1659 = vmax.f32 %v1639, 0.0
      %v1660 = vmax.f32 %v1640, 0.0
      %v1661 = vmax.f32 %v1641, 0.0
      %v1662 = vmax.f32 %v1642, 0.0
      %v1663 = vmax.f32 %v1643, 0.0
      %v1664 = vld [vmem:[%s4] sm:$0xf]
      %v1665 = vld [vmem:[%s4 + $0x4] sm:$0xf]
      %v1666 = vld [vmem:[%s4 + $0x8] sm:$0xf]
      %v1667 = vld [vmem:[%s4 + $0xc] sm:$0xf]
      %v1668 = vld [vmem:[%s4 + $0x10] sm:$0xf]
      %v1669 = vld [vmem:[%s4 + $0x14] sm:$0xf]
      %v1670 = vld [vmem:[%s4 + $0x18] sm:$0xf]
      %v1671 = vld [vmem:[%s4 + $0x1c] sm:$0xf]
      %v1672 = vld [vmem:[%s4 + $0x20] sm:$0xf]
      %v1673 = vld [vmem:[%s4 + $0x24] sm:$0xf]
      %v1674 = vld [vmem:[%s4 + $0x28] sm:$0xf]
      %v1675 = vld [vmem:[%s4 + $0x2c] sm:$0xf]
      %v1676 = vld [vmem:[%s4 + $0x30] sm:$0xf]
      %v1677 = vld [vmem:[%s4 + $0x34] sm:$0xf]
      %v1678 = vld [vmem:[%s4 + $0x38] sm:$0xf]
      %v1679 = vld [vmem:[%s4 + $0x3c] sm:$0xf]
      %v1680 = vld [vmem:[%s4 + $0x40] sm:$0xf]
      %v1681 = vld [vmem:[%s4 + $0x44] sm:$0xf]
      %v1682 = vpack.c.bf16 %v1646, %v1644
      %v1683 = vpack.c.bf16 %v1647, %v1645
      %v1684 = vpack.c.bf16 %v1650, %v1648
      %v1685 = vpack.c.bf16 %v1651, %v1649
      %v1686 = vpack.c.bf16 %v1654, %v1652
      %v1687 = vpack.c.bf16 %v1655, %v1653
      %v1688 = vpack.c.bf16 %v1658, %v1656
      %v1689 = vpack.c.bf16 %v1659, %v1657
      %v1690 = vpack.c.bf16 %v1662, %v1660
      %v1691 = vpack.c.bf16 %v1663, %v1661
      %v1692 = vld [vmem:[%s5] sm:$0xf]
      %v1693 = vld [vmem:[%s5 + $0x4] sm:$0xf]
      %v1694 = vld [vmem:[%s5 + $0x8] sm:$0xf]
      %v1695 = vld [vmem:[%s5 + $0xc] sm:$0xf]
      %v1696 = vld [vmem:[%s5 + $0x10] sm:$0xf]
      %v1697 = vld [vmem:[%s5 + $0x14] sm:$0xf]
      %v1698 = vld [vmem:[%s5 + $0x18] sm:$0xf]
      %v1699 = vld [vmem:[%s5 + $0x1c] sm:$0xf]
      %v1700 = vld [vmem:[%s5 + $0x20] sm:$0xf]
      %v1701 = vld [vmem:[%s5 + $0x24] sm:$0xf]
      %v1702 = vld [vmem:[%s5 + $0x28] sm:$0xf]
      %v1703 = vld [vmem:[%s5 + $0x2c] sm:$0xf]
      %v1704 = vld [vmem:[%s5 + $0x30] sm:$0xf]
      %v1705 = vld [vmem:[%s5 + $0x34] sm:$0xf]
      %v1706 = vld [vmem:[%s5 + $0x38] sm:$0xf]
      %v1707 = vld [vmem:[%s5 + $0x3c] sm:$0xf]
      %v1708 = vld [vmem:[%s5 + $0x40] sm:$0xf]
      %v1709 = vld [vmem:[%s5 + $0x44] sm:$0xf]
      %v1711 = vshrl.u32 %v1682, 16
      %v1713 = vshll.u32 %v1682, 16
      %v1715 = vrot.slane %v1713, 1
      %v1716 = vor.u32 %v1711, %v1715
      %v1718 = vshll.u32 %v1684, 16
      %v1720 = vrot.slane %v1718, 1
      %v1721 = vsel %vm896, %v1716, %v1720
      %v1723 = vshrl.u32 %v1683, 16
      %v1725 = vshll.u32 %v1683, 16
      %v1727 = vrot.slane %v1725, 1
      %v1728 = vor.u32 %v1723, %v1727
      %v1730 = vshll.u32 %v1685, 16
      %v1732 = vrot.slane %v1730, 1
      %v1733 = vsel %vm896, %v1728, %v1732
      %v1734 = vshrl.u32 %v1684, 16
      %v1736 = vor.u32 %v1734, %v1720
      %v1738 = vshll.u32 %v1686, 16
      %v1740 = vrot.slane %v1738, 1
      %v1741 = vsel %vm896, %v1736, %v1740
      %v1742 = vshrl.u32 %v1685, 16
      %v1744 = vor.u32 %v1742, %v1732
      %v1746 = vshll.u32 %v1687, 16
      %v1748 = vrot.slane %v1746, 1
      %v1749 = vsel %vm896, %v1744, %v1748
      %v1750 = vshrl.u32 %v1686, 16
      %v1752 = vor.u32 %v1750, %v1740
      %v1754 = vshll.u32 %v1688, 16
      %v1756 = vrot.slane %v1754, 1
      %v1757 = vsel %vm896, %v1752, %v1756
      %v1758 = vshrl.u32 %v1687, 16
      %v1760 = vor.u32 %v1758, %v1748
      %v1762 = vshll.u32 %v1689, 16
      %v1764 = vrot.slane %v1762, 1
      %v1765 = vsel %vm896, %v1760, %v1764
      %v1766 = vshrl.u32 %v1688, 16
      %v1768 = vor.u32 %v1766, %v1756
      %v1770 = vshll.u32 %v1690, 16
      %v1772 = vrot.slane %v1770, 1
      %v1773 = vsel %vm896, %v1768, %v1772
      %v1774 = vshrl.u32 %v1689, 16
      %v1776 = vor.u32 %v1774, %v1764
      %v1778 = vshll.u32 %v1691, 16
      %v1780 = vrot.slane %v1778, 1
      %v1781 = vsel %vm896, %v1776, %v1780
      %v1782 = vshrl.u32 %v1690, 16
      %v1784 = vor.u32 %v1782, %v1772
      %v1785 = vshrl.u32 %v1691, 16
      %v1787 = vor.u32 %v1785, %v1780
      %v1811 = vunpack.c.l.b16 %v1692
      %v1812 = vunpack.c.l.b16 %v1693
      %v1813 = vunpack.c.l.b16 %v1694
      %v1814 = vunpack.c.l.b16 %v1695
      %v1815 = vunpack.c.l.b16 %v1696
      %v1816 = vunpack.c.l.b16 %v1697
      %v1817 = vunpack.c.l.b16 %v1698
      %v1818 = vunpack.c.l.b16 %v1699
      %v1819 = vunpack.c.l.b16 %v1700
      %v1820 = vunpack.c.l.b16 %v1701
      %v1821 = vunpack.c.l.b16 %v1702
      %v1822 = vunpack.c.l.b16 %v1703
      %v1823 = vunpack.c.l.b16 %v1704
      %v1824 = vunpack.c.l.b16 %v1705
      %v1825 = vunpack.c.l.b16 %v1706
      %v1826 = vunpack.c.l.b16 %v1707
      %v1827 = vunpack.c.l.b16 %v1708
      %v1828 = vunpack.c.l.b16 %v1709
      %v1829 = vpack.c.b16 %v1812, %v1811
      %v1830 = vpack.c.b16 %v1814, %v1813
      %v1831 = vpack.c.b16 %v1816, %v1815
      %v1832 = vpack.c.b16 %v1818, %v1817
      %v1833 = vpack.c.b16 %v1820, %v1819
      %v1834 = vpack.c.b16 %v1822, %v1821
      %v1835 = vpack.c.b16 %v1824, %v1823
      %v1836 = vpack.c.b16 %v1826, %v1825
      %v1837 = vpack.c.b16 %v1828, %v1827
      %vm1847 = vcmask 130048
      %v1849 = vsel %vm1847, %v1733, 0
      %v1852 = vsel %vm1847, %v1749, 0
      %v1855 = vsel %vm1847, %v1765, 0
      %v1858 = vsel %vm1847, %v1781, 0
      %v1861 = vsel %vm1847, %v1787, 0
      %1863 = vmatprep.subr.bf16.mxu0 0
      %1864 = vmatpush1.bf16.msra.mxu0 %v1829
      %1865 = vmatprep.subr.bf16.mxu0 0
      %1866 = vmatpush1.bf16.msra.mxu0 %v1830
      %1867 = vmatprep.subr.bf16.mxu0 0
      %1868 = vmatpush1.bf16.msra.mxu0 %v1831
      %1869 = vmatprep.subr.bf16.mxu0 0
      %1870 = vmatpush1.bf16.msra.mxu0 %v1832
      %1871 = vmatprep.subr.bf16.mxu0 0
      %1872 = vmatpush1.bf16.msra.mxu0 %v1833
      %1873 = vmatprep.subr.bf16.mxu0 0
      %1874 = vmatpush1.bf16.msra.mxu0 %v1834
      %1875 = vmatprep.subr.bf16.mxu0 0
      %1876 = vmatpush1.bf16.msra.mxu0 %v1835
      %1877 = vmatprep.subr.bf16.mxu0 0
      %1878 = vmatpush1.bf16.msra.mxu0 %v1836
      %1879 = vmatprep.subr.bf16.mxu0 0
      %1880 = vmatpush1.bf16.msra.mxu0 %v1837
      %1881 = vmatprep.subr.bf16.mxu0 0
      %1882 = vmatpush1.bf16.msra.mxu0 0
      %1883 = vmatprep.subr.bf16.mxu0 0
      %1884 = vmatpush1.bf16.msra.mxu0 0
      %1885 = vmatprep.subr.bf16.mxu0 0
      %1886 = vmatpush1.bf16.msra.mxu0 0
      %1887 = vmatprep.subr.bf16.mxu0 0
      %1888 = vmatpush1.bf16.msra.mxu0 0
      %1889 = vmatprep.subr.bf16.mxu0 0
      %1890 = vmatpush1.bf16.msra.mxu0 0
      %1891 = vmatprep.subr.bf16.mxu0 0
      %1892 = vmatpush1.bf16.msra.mxu0 0
      %1893 = vmatprep.subr.bf16.mxu0 0
      %1894 = vmatpush1.bf16.msra.mxu0 0
      %1895 = vmatprep.mubr.bf16.mxu0 %v1849
      %1896 = vmatmul.mubr.bf16.gmra.mrb[0].mxu0 %v1721
      %v1897 = vpop.f32.mrb[0].mxu0
      %v1898 = vadd.f32 0.0, %v1897
      %v1899 = vpop.f32.mrb[0].mxu0
      %v1900 = vpop.f32.mrb[0].mxu0
      %v1901 = vadd.f32 0.0, %v1900
      %v1902 = vpop.f32.mrb[0].mxu0
      %1903 = vmatprep.mubr.bf16.mxu0 %v1852
      %1904 = vmatmul.mubr.bf16.gmra.mrb[0].mxu0 %v1741
      %v1905 = vpop.f32.mrb[0].mxu0
      %v1906 = vadd.f32 0.0, %v1905
      %v1907 = vpop.f32.mrb[0].mxu0
      %v1908 = vpop.f32.mrb[0].mxu0
      %v1909 = vadd.f32 0.0, %v1908
      %v1910 = vpop.f32.mrb[0].mxu0
      %1911 = vmatprep.mubr.bf16.mxu0 %v1855
      %1912 = vmatmul.mubr.bf16.gmra.mrb[0].mxu0 %v1757
      %v1913 = vpop.f32.mrb[0].mxu0
      %v1914 = vadd.f32 0.0, %v1913
      %v1915 = vpop.f32.mrb[0].mxu0
      %v1916 = vpop.f32.mrb[0].mxu0
      %v1917 = vadd.f32 0.0, %v1916
      %v1918 = vpop.f32.mrb[0].mxu0
      %1919 = vmatprep.mubr.bf16.mxu0 %v1858
      %1920 = vmatmul.mubr.bf16.gmra.mrb[0].mxu0 %v1773
      %v1921 = vpop.f32.mrb[0].mxu0
      %v1922 = vadd.f32 0.0, %v1921
      %v1923 = vpop.f32.mrb[0].mxu0
      %v1924 = vpop.f32.mrb[0].mxu0
      %v1925 = vadd.f32 0.0, %v1924
      %v1926 = vpop.f32.mrb[0].mxu0
      %1927 = vmatprep.mubr.bf16.mxu0 %v1861
      %1928 = vmatmul.mubr.bf16.gmra.mrb[0].mxu0 %v1784
      %v1929 = vpop.f32.mrb[0].mxu0
      %v1930 = vadd.f32 0.0, %v1929
      %v1931 = vpop.f32.mrb[0].mxu0
      %v1932 = vpop.f32.mrb[0].mxu0
      %v1933 = vadd.f32 0.0, %v1932
      %v1934 = vpop.f32.mrb[0].mxu0
      %1935 = vdwg.mxu0
      %v1954 = vunpack.c.l.b16 %v1664
      %v1955 = vunpack.c.l.b16 %v1665
      %v1956 = vunpack.c.l.b16 %v1666
      %v1957 = vunpack.c.l.b16 %v1667
      %v1958 = vunpack.c.l.b16 %v1668
      %v1959 = vunpack.c.l.b16 %v1669
      %v1960 = vunpack.c.l.b16 %v1670
      %v1961 = vunpack.c.l.b16 %v1671
      %v1962 = vunpack.c.l.b16 %v1672
      %v1963 = vunpack.c.l.b16 %v1673
      %v1964 = vunpack.c.l.b16 %v1674
      %v1965 = vunpack.c.l.b16 %v1675
      %v1966 = vunpack.c.l.b16 %v1676
      %v1967 = vunpack.c.l.b16 %v1677
      %v1968 = vunpack.c.l.b16 %v1678
      %v1969 = vunpack.c.l.b16 %v1679
      %v1970 = vunpack.c.l.b16 %v1680
      %v1971 = vunpack.c.l.b16 %v1681
      %v1972 = vpack.c.b16 %v1955, %v1954
      %v1973 = vpack.c.b16 %v1957, %v1956
      %v1974 = vpack.c.b16 %v1959, %v1958
      %v1975 = vpack.c.b16 %v1961, %v1960
      %v1976 = vpack.c.b16 %v1963, %v1962
      %v1977 = vpack.c.b16 %v1965, %v1964
      %v1978 = vpack.c.b16 %v1967, %v1966
      %v1979 = vpack.c.b16 %v1969, %v1968
      %v1980 = vpack.c.b16 %v1971, %v1970
      %v1990 = vsel %vm1847, %v1683, 0
      %v1992 = vsel %vm1847, %v1685, 0
      %v1994 = vsel %vm1847, %v1687, 0
      %v1996 = vsel %vm1847, %v1689, 0
      %v1998 = vsel %vm1847, %v1691, 0
      %2000 = vmatprep.subr.bf16.mxu0 0
      %2001 = vmatpush1.bf16.msra.mxu0 %v1972
      %2002 = vmatprep.subr.bf16.mxu0 0
      %2003 = vmatpush1.bf16.msra.mxu0 %v1973
      %2004 = vmatprep.subr.bf16.mxu0 0
      %2005 = vmatpush1.bf16.msra.mxu0 %v1974
      %2006 = vmatprep.subr.bf16.mxu0 0
      %2007 = vmatpush1.bf16.msra.mxu0 %v1975
      %2008 = vmatprep.subr.bf16.mxu0 0
      %2009 = vmatpush1.bf16.msra.mxu0 %v1976
      %2010 = vmatprep.subr.bf16.mxu0 0
      %2011 = vmatpush1.bf16.msra.mxu0 %v1977
      %2012 = vmatprep.subr.bf16.mxu0 0
      %2013 = vmatpush1.bf16.msra.mxu0 %v1978
      %2014 = vmatprep.subr.bf16.mxu0 0
      %2015 = vmatpush1.bf16.msra.mxu0 %v1979
      %2016 = vmatprep.subr.bf16.mxu0 0
      %2017 = vmatpush1.bf16.msra.mxu0 %v1980
      %2018 = vmatprep.subr.bf16.mxu0 0
      %2019 = vmatpush1.bf16.msra.mxu0 0
      %2020 = vmatprep.subr.bf16.mxu0 0
      %2021 = vmatpush1.bf16.msra.mxu0 0
      %2022 = vmatprep.subr.bf16.mxu0 0
      %2023 = vmatpush1.bf16.msra.mxu0 0
      %2024 = vmatprep.subr.bf16.mxu0 0
      %2025 = vmatpush1.bf16.msra.mxu0 0
      %2026 = vmatprep.subr.bf16.mxu0 0
      %2027 = vmatpush1.bf16.msra.mxu0 0
      %2028 = vmatprep.subr.bf16.mxu0 0
      %2029 = vmatpush1.bf16.msra.mxu0 0
      %2030 = vmatprep.subr.bf16.mxu0 0
      %2031 = vmatpush1.bf16.msra.mxu0 0
      %2032 = vmatprep.mubr.bf16.mxu0 %v1990
      %2033 = vmatmul.mubr.bf16.gmra.mrb[0].mxu0 %v1682
      %v2034 = vpop.f32.mrb[0].mxu0
      %v2035 = vadd.f32 %v1898, %v2034
      %v2036 = vpop.f32.mrb[0].mxu0
      %v2037 = vpop.f32.mrb[0].mxu0
      %v2038 = vadd.f32 %v1901, %v2037
      %v2039 = vpop.f32.mrb[0].mxu0
      %2040 = vmatprep.mubr.bf16.mxu0 %v1992
      %2041 = vmatmul.mubr.bf16.gmra.mrb[0].mxu0 %v1684
      %v2042 = vpop.f32.mrb[0].mxu0
      %v2043 = vadd.f32 %v1906, %v2042
      %v2044 = vpop.f32.mrb[0].mxu0
      %v2045 = vpop.f32.mrb[0].mxu0
      %v2046 = vadd.f32 %v1909, %v2045
      %v2047 = vpop.f32.mrb[0].mxu0
      %2048 = vmatprep.mubr.bf16.mxu0 %v1994
      %2049 = vmatmul.mubr.bf16.gmra.mrb[0].mxu0 %v1686
      %v2050 = vpop.f32.mrb[0].mxu0
      %v2051 = vadd.f32 %v1914, %v2050
      %v2052 = vpop.f32.mrb[0].mxu0
      %v2053 = vpop.f32.mrb[0].mxu0
      %v2054 = vadd.f32 %v1917, %v2053
      %v2055 = vpop.f32.mrb[0].mxu0
      %2056 = vmatprep.mubr.bf16.mxu0 %v1996
      %2057 = vmatmul.mubr.bf16.gmra.mrb[0].mxu0 %v1688
      %v2058 = vpop.f32.mrb[0].mxu0
      %v2059 = vadd.f32 %v1922, %v2058
      %v2060 = vpop.f32.mrb[0].mxu0
      %v2061 = vpop.f32.mrb[0].mxu0
      %v2062 = vadd.f32 %v1925, %v2061
      %v2063 = vpop.f32.mrb[0].mxu0
      %2064 = vmatprep.mubr.bf16.mxu0 %v1998
      %2065 = vmatmul.mubr.bf16.gmra.mrb[0].mxu0 %v1690
      %v2066 = vpop.f32.mrb[0].mxu0
      %v2067 = vadd.f32 %v1930, %v2066
      %v2068 = vpop.f32.mrb[0].mxu0
      %v2069 = vpop.f32.mrb[0].mxu0
      %v2070 = vadd.f32 %v1933, %v2069
      %v2071 = vpop.f32.mrb[0].mxu0
      %2072 = vdwg.mxu0
      %v2073 = vld [vmem:[%s6] sm:$0xf]
      %v2074 = vld [vmem:[%s6 + $0x4] sm:$0xf]
      %v2075 = vld [vmem:[%s6 + $0x8] sm:$0xf]
      %v2076 = vld [vmem:[%s6 + $0xc] sm:$0xf]
      %v2077 = vld [vmem:[%s6 + $0x10] sm:$0xf]
      %v2078 = vld [vmem:[%s6 + $0x14] sm:$0xf]
      %v2079 = vld [vmem:[%s6 + $0x18] sm:$0xf]
      %v2080 = vld [vmem:[%s6 + $0x1c] sm:$0xf]
      %v2081 = vld [vmem:[%s6 + $0x20] sm:$0xf]
      %v2082 = vld [vmem:[%s6 + $0x24] sm:$0xf]
      %v2083 = vld [vmem:[%s6 + $0x28] sm:$0xf]
      %v2084 = vld [vmem:[%s6 + $0x2c] sm:$0xf]
      %v2085 = vld [vmem:[%s6 + $0x30] sm:$0xf]
      %v2086 = vld [vmem:[%s6 + $0x34] sm:$0xf]
      %v2087 = vld [vmem:[%s6 + $0x38] sm:$0xf]
      %v2088 = vld [vmem:[%s6 + $0x3c] sm:$0xf]
      %v2089 = vld [vmem:[%s6 + $0x40] sm:$0xf]
      %v2090 = vld [vmem:[%s6 + $0x44] sm:$0xf]
      %v2101 = vrot.slane %v1682, 1
      %v2102 = vrot.slane %v1684, 1
      %v2103 = vsel %vm1402, %v2101, %v2102
      %v2104 = vrot.slane %v1683, 1
      %v2105 = vrot.slane %v1685, 1
      %v2106 = vsel %vm1402, %v2104, %v2105
      %v2107 = vrot.slane %v1686, 1
      %v2108 = vsel %vm1402, %v2102, %v2107
      %v2109 = vrot.slane %v1687, 1
      %v2110 = vsel %vm1402, %v2105, %v2109
      %v2111 = vrot.slane %v1688, 1
      %v2112 = vsel %vm1402, %v2107, %v2111
      %v2113 = vrot.slane %v1689, 1
      %v2114 = vsel %vm1402, %v2109, %v2113
      %v2115 = vrot.slane %v1690, 1
      %v2116 = vsel %vm1402, %v2111, %v2115
      %v2117 = vrot.slane %v1691, 1
      %v2118 = vsel %vm1402, %v2113, %v2117
      %v2142 = vunpack.c.l.b16 %v2073
      %v2143 = vunpack.c.l.b16 %v2074
      %v2144 = vunpack.c.l.b16 %v2075
      %v2145 = vunpack.c.l.b16 %v2076
      %v2146 = vunpack.c.l.b16 %v2077
      %v2147 = vunpack.c.l.b16 %v2078
      %v2148 = vunpack.c.l.b16 %v2079
      %v2149 = vunpack.c.l.b16 %v2080
      %v2150 = vunpack.c.l.b16 %v2081
      %v2151 = vunpack.c.l.b16 %v2082
      %v2152 = vunpack.c.l.b16 %v2083
      %v2153 = vunpack.c.l.b16 %v2084
      %v2154 = vunpack.c.l.b16 %v2085
      %v2155 = vunpack.c.l.b16 %v2086
      %v2156 = vunpack.c.l.b16 %v2087
      %v2157 = vunpack.c.l.b16 %v2088
      %v2158 = vunpack.c.l.b16 %v2089
      %v2159 = vunpack.c.l.b16 %v2090
      %v2160 = vpack.c.b16 %v2143, %v2142
      %v2161 = vpack.c.b16 %v2145, %v2144
      %v2162 = vpack.c.b16 %v2147, %v2146
      %v2163 = vpack.c.b16 %v2149, %v2148
      %v2164 = vpack.c.b16 %v2151, %v2150
      %v2165 = vpack.c.b16 %v2153, %v2152
      %v2166 = vpack.c.b16 %v2155, %v2154
      %v2167 = vpack.c.b16 %v2157, %v2156
      %v2168 = vpack.c.b16 %v2159, %v2158
      %v2179 = vsel %vm1847, %v2106, 0
      %v2182 = vsel %vm1847, %v2110, 0
      %v2185 = vsel %vm1847, %v2114, 0
      %v2188 = vsel %vm1847, %v2118, 0
      %v2191 = vsel %vm1847, %v2117, 0
      %2193 = vmatprep.subr.bf16.mxu0 0
      %2194 = vmatpush1.bf16.msra.mxu0 %v2160
      %2195 = vmatprep.subr.bf16.mxu0 0
      %2196 = vmatpush1.bf16.msra.mxu0 %v2161
      %2197 = vmatprep.subr.bf16.mxu0 0
      %2198 = vmatpush1.bf16.msra.mxu0 %v2162
      %2199 = vmatprep.subr.bf16.mxu0 0
      %2200 = vmatpush1.bf16.msra.mxu0 %v2163
      %2201 = vmatprep.subr.bf16.mxu0 0
      %2202 = vmatpush1.bf16.msra.mxu0 %v2164
      %2203 = vmatprep.subr.bf16.mxu0 0
      %2204 = vmatpush1.bf16.msra.mxu0 %v2165
      %2205 = vmatprep.subr.bf16.mxu0 0
      %2206 = vmatpush1.bf16.msra.mxu0 %v2166
      %2207 = vmatprep.subr.bf16.mxu0 0
      %2208 = vmatpush1.bf16.msra.mxu0 %v2167
      %2209 = vmatprep.subr.bf16.mxu0 0
      %2210 = vmatpush1.bf16.msra.mxu0 %v2168
      %2211 = vmatprep.subr.bf16.mxu0 0
      %2212 = vmatpush1.bf16.msra.mxu0 0
      %2213 = vmatprep.subr.bf16.mxu0 0
      %2214 = vmatpush1.bf16.msra.mxu0 0
      %2215 = vmatprep.subr.bf16.mxu0 0
      %2216 = vmatpush1.bf16.msra.mxu0 0
      %2217 = vmatprep.subr.bf16.mxu0 0
      %2218 = vmatpush1.bf16.msra.mxu0 0
      %2219 = vmatprep.subr.bf16.mxu0 0
      %2220 = vmatpush1.bf16.msra.mxu0 0
      %2221 = vmatprep.subr.bf16.mxu0 0
      %2222 = vmatpush1.bf16.msra.mxu0 0
      %2223 = vmatprep.subr.bf16.mxu0 0
      %2224 = vmatpush1.bf16.msra.mxu0 0
      %2225 = vmatprep.mubr.bf16.mxu0 %v2179
      %2226 = vmatmul.mubr.bf16.gmra.mrb[0].mxu0 %v2103
      %v2227 = vpop.f32.mrb[0].mxu0
      %v2228 = vadd.f32 0.0, %v2227
      %v2229 = vpop.f32.mrb[0].mxu0
      %v2230 = vpop.f32.mrb[0].mxu0
      %v2231 = vadd.f32 0.0, %v2230
      %v2232 = vpop.f32.mrb[0].mxu0
      %2233 = vmatprep.mubr.bf16.mxu0 %v2182
      %2234 = vmatmul.mubr.bf16.gmra.mrb[0].mxu0 %v2108
      %v2235 = vpop.f32.mrb[0].mxu0
      %v2236 = vadd.f32 0.0, %v2235
      %v2237 = vpop.f32.mrb[0].mxu0
      %v2238 = vpop.f32.mrb[0].mxu0
      %v2239 = vadd.f32 0.0, %v2238
      %v2240 = vpop.f32.mrb[0].mxu0
      %2241 = vmatprep.mubr.bf16.mxu0 %v2185
      %2242 = vmatmul.mubr.bf16.gmra.mrb[0].mxu0 %v2112
      %v2243 = vpop.f32.mrb[0].mxu0
      %v2244 = vadd.f32 0.0, %v2243
      %v2245 = vpop.f32.mrb[0].mxu0
      %v2246 = vpop.f32.mrb[0].mxu0
      %v2247 = vadd.f32 0.0, %v2246
      %v2248 = vpop.f32.mrb[0].mxu0
      %2249 = vmatprep.mubr.bf16.mxu0 %v2188
      %2250 = vmatmul.mubr.bf16.gmra.mrb[0].mxu0 %v2116
      %v2251 = vpop.f32.mrb[0].mxu0
      %v2252 = vadd.f32 0.0, %v2251
      %v2253 = vpop.f32.mrb[0].mxu0
      %v2254 = vpop.f32.mrb[0].mxu0
      %v2255 = vadd.f32 0.0, %v2254
      %v2256 = vpop.f32.mrb[0].mxu0
      %2257 = vmatprep.mubr.bf16.mxu0 %v2191
      %2258 = vmatmul.mubr.bf16.gmra.mrb[0].mxu0 %v2115
      %v2259 = vpop.f32.mrb[0].mxu0
      %v2260 = vadd.f32 0.0, %v2259
      %v2261 = vpop.f32.mrb[0].mxu0
      %v2262 = vpop.f32.mrb[0].mxu0
      %v2263 = vadd.f32 0.0, %v2262
      %v2264 = vpop.f32.mrb[0].mxu0
      %2265 = vdwg.mxu0
      %v2266 = vadd.f32 %v2035, %v2228
      %v2267 = vadd.f32 %v2038, %v2231
      %v2268 = vadd.f32 %v2043, %v2236
      %v2269 = vadd.f32 %v2046, %v2239
      %v2270 = vadd.f32 %v2051, %v2244
      %v2271 = vadd.f32 %v2054, %v2247
      %v2272 = vadd.f32 %v2059, %v2252
      %v2273 = vadd.f32 %v2062, %v2255
      %v2274 = vadd.f32 %v2067, %v2260
      %v2275 = vadd.f32 %v2070, %v2263
      %v2276 = vmax.f32 %v2266, 0.0
      %v2277 = vmax.f32 %v2267, 0.0
      %v2278 = vmax.f32 %v2268, 0.0
      %v2279 = vmax.f32 %v2269, 0.0
      %v2280 = vmax.f32 %v2270, 0.0
      %v2281 = vmax.f32 %v2271, 0.0
      %v2282 = vmax.f32 %v2272, 0.0
      %v2283 = vmax.f32 %v2273, 0.0
      %v2284 = vmax.f32 %v2274, 0.0
      %v2285 = vmax.f32 %v2275, 0.0
      %v2286 = vld [vmem:[%s19] sm:$0xf]
      %v2287 = vld [vmem:[%s19 + $0x4] sm:$0xf]
      %v2288 = vld [vmem:[%s19 + $0x8] sm:$0xf]
      %v2289 = vld [vmem:[%s19 + $0xc] sm:$0xf]
      %v2290 = vld [vmem:[%s20] sm:$0xf]
      %v2291 = vld [vmem:[%s20 + $0x4] sm:$0xf]
      %v2292 = vld [vmem:[%s20 + $0x8] sm:$0xf]
      %v2293 = vld [vmem:[%s20 + $0xc] sm:$0xf]
      %v2294 = vld [vmem:[%s21] sm:$0xf]
      %v2295 = vld [vmem:[%s21 + $0x4] sm:$0xf]
      %v2296 = vld [vmem:[%s21 + $0x8] sm:$0xf]
      %v2297 = vld [vmem:[%s21 + $0xc] sm:$0xf]
      %v2298 = vld [vmem:[%s21 + $0x10] sm:$0xf]
      %v2299 = vld [vmem:[%s21 + $0x14] sm:$0xf]
      %v2300 = vld [vmem:[%s21 + $0x18] sm:$0xf]
      %v2301 = vld [vmem:[%s21 + $0x1c] sm:$0xf]
      %v2302 = vld [vmem:[%s21 + $0x20] sm:$0xf]
      %v2303 = vld [vmem:[%s21 + $0x24] sm:$0xf]
      %v2304 = vld [vmem:[%s21 + $0x28] sm:$0xf]
      %v2305 = vld [vmem:[%s21 + $0x2c] sm:$0xf]
      %v2306 = vld [vmem:[%s21 + $0x30] sm:$0xf]
      %v2307 = vld [vmem:[%s21 + $0x34] sm:$0xf]
      %v2308 = vld [vmem:[%s21 + $0x38] sm:$0xf]
      %v2309 = vld [vmem:[%s21 + $0x3c] sm:$0xf]
      %v2310 = vld [vmem:[%s22] sm:$0xf]
      %v2311 = vld [vmem:[%s22 + $0x4] sm:$0xf]
      %v2312 = vld [vmem:[%s22 + $0x8] sm:$0xf]
      %v2313 = vld [vmem:[%s22 + $0xc] sm:$0xf]
      %v2314 = vld [vmem:[%s22 + $0x10] sm:$0xf]
      %v2315 = vld [vmem:[%s22 + $0x14] sm:$0xf]
      %v2316 = vld [vmem:[%s22 + $0x18] sm:$0xf]
      %v2317 = vld [vmem:[%s22 + $0x1c] sm:$0xf]
      %v2318 = vld [vmem:[%s22 + $0x20] sm:$0xf]
      %v2319 = vld [vmem:[%s22 + $0x24] sm:$0xf]
      %v2320 = vld [vmem:[%s22 + $0x28] sm:$0xf]
      %v2321 = vld [vmem:[%s22 + $0x2c] sm:$0xf]
      %v2322 = vld [vmem:[%s22 + $0x30] sm:$0xf]
      %v2323 = vld [vmem:[%s22 + $0x34] sm:$0xf]
      %v2324 = vld [vmem:[%s22 + $0x38] sm:$0xf]
      %v2325 = vld [vmem:[%s22 + $0x3c] sm:$0xf]
      %v2326 = vpack.c.bf16 %v2277, %v2276
      %v2327 = vpack.c.bf16 %v2279, %v2278
      %v2328 = vpack.c.bf16 %v2281, %v2280
      %v2329 = vpack.c.bf16 %v2283, %v2282
      %v2330 = vpack.c.bf16 %v2285, %v2284
      %v2335 = vunpack.c.l.b16 %v2286
      %v2336 = vunpack.c.l.b16 %v2287
      %v2337 = vunpack.c.l.b16 %v2288
      %v2338 = vunpack.c.l.b16 %v2289
      %v2339 = vpack.c.b16 %v2336, %v2335
      %v2340 = vpack.c.b16 %v2338, %v2337
      %vm2341 = vcmask 621568
      %v2343 = vsel %vm2341, %v2339, 0
      %v2346 = vsel %vm2341, %v2340, 0
      %vm2348 = vcmask 1045504
      %v2350 = vsel %vm2348, %v2330, 0
      %2352 = vmatprep.subr.bf16.mxu0 0
      %2353 = vmatpush1.bf16.msra.mxu0 %v2326
      %2354 = vmatprep.subr.bf16.mxu0 0
      %2355 = vmatpush1.bf16.msra.mxu0 %v2327
      %2356 = vmatprep.subr.bf16.mxu0 0
      %2357 = vmatpush1.bf16.msra.mxu0 %v2328
      %2358 = vmatprep.subr.bf16.mxu0 0
      %2359 = vmatpush1.bf16.msra.mxu0 %v2329
      %2360 = vmatprep.subr.bf16.mxu0 0
      %2361 = vmatpush1.bf16.msra.mxu0 %v2350
      %2362 = vmatprep.subr.bf16.mxu0 0
      %2363 = vmatpush1.bf16.msra.mxu0 0
      %2364 = vmatprep.subr.bf16.mxu0 0
      %2365 = vmatpush1.bf16.msra.mxu0 0
      %2366 = vmatprep.subr.bf16.mxu0 0
      %2367 = vmatpush1.bf16.msra.mxu0 0
      %2368 = vmatprep.subr.bf16.mxu0 0
      %2369 = vmatpush1.bf16.msra.mxu0 0
      %2370 = vmatprep.subr.bf16.mxu0 0
      %2371 = vmatpush1.bf16.msra.mxu0 0
      %2372 = vmatprep.subr.bf16.mxu0 0
      %2373 = vmatpush1.bf16.msra.mxu0 0
      %2374 = vmatprep.subr.bf16.mxu0 0
      %2375 = vmatpush1.bf16.msra.mxu0 0
      %2376 = vmatprep.subr.bf16.mxu0 0
      %2377 = vmatpush1.bf16.msra.mxu0 0
      %2378 = vmatprep.subr.bf16.mxu0 0
      %2379 = vmatpush1.bf16.msra.mxu0 0
      %2380 = vmatprep.subr.bf16.mxu0 0
      %2381 = vmatpush1.bf16.msra.mxu0 0
      %2382 = vmatprep.subr.bf16.mxu0 0
      %2383 = vmatpush1.bf16.msra.mxu0 0
      %2384 = vmatprep.mubr.bf16.mxu0 0
      %2385 = vmatmul.mubr.bf16.gmra.mrb[0].mxu0 %v2343
      %v2386 = vpop.f32.mrb[0].mxu0
      %v2387 = vadd.f32 0.0, %v2386
      %v2388 = vpop.f32.mrb[0].mxu0
      %v2389 = vpop.f32.mrb[0].mxu0
      %v2390 = vadd.f32 0.0, %v2389
      %v2391 = vpop.f32.mrb[0].mxu0
      %2392 = vmatprep.mubr.bf16.mxu0 0
      %2393 = vmatmul.mubr.bf16.gmra.mrb[0].mxu0 %v2346
      %v2394 = vpop.f32.mrb[0].mxu0
      %v2395 = vadd.f32 0.0, %v2394
      %v2396 = vpop.f32.mrb[0].mxu0
      %v2397 = vpop.f32.mrb[0].mxu0
      %v2398 = vadd.f32 0.0, %v2397
      %v2399 = vpop.f32.mrb[0].mxu0
      %2400 = vdwg.mxu0
      %v2405 = vunpack.c.l.b16 %v2290
      %v2406 = vunpack.c.l.b16 %v2291
      %v2407 = vunpack.c.l.b16 %v2292
      %v2408 = vunpack.c.l.b16 %v2293
      %v2409 = vpack.c.b16 %v2406, %v2405
      %v2410 = vpack.c.b16 %v2408, %v2407
      %v2412 = vsel %vm2341, %v2409, 0
      %v2415 = vsel %vm2341, %v2410, 0
      %2417 = vmatprep.subr.bf16.mxu0 0
      %2418 = vmatpush1.bf16.msra.mxu0 %v2326
      %2419 = vmatprep.subr.bf16.mxu0 0
      %2420 = vmatpush1.bf16.msra.mxu0 %v2327
      %2421 = vmatprep.subr.bf16.mxu0 0
      %2422 = vmatpush1.bf16.msra.mxu0 %v2328
      %2423 = vmatprep.subr.bf16.mxu0 0
      %2424 = vmatpush1.bf16.msra.mxu0 %v2329
      %2425 = vmatprep.subr.bf16.mxu0 0
      %2426 = vmatpush1.bf16.msra.mxu0 %v2350
      %2427 = vmatprep.subr.bf16.mxu0 0
      %2428 = vmatpush1.bf16.msra.mxu0 0
      %2429 = vmatprep.subr.bf16.mxu0 0
      %2430 = vmatpush1.bf16.msra.mxu0 0
      %2431 = vmatprep.subr.bf16.mxu0 0
      %2432 = vmatpush1.bf16.msra.mxu0 0
      %2433 = vmatprep.subr.bf16.mxu0 0
      %2434 = vmatpush1.bf16.msra.mxu0 0
      %2435 = vmatprep.subr.bf16.mxu0 0
      %2436 = vmatpush1.bf16.msra.mxu0 0
      %2437 = vmatprep.subr.bf16.mxu0 0
      %2438 = vmatpush1.bf16.msra.mxu0 0
      %2439 = vmatprep.subr.bf16.mxu0 0
      %2440 = vmatpush1.bf16.msra.mxu0 0
      %2441 = vmatprep.subr.bf16.mxu0 0
      %2442 = vmatpush1.bf16.msra.mxu0 0
      %2443 = vmatprep.subr.bf16.mxu0 0
      %2444 = vmatpush1.bf16.msra.mxu0 0
      %2445 = vmatprep.subr.bf16.mxu0 0
      %2446 = vmatpush1.bf16.msra.mxu0 0
      %2447 = vmatprep.subr.bf16.mxu0 0
      %2448 = vmatpush1.bf16.msra.mxu0 0
      %2449 = vmatprep.mubr.bf16.mxu0 0
      %2450 = vmatmul.mubr.bf16.gmra.mrb[0].mxu0 %v2412
      %v2451 = vpop.f32.mrb[0].mxu0
      %v2452 = vadd.f32 0.0, %v2451
      %v2453 = vpop.f32.mrb[0].mxu0
      %v2454 = vpop.f32.mrb[0].mxu0
      %v2455 = vadd.f32 0.0, %v2454
      %v2456 = vpop.f32.mrb[0].mxu0
      %2457 = vmatprep.mubr.bf16.mxu0 0
      %2458 = vmatmul.mubr.bf16.gmra.mrb[0].mxu0 %v2415
      %v2459 = vpop.f32.mrb[0].mxu0
      %v2460 = vadd.f32 0.0, %v2459
      %v2461 = vpop.f32.mrb[0].mxu0
      %v2462 = vpop.f32.mrb[0].mxu0
      %v2463 = vadd.f32 0.0, %v2462
      %v2464 = vpop.f32.mrb[0].mxu0
      %2465 = vdwg.mxu0
      %v2466 = vmax.f32 %v2387, %v2452
      %v2467 = vmax.f32 %v2390, %v2455
      %v2468 = vmax.f32 %v2395, %v2460
      %v2469 = vmax.f32 %v2398, %v2463
      %v2470 = vpack.c.bf16 %v2467, %v2466
      %v2471 = vpack.c.bf16 %v2469, %v2468
      %v2488 = vunpack.c.l.b16 %v2294
      %v2489 = vunpack.c.l.b16 %v2295
      %v2490 = vunpack.c.l.b16 %v2296
      %v2491 = vunpack.c.l.b16 %v2297
      %v2492 = vunpack.c.l.b16 %v2298
      %v2493 = vunpack.c.l.b16 %v2299
      %v2494 = vunpack.c.l.b16 %v2300
      %v2495 = vunpack.c.l.b16 %v2301
      %v2496 = vunpack.c.l.b16 %v2302
      %v2497 = vunpack.c.l.b16 %v2303
      %v2498 = vunpack.c.l.b16 %v2304
      %v2499 = vunpack.c.l.b16 %v2305
      %v2500 = vunpack.c.l.b16 %v2306
      %v2501 = vunpack.c.l.b16 %v2307
      %v2502 = vunpack.c.l.b16 %v2308
      %v2503 = vunpack.c.l.b16 %v2309
      %v2504 = vpack.c.b16 %v2489, %v2488
      %v2505 = vpack.c.b16 %v2491, %v2490
      %v2506 = vpack.c.b16 %v2493, %v2492
      %v2507 = vpack.c.b16 %v2495, %v2494
      %v2508 = vpack.c.b16 %v2497, %v2496
      %v2509 = vpack.c.b16 %v2499, %v2498
      %v2510 = vpack.c.b16 %v2501, %v2500
      %v2511 = vpack.c.b16 %v2503, %v2502
      %2520 = vmatprep.subr.bf16.mxu0 0
      %2521 = vmatpush1.bf16.msra.mxu0 %v2504
      %2522 = vmatprep.subr.bf16.mxu0 0
      %2523 = vmatpush1.bf16.msra.mxu0 %v2505
      %2524 = vmatprep.subr.bf16.mxu0 0
      %2525 = vmatpush1.bf16.msra.mxu0 %v2506
      %2526 = vmatprep.subr.bf16.mxu0 0
      %2527 = vmatpush1.bf16.msra.mxu0 %v2507
      %2528 = vmatprep.subr.bf16.mxu0 0
      %2529 = vmatpush1.bf16.msra.mxu0 %v2508
      %2530 = vmatprep.subr.bf16.mxu0 0
      %2531 = vmatpush1.bf16.msra.mxu0 %v2509
      %2532 = vmatprep.subr.bf16.mxu0 0
      %2533 = vmatpush1.bf16.msra.mxu0 %v2510
      %2534 = vmatprep.subr.bf16.mxu0 0
      %2535 = vmatpush1.bf16.msra.mxu0 %v2511
      %2536 = vmatprep.subr.bf16.mxu0 0
      %2537 = vmatpush1.bf16.msra.mxu0 0
      %2538 = vmatprep.subr.bf16.mxu0 0
      %2539 = vmatpush1.bf16.msra.mxu0 0
      %2540 = vmatprep.subr.bf16.mxu0 0
      %2541 = vmatpush1.bf16.msra.mxu0 0
      %2542 = vmatprep.subr.bf16.mxu0 0
      %2543 = vmatpush1.bf16.msra.mxu0 0
      %2544 = vmatprep.subr.bf16.mxu0 0
      %2545 = vmatpush1.bf16.msra.mxu0 0
      %2546 = vmatprep.subr.bf16.mxu0 0
      %2547 = vmatpush1.bf16.msra.mxu0 0
      %2548 = vmatprep.subr.bf16.mxu0 0
      %2549 = vmatpush1.bf16.msra.mxu0 0
      %2550 = vmatprep.subr.bf16.mxu0 0
      %2551 = vmatpush1.bf16.msra.mxu0 0
      %2552 = vmatprep.mubr.bf16.mxu0 0
      %2553 = vmatmul.mubr.bf16.gmra.mrb[0].mxu0 %v2470
      %v2554 = vpop.f32.mrb[0].mxu0
      %v2555 = vadd.f32 0.0, %v2554
      %v2556 = vpop.f32.mrb[0].mxu0
      %v2557 = vpop.f32.mrb[0].mxu0
      %v2558 = vadd.f32 0.0, %v2557
      %v2559 = vpop.f32.mrb[0].mxu0
      %2560 = vmatprep.mubr.bf16.mxu0 0
      %2561 = vmatmul.mubr.bf16.gmra.mrb[0].mxu0 %v2471
      %v2562 = vpop.f32.mrb[0].mxu0
      %v2563 = vadd.f32 0.0, %v2562
      %v2564 = vpop.f32.mrb[0].mxu0
      %v2565 = vpop.f32.mrb[0].mxu0
      %v2566 = vadd.f32 0.0, %v2565
      %v2567 = vpop.f32.mrb[0].mxu0
      %2568 = vdwg.mxu0
      %v2585 = vunpack.c.l.b16 %v2310
      %v2586 = vunpack.c.l.b16 %v2311
      %v2587 = vunpack.c.l.b16 %v2312
      %v2588 = vunpack.c.l.b16 %v2313
      %v2589 = vunpack.c.l.b16 %v2314
      %v2590 = vunpack.c.l.b16 %v2315
      %v2591 = vunpack.c.l.b16 %v2316
      %v2592 = vunpack.c.l.b16 %v2317
      %v2593 = vunpack.c.l.b16 %v2318
      %v2594 = vunpack.c.l.b16 %v2319
      %v2595 = vunpack.c.l.b16 %v2320
      %v2596 = vunpack.c.l.b16 %v2321
      %v2597 = vunpack.c.l.b16 %v2322
      %v2598 = vunpack.c.l.b16 %v2323
      %v2599 = vunpack.c.l.b16 %v2324
      %v2600 = vunpack.c.l.b16 %v2325
      %v2601 = vpack.c.b16 %v2586, %v2585
      %v2602 = vpack.c.b16 %v2588, %v2587
      %v2603 = vpack.c.b16 %v2590, %v2589
      %v2604 = vpack.c.b16 %v2592, %v2591
      %v2605 = vpack.c.b16 %v2594, %v2593
      %v2606 = vpack.c.b16 %v2596, %v2595
      %v2607 = vpack.c.b16 %v2598, %v2597
      %v2608 = vpack.c.b16 %v2600, %v2599
      %2617 = vmatprep.subr.bf16.mxu0 0
      %2618 = vmatpush1.bf16.msra.mxu0 %v2601
      %2619 = vmatprep.subr.bf16.mxu0 0
      %2620 = vmatpush1.bf16.msra.mxu0 %v2602
      %2621 = vmatprep.subr.bf16.mxu0 0
      %2622 = vmatpush1.bf16.msra.mxu0 %v2603
      %2623 = vmatprep.subr.bf16.mxu0 0
      %2624 = vmatpush1.bf16.msra.mxu0 %v2604
      %2625 = vmatprep.subr.bf16.mxu0 0
      %2626 = vmatpush1.bf16.msra.mxu0 %v2605
      %2627 = vmatprep.subr.bf16.mxu0 0
      %2628 = vmatpush1.bf16.msra.mxu0 %v2606
      %2629 = vmatprep.subr.bf16.mxu0 0
      %2630 = vmatpush1.bf16.msra.mxu0 %v2607
      %2631 = vmatprep.subr.bf16.mxu0 0
      %2632 = vmatpush1.bf16.msra.mxu0 %v2608
      %2633 = vmatprep.subr.bf16.mxu0 0
      %2634 = vmatpush1.bf16.msra.mxu0 0
      %2635 = vmatprep.subr.bf16.mxu0 0
      %2636 = vmatpush1.bf16.msra.mxu0 0
      %2637 = vmatprep.subr.bf16.mxu0 0
      %2638 = vmatpush1.bf16.msra.mxu0 0
      %2639 = vmatprep.subr.bf16.mxu0 0
      %2640 = vmatpush1.bf16.msra.mxu0 0
      %2641 = vmatprep.subr.bf16.mxu0 0
      %2642 = vmatpush1.bf16.msra.mxu0 0
      %2643 = vmatprep.subr.bf16.mxu0 0
      %2644 = vmatpush1.bf16.msra.mxu0 0
      %2645 = vmatprep.subr.bf16.mxu0 0
      %2646 = vmatpush1.bf16.msra.mxu0 0
      %2647 = vmatprep.subr.bf16.mxu0 0
      %2648 = vmatpush1.bf16.msra.mxu0 0
      %2649 = vmatprep.mubr.bf16.mxu0 0
      %2650 = vmatmul.mubr.bf16.gmra.mrb[0].mxu0 %v2470
      %v2651 = vpop.f32.mrb[0].mxu0
      %v2652 = vadd.f32 0.0, %v2651
      %v2653 = vpop.f32.mrb[0].mxu0
      %v2654 = vpop.f32.mrb[0].mxu0
      %v2655 = vadd.f32 0.0, %v2654
      %v2656 = vpop.f32.mrb[0].mxu0
      %2657 = vmatprep.mubr.bf16.mxu0 0
      %2658 = vmatmul.mubr.bf16.gmra.mrb[0].mxu0 %v2471
      %v2659 = vpop.f32.mrb[0].mxu0
      %v2660 = vadd.f32 0.0, %v2659
      %v2661 = vpop.f32.mrb[0].mxu0
      %v2662 = vpop.f32.mrb[0].mxu0
      %v2663 = vadd.f32 0.0, %v2662
      %v2664 = vpop.f32.mrb[0].mxu0
      %2665 = vdwg.mxu0
      %v2666 = vmax.f32 %v2555, %v2652
      %v2667 = vmax.f32 %v2558, %v2655
      %v2668 = vmax.f32 %v2563, %v2660
      %v2669 = vmax.f32 %v2566, %v2663
      %v2670 = vld [vmem:[%s7] sm:$0xf]
      %v2671 = vld [vmem:[%s7 + $0x4] sm:$0xf]
      %v2672 = vld [vmem:[%s7 + $0x8] sm:$0xf]
      %v2673 = vld [vmem:[%s7 + $0xc] sm:$0xf]
      %v2674 = vld [vmem:[%s7 + $0x10] sm:$0xf]
      %v2675 = vld [vmem:[%s7 + $0x14] sm:$0xf]
      %v2676 = vld [vmem:[%s7 + $0x18] sm:$0xf]
      %v2677 = vld [vmem:[%s7 + $0x1c] sm:$0xf]
      %v2678 = vpack.c.bf16 %v2667, %v2666
      %v2679 = vpack.c.bf16 %v2669, %v2668
      %v2680 = vld [vmem:[%s8] sm:$0xf]
      %v2681 = vld [vmem:[%s8 + $0x4] sm:$0xf]
      %v2682 = vld [vmem:[%s8 + $0x8] sm:$0xf]
      %v2683 = vld [vmem:[%s8 + $0xc] sm:$0xf]
      %v2684 = vld [vmem:[%s8 + $0x10] sm:$0xf]
      %v2685 = vld [vmem:[%s8 + $0x14] sm:$0xf]
      %v2686 = vld [vmem:[%s8 + $0x18] sm:$0xf]
      %v2687 = vld [vmem:[%s8 + $0x1c] sm:$0xf]
      %v2689 = vshrl.u32 %v2678, 16
      %v2691 = vshll.u32 %v2678, 16
      %v2693 = vrot.slane %v2691, 1
      %v2694 = vor.u32 %v2689, %v2693
      %v2696 = vshll.u32 %v2679, 16
      %v2698 = vrot.slane %v2696, 1
      %v2699 = vsel %vm896, %v2694, %v2698
      %v2700 = vshrl.u32 %v2679, 16
      %v2702 = vor.u32 %v2700, %v2698
      %v2711 = vunpack.c.l.b16 %v2680
      %v2712 = vunpack.c.l.b16 %v2681
      %v2713 = vunpack.c.l.b16 %v2682
      %v2714 = vunpack.c.l.b16 %v2683
      %v2715 = vunpack.c.l.b16 %v2684
      %v2716 = vunpack.c.l.b16 %v2685
      %v2717 = vunpack.c.l.b16 %v2686
      %v2718 = vunpack.c.l.b16 %v2687
      %v2719 = vpack.c.b16 %v2712, %v2711
      %v2720 = vpack.c.b16 %v2714, %v2713
      %v2721 = vpack.c.b16 %v2716, %v2715
      %v2722 = vpack.c.b16 %v2718, %v2717
      %vm2727 = vcmask 523264
      %v2729 = vsel %vm2727, %v2699, 0
      %v2732 = vsel %vm2727, %v2702, 0
      %2734 = vmatprep.subr.bf16.mxu0 0
      %2735 = vmatpush1.bf16.msra.mxu0 %v2719
      %2736 = vmatprep.subr.bf16.mxu0 0
      %2737 = vmatpush1.bf16.msra.mxu0 %v2720
      %2738 = vmatprep.subr.bf16.mxu0 0
      %2739 = vmatpush1.bf16.msra.mxu0 %v2721
      %2740 = vmatprep.subr.bf16.mxu0 0
      %2741 = vmatpush1.bf16.msra.mxu0 %v2722
      %2742 = vmatprep.subr.bf16.mxu0 0
      %2743 = vmatpush1.bf16.msra.mxu0 0
      %2744 = vmatprep.subr.bf16.mxu0 0
      %2745 = vmatpush1.bf16.msra.mxu0 0
      %2746 = vmatprep.subr.bf16.mxu0 0
      %2747 = vmatpush1.bf16.msra.mxu0 0
      %2748 = vmatprep.subr.bf16.mxu0 0
      %2749 = vmatpush1.bf16.msra.mxu0 0
      %2750 = vmatprep.subr.bf16.mxu0 0
      %2751 = vmatpush1.bf16.msra.mxu0 0
      %2752 = vmatprep.subr.bf16.mxu0 0
      %2753 = vmatpush1.bf16.msra.mxu0 0
      %2754 = vmatprep.subr.bf16.mxu0 0
      %2755 = vmatpush1.bf16.msra.mxu0 0
      %2756 = vmatprep.subr.bf16.mxu0 0
      %2757 = vmatpush1.bf16.msra.mxu0 0
      %2758 = vmatprep.subr.bf16.mxu0 0
      %2759 = vmatpush1.bf16.msra.mxu0 0
      %2760 = vmatprep.subr.bf16.mxu0 0
      %2761 = vmatpush1.bf16.msra.mxu0 0
      %2762 = vmatprep.subr.bf16.mxu0 0
      %2763 = vmatpush1.bf16.msra.mxu0 0
      %2764 = vmatprep.subr.bf16.mxu0 0
      %2765 = vmatpush1.bf16.msra.mxu0 0
      %2766 = vmatprep.mubr.bf16.mxu0 0
      %2767 = vmatmul.mubr.bf16.gmra.mrb[0].mxu0 %v2729
      %v2768 = vpop.f32.mrb[0].mxu0
      %v2769 = vadd.f32 0.0, %v2768
      %v2770 = vpop.f32.mrb[0].mxu0
      %v2771 = vpop.f32.mrb[0].mxu0
      %v2772 = vadd.f32 0.0, %v2771
      %v2773 = vpop.f32.mrb[0].mxu0
      %2774 = vmatprep.mubr.bf16.mxu0 0
      %2775 = vmatmul.mubr.bf16.gmra.mrb[0].mxu0 %v2732
      %v2776 = vpop.f32.mrb[0].mxu0
      %v2777 = vadd.f32 0.0, %v2776
      %v2778 = vpop.f32.mrb[0].mxu0
      %v2779 = vpop.f32.mrb[0].mxu0
      %v2780 = vadd.f32 0.0, %v2779
      %v2781 = vpop.f32.mrb[0].mxu0
      %2782 = vdwg.mxu0
      %v2791 = vunpack.c.l.b16 %v2670
      %v2792 = vunpack.c.l.b16 %v2671
      %v2793 = vunpack.c.l.b16 %v2672
      %v2794 = vunpack.c.l.b16 %v2673
      %v2795 = vunpack.c.l.b16 %v2674
      %v2796 = vunpack.c.l.b16 %v2675
      %v2797 = vunpack.c.l.b16 %v2676
      %v2798 = vunpack.c.l.b16 %v2677
      %v2799 = vpack.c.b16 %v2792, %v2791
      %v2800 = vpack.c.b16 %v2794, %v2793
      %v2801 = vpack.c.b16 %v2796, %v2795
      %v2802 = vpack.c.b16 %v2798, %v2797
      %v2807 = vsel %vm2727, %v2678, 0
      %v2809 = vsel %vm2727, %v2679, 0
      %2811 = vmatprep.subr.bf16.mxu0 0
      %2812 = vmatpush1.bf16.msra.mxu0 %v2799
      %2813 = vmatprep.subr.bf16.mxu0 0
      %2814 = vmatpush1.bf16.msra.mxu0 %v2800
      %2815 = vmatprep.subr.bf16.mxu0 0
      %2816 = vmatpush1.bf16.msra.mxu0 %v2801
      %2817 = vmatprep.subr.bf16.mxu0 0
      %2818 = vmatpush1.bf16.msra.mxu0 %v2802
      %2819 = vmatprep.subr.bf16.mxu0 0
      %2820 = vmatpush1.bf16.msra.mxu0 0
      %2821 = vmatprep.subr.bf16.mxu0 0
      %2822 = vmatpush1.bf16.msra.mxu0 0
      %2823 = vmatprep.subr.bf16.mxu0 0
      %2824 = vmatpush1.bf16.msra.mxu0 0
      %2825 = vmatprep.subr.bf16.mxu0 0
      %2826 = vmatpush1.bf16.msra.mxu0 0
      %2827 = vmatprep.subr.bf16.mxu0 0
      %2828 = vmatpush1.bf16.msra.mxu0 0
      %2829 = vmatprep.subr.bf16.mxu0 0
      %2830 = vmatpush1.bf16.msra.mxu0 0
      %2831 = vmatprep.subr.bf16.mxu0 0
      %2832 = vmatpush1.bf16.msra.mxu0 0
      %2833 = vmatprep.subr.bf16.mxu0 0
      %2834 = vmatpush1.bf16.msra.mxu0 0
      %2835 = vmatprep.subr.bf16.mxu0 0
      %2836 = vmatpush1.bf16.msra.mxu0 0
      %2837 = vmatprep.subr.bf16.mxu0 0
      %2838 = vmatpush1.bf16.msra.mxu0 0
      %2839 = vmatprep.subr.bf16.mxu0 0
      %2840 = vmatpush1.bf16.msra.mxu0 0
      %2841 = vmatprep.subr.bf16.mxu0 0
      %2842 = vmatpush1.bf16.msra.mxu0 0
      %2843 = vmatprep.mubr.bf16.mxu0 0
      %2844 = vmatmul.mubr.bf16.gmra.mrb[0].mxu0 %v2807
      %v2845 = vpop.f32.mrb[0].mxu0
      %v2846 = vadd.f32 %v2769, %v2845
      %v2847 = vpop.f32.mrb[0].mxu0
      %v2848 = vpop.f32.mrb[0].mxu0
      %v2849 = vadd.f32 %v2772, %v2848
      %v2850 = vpop.f32.mrb[0].mxu0
      %2851 = vmatprep.mubr.bf16.mxu0 0
      %2852 = vmatmul.mubr.bf16.gmra.mrb[0].mxu0 %v2809
      %v2853 = vpop.f32.mrb[0].mxu0
      %v2854 = vadd.f32 %v2777, %v2853
      %v2855 = vpop.f32.mrb[0].mxu0
      %v2856 = vpop.f32.mrb[0].mxu0
      %v2857 = vadd.f32 %v2780, %v2856
      %v2858 = vpop.f32.mrb[0].mxu0
      %2859 = vdwg.mxu0
      %v2860 = vld [vmem:[%s9] sm:$0xf]
      %v2861 = vld [vmem:[%s9 + $0x4] sm:$0xf]
      %v2862 = vld [vmem:[%s9 + $0x8] sm:$0xf]
      %v2863 = vld [vmem:[%s9 + $0xc] sm:$0xf]
      %v2864 = vld [vmem:[%s9 + $0x10] sm:$0xf]
      %v2865 = vld [vmem:[%s9 + $0x14] sm:$0xf]
      %v2866 = vld [vmem:[%s9 + $0x18] sm:$0xf]
      %v2867 = vld [vmem:[%s9 + $0x1c] sm:$0xf]
      %v2870 = vrot.slane %v2678, 1
      %v2871 = vrot.slane %v2679, 1
      %v2872 = vsel %vm1402, %v2870, %v2871
      %v2881 = vunpack.c.l.b16 %v2860
      %v2882 = vunpack.c.l.b16 %v2861
      %v2883 = vunpack.c.l.b16 %v2862
      %v2884 = vunpack.c.l.b16 %v2863
      %v2885 = vunpack.c.l.b16 %v2864
      %v2886 = vunpack.c.l.b16 %v2865
      %v2887 = vunpack.c.l.b16 %v2866
      %v2888 = vunpack.c.l.b16 %v2867
      %v2889 = vpack.c.b16 %v2882, %v2881
      %v2890 = vpack.c.b16 %v2884, %v2883
      %v2891 = vpack.c.b16 %v2886, %v2885
      %v2892 = vpack.c.b16 %v2888, %v2887
      %v2898 = vsel %vm2727, %v2872, 0
      %v2901 = vsel %vm2727, %v2871, 0
      %2903 = vmatprep.subr.bf16.mxu0 0
      %2904 = vmatpush1.bf16.msra.mxu0 %v2889
      %2905 = vmatprep.subr.bf16.mxu0 0
      %2906 = vmatpush1.bf16.msra.mxu0 %v2890
      %2907 = vmatprep.subr.bf16.mxu0 0
      %2908 = vmatpush1.bf16.msra.mxu0 %v2891
      %2909 = vmatprep.subr.bf16.mxu0 0
      %2910 = vmatpush1.bf16.msra.mxu0 %v2892
      %2911 = vmatprep.subr.bf16.mxu0 0
      %2912 = vmatpush1.bf16.msra.mxu0 0
      %2913 = vmatprep.subr.bf16.mxu0 0
      %2914 = vmatpush1.bf16.msra.mxu0 0
      %2915 = vmatprep.subr.bf16.mxu0 0
      %2916 = vmatpush1.bf16.msra.mxu0 0
      %2917 = vmatprep.subr.bf16.mxu0 0
      %2918 = vmatpush1.bf16.msra.mxu0 0
      %2919 = vmatprep.subr.bf16.mxu0 0
      %2920 = vmatpush1.bf16.msra.mxu0 0
      %2921 = vmatprep.subr.bf16.mxu0 0
      %2922 = vmatpush1.bf16.msra.mxu0 0
      %2923 = vmatprep.subr.bf16.mxu0 0
      %2924 = vmatpush1.bf16.msra.mxu0 0
      %2925 = vmatprep.subr.bf16.mxu0 0
      %2926 = vmatpush1.bf16.msra.mxu0 0
      %2927 = vmatprep.subr.bf16.mxu0 0
      %2928 = vmatpush1.bf16.msra.mxu0 0
      %2929 = vmatprep.subr.bf16.mxu0 0
      %2930 = vmatpush1.bf16.msra.mxu0 0
      %2931 = vmatprep.subr.bf16.mxu0 0
      %2932 = vmatpush1.bf16.msra.mxu0 0
      %2933 = vmatprep.subr.bf16.mxu0 0
      %2934 = vmatpush1.bf16.msra.mxu0 0
      %2935 = vmatprep.mubr.bf16.mxu0 0
      %2936 = vmatmul.mubr.bf16.gmra.mrb[0].mxu0 %v2898
      %v2937 = vpop.f32.mrb[0].mxu0
      %v2938 = vadd.f32 0.0, %v2937
      %v2939 = vpop.f32.mrb[0].mxu0
      %v2940 = vpop.f32.mrb[0].mxu0
      %v2941 = vadd.f32 0.0, %v2940
      %v2942 = vpop.f32.mrb[0].mxu0
      %2943 = vmatprep.mubr.bf16.mxu0 0
      %2944 = vmatmul.mubr.bf16.gmra.mrb[0].mxu0 %v2901
      %v2945 = vpop.f32.mrb[0].mxu0
      %v2946 = vadd.f32 0.0, %v2945
      %v2947 = vpop.f32.mrb[0].mxu0
      %v2948 = vpop.f32.mrb[0].mxu0
      %v2949 = vadd.f32 0.0, %v2948
      %v2950 = vpop.f32.mrb[0].mxu0
      %2951 = vdwg.mxu0
      %v2952 = vadd.f32 %v2846, %v2938
      %v2953 = vadd.f32 %v2849, %v2941
      %v2954 = vadd.f32 %v2854, %v2946
      %v2955 = vadd.f32 %v2857, %v2949
      %v2956 = vmax.f32 %v2952, 0.0
      %v2957 = vmax.f32 %v2953, 0.0
      %v2958 = vmax.f32 %v2954, 0.0
      %v2959 = vmax.f32 %v2955, 0.0
      %v2960 = vld [vmem:[%s10] sm:$0xf]
      %v2961 = vld [vmem:[%s10 + $0x4] sm:$0xf]
      %v2962 = vld [vmem:[%s10 + $0x8] sm:$0xf]
      %v2963 = vld [vmem:[%s10 + $0xc] sm:$0xf]
      %v2964 = vld [vmem:[%s10 + $0x10] sm:$0xf]
      %v2965 = vld [vmem:[%s10 + $0x14] sm:$0xf]
      %v2966 = vpack.c.bf16 %v2957, %v2956
      %v2967 = vpack.c.bf16 %v2959, %v2958
      %v2968 = vld [vmem:[%s11] sm:$0xf]
      %v2969 = vld [vmem:[%s11 + $0x4] sm:$0xf]
      %v2970 = vld [vmem:[%s11 + $0x8] sm:$0xf]
      %v2971 = vld [vmem:[%s11 + $0xc] sm:$0xf]
      %v2972 = vld [vmem:[%s11 + $0x10] sm:$0xf]
      %v2973 = vld [vmem:[%s11 + $0x14] sm:$0xf]
      %v2975 = vshrl.u32 %v2966, 16
      %v2977 = vshll.u32 %v2966, 16
      %v2979 = vrot.slane %v2977, 1
      %v2980 = vor.u32 %v2975, %v2979
      %v2982 = vshll.u32 %v2967, 16
      %v2984 = vrot.slane %v2982, 1
      %v2985 = vsel %vm896, %v2980, %v2984
      %v2986 = vshrl.u32 %v2967, 16
      %v2988 = vor.u32 %v2986, %v2984
      %v2995 = vunpack.c.l.b16 %v2968
      %v2996 = vunpack.c.l.b16 %v2969
      %v2997 = vunpack.c.l.b16 %v2970
      %v2998 = vunpack.c.l.b16 %v2971
      %v2999 = vunpack.c.l.b16 %v2972
      %v3000 = vunpack.c.l.b16 %v2973
      %v3001 = vpack.c.b16 %v2996, %v2995
      %v3002 = vpack.c.b16 %v2998, %v2997
      %v3003 = vpack.c.b16 %v3000, %v2999
      %vm3007 = vcmask 392192
      %v3009 = vsel %vm3007, %v2985, 0
      %v3012 = vsel %vm3007, %v2988, 0
      %3014 = vmatprep.subr.bf16.mxu0 0
      %3015 = vmatpush1.bf16.msra.mxu0 %v3001
      %3016 = vmatprep.subr.bf16.mxu0 0
      %3017 = vmatpush1.bf16.msra.mxu0 %v3002
      %3018 = vmatprep.subr.bf16.mxu0 0
      %3019 = vmatpush1.bf16.msra.mxu0 %v3003
      %3020 = vmatprep.subr.bf16.mxu0 0
      %3021 = vmatpush1.bf16.msra.mxu0 0
      %3022 = vmatprep.subr.bf16.mxu0 0
      %3023 = vmatpush1.bf16.msra.mxu0 0
      %3024 = vmatprep.subr.bf16.mxu0 0
      %3025 = vmatpush1.bf16.msra.mxu0 0
      %3026 = vmatprep.subr.bf16.mxu0 0
      %3027 = vmatpush1.bf16.msra.mxu0 0
      %3028 = vmatprep.subr.bf16.mxu0 0
      %3029 = vmatpush1.bf16.msra.mxu0 0
      %3030 = vmatprep.subr.bf16.mxu0 0
      %3031 = vmatpush1.bf16.msra.mxu0 0
      %3032 = vmatprep.subr.bf16.mxu0 0
      %3033 = vmatpush1.bf16.msra.mxu0 0
      %3034 = vmatprep.subr.bf16.mxu0 0
      %3035 = vmatpush1.bf16.msra.mxu0 0
      %3036 = vmatprep.subr.bf16.mxu0 0
      %3037 = vmatpush1.bf16.msra.mxu0 0
      %3038 = vmatprep.subr.bf16.mxu0 0
      %3039 = vmatpush1.bf16.msra.mxu0 0
      %3040 = vmatprep.subr.bf16.mxu0 0
      %3041 = vmatpush1.bf16.msra.mxu0 0
      %3042 = vmatprep.subr.bf16.mxu0 0
      %3043 = vmatpush1.bf16.msra.mxu0 0
      %3044 = vmatprep.subr.bf16.mxu0 0
      %3045 = vmatpush1.bf16.msra.mxu0 0
      %3046 = vmatprep.mubr.bf16.mxu0 0
      %3047 = vmatmul.mubr.bf16.gmra.mrb[0].mxu0 %v3009
      %v3048 = vpop.f32.mrb[0].mxu0
      %v3049 = vadd.f32 0.0, %v3048
      %v3050 = vpop.f32.mrb[0].mxu0
      %v3051 = vpop.f32.mrb[0].mxu0
      %v3052 = vadd.f32 0.0, %v3051
      %v3053 = vpop.f32.mrb[0].mxu0
      %3054 = vmatprep.mubr.bf16.mxu0 0
      %3055 = vmatmul.mubr.bf16.gmra.mrb[0].mxu0 %v3012
      %v3056 = vpop.f32.mrb[0].mxu0
      %v3057 = vadd.f32 0.0, %v3056
      %v3058 = vpop.f32.mrb[0].mxu0
      %v3059 = vpop.f32.mrb[0].mxu0
      %v3060 = vadd.f32 0.0, %v3059
      %v3061 = vpop.f32.mrb[0].mxu0
      %3062 = vdwg.mxu0
      %v3069 = vunpack.c.l.b16 %v2960
      %v3070 = vunpack.c.l.b16 %v2961
      %v3071 = vunpack.c.l.b16 %v2962
      %v3072 = vunpack.c.l.b16 %v2963
      %v3073 = vunpack.c.l.b16 %v2964
      %v3074 = vunpack.c.l.b16 %v2965
      %v3075 = vpack.c.b16 %v3070, %v3069
      %v3076 = vpack.c.b16 %v3072, %v3071
      %v3077 = vpack.c.b16 %v3074, %v3073
      %v3081 = vsel %vm3007, %v2966, 0
      %v3083 = vsel %vm3007, %v2967, 0
      %3085 = vmatprep.subr.bf16.mxu0 0
      %3086 = vmatpush1.bf16.msra.mxu0 %v3075
      %3087 = vmatprep.subr.bf16.mxu0 0
      %3088 = vmatpush1.bf16.msra.mxu0 %v3076
      %3089 = vmatprep.subr.bf16.mxu0 0
      %3090 = vmatpush1.bf16.msra.mxu0 %v3077
      %3091 = vmatprep.subr.bf16.mxu0 0
      %3092 = vmatpush1.bf16.msra.mxu0 0
      %3093 = vmatprep.subr.bf16.mxu0 0
      %3094 = vmatpush1.bf16.msra.mxu0 0
      %3095 = vmatprep.subr.bf16.mxu0 0
      %3096 = vmatpush1.bf16.msra.mxu0 0
      %3097 = vmatprep.subr.bf16.mxu0 0
      %3098 = vmatpush1.bf16.msra.mxu0 0
      %3099 = vmatprep.subr.bf16.mxu0 0
      %3100 = vmatpush1.bf16.msra.mxu0 0
      %3101 = vmatprep.subr.bf16.mxu0 0
      %3102 = vmatpush1.bf16.msra.mxu0 0
      %3103 = vmatprep.subr.bf16.mxu0 0
      %3104 = vmatpush1.bf16.msra.mxu0 0
      %3105 = vmatprep.subr.bf16.mxu0 0
      %3106 = vmatpush1.bf16.msra.mxu0 0
      %3107 = vmatprep.subr.bf16.mxu0 0
      %3108 = vmatpush1.bf16.msra.mxu0 0
      %3109 = vmatprep.subr.bf16.mxu0 0
      %3110 = vmatpush1.bf16.msra.mxu0 0
      %3111 = vmatprep.subr.bf16.mxu0 0
      %3112 = vmatpush1.bf16.msra.mxu0 0
      %3113 = vmatprep.subr.bf16.mxu0 0
      %3114 = vmatpush1.bf16.msra.mxu0 0
      %3115 = vmatprep.subr.bf16.mxu0 0
      %3116 = vmatpush1.bf16.msra.mxu0 0
      %3117 = vmatprep.mubr.bf16.mxu0 0
      %3118 = vmatmul.mubr.bf16.gmra.mrb[0].mxu0 %v3081
      %v3119 = vpop.f32.mrb[0].mxu0
      %v3120 = vadd.f32 %v3049, %v3119
      %v3121 = vpop.f32.mrb[0].mxu0
      %v3122 = vpop.f32.mrb[0].mxu0
      %v3123 = vadd.f32 %v3052, %v3122
      %v3124 = vpop.f32.mrb[0].mxu0
      %3125 = vmatprep.mubr.bf16.mxu0 0
      %3126 = vmatmul.mubr.bf16.gmra.mrb[0].mxu0 %v3083
      %v3127 = vpop.f32.mrb[0].mxu0
      %v3128 = vadd.f32 %v3057, %v3127
      %v3129 = vpop.f32.mrb[0].mxu0
      %v3130 = vpop.f32.mrb[0].mxu0
      %v3131 = vadd.f32 %v3060, %v3130
      %v3132 = vpop.f32.mrb[0].mxu0
      %3133 = vdwg.mxu0
      %v3134 = vld [vmem:[%s12] sm:$0xf]
      %v3135 = vld [vmem:[%s12 + $0x4] sm:$0xf]
      %v3136 = vld [vmem:[%s12 + $0x8] sm:$0xf]
      %v3137 = vld [vmem:[%s12 + $0xc] sm:$0xf]
      %v3138 = vld [vmem:[%s12 + $0x10] sm:$0xf]
      %v3139 = vld [vmem:[%s12 + $0x14] sm:$0xf]
      %v3142 = vrot.slane %v2966, 1
      %v3143 = vrot.slane %v2967, 1
      %v3144 = vsel %vm1402, %v3142, %v3143
      %v3151 = vunpack.c.l.b16 %v3134
      %v3152 = vunpack.c.l.b16 %v3135
      %v3153 = vunpack.c.l.b16 %v3136
      %v3154 = vunpack.c.l.b16 %v3137
      %v3155 = vunpack.c.l.b16 %v3138
      %v3156 = vunpack.c.l.b16 %v3139
      %v3157 = vpack.c.b16 %v3152, %v3151
      %v3158 = vpack.c.b16 %v3154, %v3153
      %v3159 = vpack.c.b16 %v3156, %v3155
      %v3164 = vsel %vm3007, %v3144, 0
      %v3167 = vsel %vm3007, %v3143, 0
      %3169 = vmatprep.subr.bf16.mxu0 0
      %3170 = vmatpush1.bf16.msra.mxu0 %v3157
      %3171 = vmatprep.subr.bf16.mxu0 0
      %3172 = vmatpush1.bf16.msra.mxu0 %v3158
      %3173 = vmatprep.subr.bf16.mxu0 0
      %3174 = vmatpush1.bf16.msra.mxu0 %v3159
      %3175 = vmatprep.subr.bf16.mxu0 0
      %3176 = vmatpush1.bf16.msra.mxu0 0
      %3177 = vmatprep.subr.bf16.mxu0 0
      %3178 = vmatpush1.bf16.msra.mxu0 0
      %3179 = vmatprep.subr.bf16.mxu0 0
      %3180 = vmatpush1.bf16.msra.mxu0 0
      %3181 = vmatprep.subr.bf16.mxu0 0
      %3182 = vmatpush1.bf16.msra.mxu0 0
      %3183 = vmatprep.subr.bf16.mxu0 0
      %3184 = vmatpush1.bf16.msra.mxu0 0
      %3185 = vmatprep.subr.bf16.mxu0 0
      %3186 = vmatpush1.bf16.msra.mxu0 0
      %3187 = vmatprep.subr.bf16.mxu0 0
      %3188 = vmatpush1.bf16.msra.mxu0 0
      %3189 = vmatprep.subr.bf16.mxu0 0
      %3190 = vmatpush1.bf16.msra.mxu0 0
      %3191 = vmatprep.subr.bf16.mxu0 0
      %3192 = vmatpush1.bf16.msra.mxu0 0
      %3193 = vmatprep.subr.bf16.mxu0 0
      %3194 = vmatpush1.bf16.msra.mxu0 0
      %3195 = vmatprep.subr.bf16.mxu0 0
      %3196 = vmatpush1.bf16.msra.mxu0 0
      %3197 = vmatprep.subr.bf16.mxu0 0
      %3198 = vmatpush1.bf16.msra.mxu0 0
      %3199 = vmatprep.subr.bf16.mxu0 0
      %3200 = vmatpush1.bf16.msra.mxu0 0
      %3201 = vmatprep.mubr.bf16.mxu0 0
      %3202 = vmatmul.mubr.bf16.gmra.mrb[0].mxu0 %v3164
      %v3203 = vpop.f32.mrb[0].mxu0
      %v3204 = vadd.f32 0.0, %v3203
      %v3205 = vpop.f32.mrb[0].mxu0
      %v3206 = vpop.f32.mrb[0].mxu0
      %v3207 = vadd.f32 0.0, %v3206
      %v3208 = vpop.f32.mrb[0].mxu0
      %3209 = vmatprep.mubr.bf16.mxu0 0
      %3210 = vmatmul.mubr.bf16.gmra.mrb[0].mxu0 %v3167
      %v3211 = vpop.f32.mrb[0].mxu0
      %v3212 = vadd.f32 0.0, %v3211
      %v3213 = vpop.f32.mrb[0].mxu0
      %v3214 = vpop.f32.mrb[0].mxu0
      %v3215 = vadd.f32 0.0, %v3214
      %v3216 = vpop.f32.mrb[0].mxu0
      %3217 = vdwg.mxu0
      %v3218 = vadd.f32 %v3120, %v3204
      %v3219 = vadd.f32 %v3123, %v3207
      %v3220 = vadd.f32 %v3128, %v3212
      %v3221 = vadd.f32 %v3131, %v3215
      %v3222 = vmax.f32 %v3218, 0.0
      %v3223 = vmax.f32 %v3219, 0.0
      %v3224 = vmax.f32 %v3220, 0.0
      %v3225 = vmax.f32 %v3221, 0.0
      %v3226 = vld [vmem:[%s23] sm:$0xf]
      %v3227 = vld [vmem:[%s23 + $0x4] sm:$0xf]
      %v3228 = vld [vmem:[%s23 + $0x8] sm:$0xf]
      %v3229 = vld [vmem:[%s23 + $0xc] sm:$0xf]
      %v3230 = vld [vmem:[%s24] sm:$0xf]
      %v3231 = vld [vmem:[%s24 + $0x4] sm:$0xf]
      %v3232 = vld [vmem:[%s24 + $0x8] sm:$0xf]
      %v3233 = vld [vmem:[%s24 + $0xc] sm:$0xf]
      %v3234 = vpack.c.bf16 %v3223, %v3222
      %v3235 = vpack.c.bf16 %v3225, %v3224
      %v3240 = vunpack.c.l.b16 %v3226
      %v3241 = vunpack.c.l.b16 %v3227
      %v3242 = vunpack.c.l.b16 %v3228
      %v3243 = vunpack.c.l.b16 %v3229
      %v3244 = vpack.c.b16 %v3241, %v3240
      %v3245 = vpack.c.b16 %v3243, %v3242
      %vm3246 = vcmask 228352
      %v3248 = vsel %vm3246, %v3244, 0
      %v3251 = vsel %vm3246, %v3245, 0
      %v3254 = vsel %vm2348, %v3235, 0
      %3256 = vmatprep.subr.bf16.mxu0 0
      %3257 = vmatpush1.bf16.msra.mxu0 %v3234
      %3258 = vmatprep.subr.bf16.mxu0 0
      %3259 = vmatpush1.bf16.msra.mxu0 %v3254
      %3260 = vmatprep.subr.bf16.mxu0 0
      %3261 = vmatpush1.bf16.msra.mxu0 0
      %3262 = vmatprep.subr.bf16.mxu0 0
      %3263 = vmatpush1.bf16.msra.mxu0 0
      %3264 = vmatprep.subr.bf16.mxu0 0
      %3265 = vmatpush1.bf16.msra.mxu0 0
      %3266 = vmatprep.subr.bf16.mxu0 0
      %3267 = vmatpush1.bf16.msra.mxu0 0
      %3268 = vmatprep.subr.bf16.mxu0 0
      %3269 = vmatpush1.bf16.msra.mxu0 0
      %3270 = vmatprep.subr.bf16.mxu0 0
      %3271 = vmatpush1.bf16.msra.mxu0 0
      %3272 = vmatprep.subr.bf16.mxu0 0
      %3273 = vmatpush1.bf16.msra.mxu0 0
      %3274 = vmatprep.subr.bf16.mxu0 0
      %3275 = vmatpush1.bf16.msra.mxu0 0
      %3276 = vmatprep.subr.bf16.mxu0 0
      %3277 = vmatpush1.bf16.msra.mxu0 0
      %3278 = vmatprep.subr.bf16.mxu0 0
      %3279 = vmatpush1.bf16.msra.mxu0 0
      %3280 = vmatprep.subr.bf16.mxu0 0
      %3281 = vmatpush1.bf16.msra.mxu0 0
      %3282 = vmatprep.subr.bf16.mxu0 0
      %3283 = vmatpush1.bf16.msra.mxu0 0
      %3284 = vmatprep.subr.bf16.mxu0 0
      %3285 = vmatpush1.bf16.msra.mxu0 0
      %3286 = vmatprep.subr.bf16.mxu0 0
      %3287 = vmatpush1.bf16.msra.mxu0 0
      %3288 = vmatprep.mubr.bf16.mxu0 0
      %3289 = vmatmul.mubr.bf16.gmra.mrb[0].mxu0 %v3248
      %v3290 = vpop.f32.mrb[0].mxu0
      %v3291 = vadd.f32 0.0, %v3290
      %v3292 = vpop.f32.mrb[0].mxu0
      %v3293 = vpop.f32.mrb[0].mxu0
      %v3294 = vadd.f32 0.0, %v3293
      %v3295 = vpop.f32.mrb[0].mxu0
      %3296 = vmatprep.mubr.bf16.mxu0 0
      %3297 = vmatmul.mubr.bf16.gmra.mrb[0].mxu0 %v3251
      %v3298 = vpop.f32.mrb[0].mxu0
      %v3299 = vadd.f32 0.0, %v3298
      %v3300 = vpop.f32.mrb[0].mxu0
      %v3301 = vpop.f32.mrb[0].mxu0
      %v3302 = vadd.f32 0.0, %v3301
      %v3303 = vpop.f32.mrb[0].mxu0
      %3304 = vdwg.mxu0
      %v3305 = vpack.c.bf16 %v3294, %v3291
      %v3306 = vpack.c.bf16 %v3302, %v3299
      %v3311 = vunpack.c.l.b16 %v3230
      %v3312 = vunpack.c.l.b16 %v3231
      %v3313 = vunpack.c.l.b16 %v3232
      %v3314 = vunpack.c.l.b16 %v3233
      %v3315 = vpack.c.b16 %v3312, %v3311
      %v3316 = vpack.c.b16 %v3314, %v3313
      %v3320 = vsel %vm1080, %v3305, 0
      %v3323 = vsel %vm1080, %v3306, 0
      %3325 = vmatprep.subr.bf16.mxu0 0
      %3326 = vmatpush1.bf16.msra.mxu0 %v3315
      %3327 = vmatprep.subr.bf16.mxu0 0
      %3328 = vmatpush1.bf16.msra.mxu0 %v3316
      %3329 = vmatprep.subr.bf16.mxu0 0
      %3330 = vmatpush1.bf16.msra.mxu0 0
      %3331 = vmatprep.subr.bf16.mxu0 0
      %3332 = vmatpush1.bf16.msra.mxu0 0
      %3333 = vmatprep.subr.bf16.mxu0 0
      %3334 = vmatpush1.bf16.msra.mxu0 0
      %3335 = vmatprep.subr.bf16.mxu0 0
      %3336 = vmatpush1.bf16.msra.mxu0 0
      %3337 = vmatprep.subr.bf16.mxu0 0
      %3338 = vmatpush1.bf16.msra.mxu0 0
      %3339 = vmatprep.subr.bf16.mxu0 0
      %3340 = vmatpush1.bf16.msra.mxu0 0
      %3341 = vmatprep.subr.bf16.mxu0 0
      %3342 = vmatpush1.bf16.msra.mxu0 0
      %3343 = vmatprep.subr.bf16.mxu0 0
      %3344 = vmatpush1.bf16.msra.mxu0 0
      %3345 = vmatprep.subr.bf16.mxu0 0
      %3346 = vmatpush1.bf16.msra.mxu0 0
      %3347 = vmatprep.subr.bf16.mxu0 0
      %3348 = vmatpush1.bf16.msra.mxu0 0
      %3349 = vmatprep.subr.bf16.mxu0 0
      %3350 = vmatpush1.bf16.msra.mxu0 0
      %3351 = vmatprep.subr.bf16.mxu0 0
      %3352 = vmatpush1.bf16.msra.mxu0 0
      %3353 = vmatprep.subr.bf16.mxu0 0
      %3354 = vmatpush1.bf16.msra.mxu0 0
      %3355 = vmatprep.subr.bf16.mxu0 0
      %3356 = vmatpush1.bf16.msra.mxu0 0
      %3357 = vmatprep.mubr.bf16.mxu0 0
      %3358 = vmatmul.mubr.bf16.gmra.mrb[0].mxu0 %v3320
      %v3359 = vpop.f32.mrb[0].mxu0
      %v3360 = vadd.f32 0.0, %v3359
      %v3361 = vpop.f32.mrb[0].mxu0
      %v3362 = vpop.f32.mrb[0].mxu0
      %v3363 = vadd.f32 0.0, %v3362
      %v3364 = vpop.f32.mrb[0].mxu0
      %3365 = vmatprep.mubr.bf16.mxu0 0
      %3366 = vmatmul.mubr.bf16.gmra.mrb[0].mxu0 %v3323
      %v3367 = vpop.f32.mrb[0].mxu0
      %v3368 = vadd.f32 0.0, %v3367
      %v3369 = vpop.f32.mrb[0].mxu0
      %v3370 = vpop.f32.mrb[0].mxu0
      %v3371 = vadd.f32 0.0, %v3370
      %v3372 = vpop.f32.mrb[0].mxu0
      %3373 = vdwg.mxu0
      %v3374 = vadd.f32 %v2666, %v3360
      %v3375 = vadd.f32 %v2667, %v3363
      %v3376 = vadd.f32 %v2668, %v3368
      %v3377 = vadd.f32 %v2669, %v3371
      %v3378 = vld [vmem:[%s13] sm:$0xf]
      %v3379 = vld [vmem:[%s13 + $0x4] sm:$0xf]
      %v3380 = vld [vmem:[%s13 + $0x8] sm:$0xf]
      %v3381 = vld [vmem:[%s13 + $0xc] sm:$0xf]
      %v3382 = vld [vmem:[%s13 + $0x10] sm:$0xf]
      %v3383 = vld [vmem:[%s13 + $0x14] sm:$0xf]
      %v3384 = vld [vmem:[%s13 + $0x18] sm:$0xf]
      %v3385 = vld [vmem:[%s13 + $0x1c] sm:$0xf]
      %v3386 = vpack.c.bf16 %v3375, %v3374
      %v3387 = vpack.c.bf16 %v3377, %v3376
      %v3388 = vld [vmem:[%s14] sm:$0xf]
      %v3389 = vld [vmem:[%s14 + $0x4] sm:$0xf]
      %v3390 = vld [vmem:[%s14 + $0x8] sm:$0xf]
      %v3391 = vld [vmem:[%s14 + $0xc] sm:$0xf]
      %v3392 = vld [vmem:[%s14 + $0x10] sm:$0xf]
      %v3393 = vld [vmem:[%s14 + $0x14] sm:$0xf]
      %v3394 = vld [vmem:[%s14 + $0x18] sm:$0xf]
      %v3395 = vld [vmem:[%s14 + $0x1c] sm:$0xf]
      %v3397 = vshrl.u32 %v3386, 16
      %v3399 = vshll.u32 %v3386, 16
      %v3401 = vrot.slane %v3399, 1
      %v3402 = vor.u32 %v3397, %v3401
      %v3404 = vshll.u32 %v3387, 16
      %v3406 = vrot.slane %v3404, 1
      %v3407 = vsel %vm896, %v3402, %v3406
      %v3408 = vshrl.u32 %v3387, 16
      %v3410 = vor.u32 %v3408, %v3406
      %v3419 = vunpack.c.l.b16 %v3388
      %v3420 = vunpack.c.l.b16 %v3389
      %v3421 = vunpack.c.l.b16 %v3390
      %v3422 = vunpack.c.l.b16 %v3391
      %v3423 = vunpack.c.l.b16 %v3392
      %v3424 = vunpack.c.l.b16 %v3393
      %v3425 = vunpack.c.l.b16 %v3394
      %v3426 = vunpack.c.l.b16 %v3395
      %v3427 = vpack.c.b16 %v3420, %v3419
      %v3428 = vpack.c.b16 %v3422, %v3421
      %v3429 = vpack.c.b16 %v3424, %v3423
      %v3430 = vpack.c.b16 %v3426, %v3425
      %v3436 = vsel %vm2727, %v3407, 0
      %v3439 = vsel %vm2727, %v3410, 0
      %3441 = vmatprep.subr.bf16.mxu0 0
      %3442 = vmatpush1.bf16.msra.mxu0 %v3427
      %3443 = vmatprep.subr.bf16.mxu0 0
      %3444 = vmatpush1.bf16.msra.mxu0 %v3428
      %3445 = vmatprep.subr.bf16.mxu0 0
      %3446 = vmatpush1.bf16.msra.mxu0 %v3429
      %3447 = vmatprep.subr.bf16.mxu0 0
      %3448 = vmatpush1.bf16.msra.mxu0 %v3430
      %3449 = vmatprep.subr.bf16.mxu0 0
      %3450 = vmatpush1.bf16.msra.mxu0 0
      %3451 = vmatprep.subr.bf16.mxu0 0
      %3452 = vmatpush1.bf16.msra.mxu0 0
      %3453 = vmatprep.subr.bf16.mxu0 0
      %3454 = vmatpush1.bf16.msra.mxu0 0
      %3455 = vmatprep.subr.bf16.mxu0 0
      %3456 = vmatpush1.bf16.msra.mxu0 0
      %3457 = vmatprep.subr.bf16.mxu0 0
      %3458 = vmatpush1.bf16.msra.mxu0 0
      %3459 = vmatprep.subr.bf16.mxu0 0
      %3460 = vmatpush1.bf16.msra.mxu0 0
      %3461 = vmatprep.subr.bf16.mxu0 0
      %3462 = vmatpush1.bf16.msra.mxu0 0
      %3463 = vmatprep.subr.bf16.mxu0 0
      %3464 = vmatpush1.bf16.msra.mxu0 0
      %3465 = vmatprep.subr.bf16.mxu0 0
      %3466 = vmatpush1.bf16.msra.mxu0 0
      %3467 = vmatprep.subr.bf16.mxu0 0
      %3468 = vmatpush1.bf16.msra.mxu0 0
      %3469 = vmatprep.subr.bf16.mxu0 0
      %3470 = vmatpush1.bf16.msra.mxu0 0
      %3471 = vmatprep.subr.bf16.mxu0 0
      %3472 = vmatpush1.bf16.msra.mxu0 0
      %3473 = vmatprep.mubr.bf16.mxu0 0
      %3474 = vmatmul.mubr.bf16.gmra.mrb[0].mxu0 %v3436
      %v3475 = vpop.f32.mrb[0].mxu0
      %v3476 = vadd.f32 0.0, %v3475
      %v3477 = vpop.f32.mrb[0].mxu0
      %v3478 = vpop.f32.mrb[0].mxu0
      %v3479 = vadd.f32 0.0, %v3478
      %v3480 = vpop.f32.mrb[0].mxu0
      %3481 = vmatprep.mubr.bf16.mxu0 0
      %3482 = vmatmul.mubr.bf16.gmra.mrb[0].mxu0 %v3439
      %v3483 = vpop.f32.mrb[0].mxu0
      %v3484 = vadd.f32 0.0, %v3483
      %v3485 = vpop.f32.mrb[0].mxu0
      %v3486 = vpop.f32.mrb[0].mxu0
      %v3487 = vadd.f32 0.0, %v3486
      %v3488 = vpop.f32.mrb[0].mxu0
      %3489 = vdwg.mxu0
      %v3498 = vunpack.c.l.b16 %v3378
      %v3499 = vunpack.c.l.b16 %v3379
      %v3500 = vunpack.c.l.b16 %v3380
      %v3501 = vunpack.c.l.b16 %v3381
      %v3502 = vunpack.c.l.b16 %v3382
      %v3503 = vunpack.c.l.b16 %v3383
      %v3504 = vunpack.c.l.b16 %v3384
      %v3505 = vunpack.c.l.b16 %v3385
      %v3506 = vpack.c.b16 %v3499, %v3498
      %v3507 = vpack.c.b16 %v3501, %v3500
      %v3508 = vpack.c.b16 %v3503, %v3502
      %v3509 = vpack.c.b16 %v3505, %v3504
      %v3514 = vsel %vm2727, %v3386, 0
      %v3516 = vsel %vm2727, %v3387, 0
      %3518 = vmatprep.subr.bf16.mxu0 0
      %3519 = vmatpush1.bf16.msra.mxu0 %v3506
      %3520 = vmatprep.subr.bf16.mxu0 0
      %3521 = vmatpush1.bf16.msra.mxu0 %v3507
      %3522 = vmatprep.subr.bf16.mxu0 0
      %3523 = vmatpush1.bf16.msra.mxu0 %v3508
      %3524 = vmatprep.subr.bf16.mxu0 0
      %3525 = vmatpush1.bf16.msra.mxu0 %v3509
      %3526 = vmatprep.subr.bf16.mxu0 0
      %3527 = vmatpush1.bf16.msra.mxu0 0
      %3528 = vmatprep.subr.bf16.mxu0 0
      %3529 = vmatpush1.bf16.msra.mxu0 0
      %3530 = vmatprep.subr.bf16.mxu0 0
      %3531 = vmatpush1.bf16.msra.mxu0 0
      %3532 = vmatprep.subr.bf16.mxu0 0
      %3533 = vmatpush1.bf16.msra.mxu0 0
      %3534 = vmatprep.subr.bf16.mxu0 0
      %3535 = vmatpush1.bf16.msra.mxu0 0
      %3536 = vmatprep.subr.bf16.mxu0 0
      %3537 = vmatpush1.bf16.msra.mxu0 0
      %3538 = vmatprep.subr.bf16.mxu0 0
      %3539 = vmatpush1.bf16.msra.mxu0 0
      %3540 = vmatprep.subr.bf16.mxu0 0
      %3541 = vmatpush1.bf16.msra.mxu0 0
      %3542 = vmatprep.subr.bf16.mxu0 0
      %3543 = vmatpush1.bf16.msra.mxu0 0
      %3544 = vmatprep.subr.bf16.mxu0 0
      %3545 = vmatpush1.bf16.msra.mxu0 0
      %3546 = vmatprep.subr.bf16.mxu0 0
      %3547 = vmatpush1.bf16.msra.mxu0 0
      %3548 = vmatprep.subr.bf16.mxu0 0
      %3549 = vmatpush1.bf16.msra.mxu0 0
      %3550 = vmatprep.mubr.bf16.mxu0 0
      %3551 = vmatmul.mubr.bf16.gmra.mrb[0].mxu0 %v3514
      %v3552 = vpop.f32.mrb[0].mxu0
      %v3553 = vadd.f32 %v3476, %v3552
      %v3554 = vpop.f32.mrb[0].mxu0
      %v3555 = vpop.f32.mrb[0].mxu0
      %v3556 = vadd.f32 %v3479, %v3555
      %v3557 = vpop.f32.mrb[0].mxu0
      %3558 = vmatprep.mubr.bf16.mxu0 0
      %3559 = vmatmul.mubr.bf16.gmra.mrb[0].mxu0 %v3516
      %v3560 = vpop.f32.mrb[0].mxu0
      %v3561 = vadd.f32 %v3484, %v3560
      %v3562 = vpop.f32.mrb[0].mxu0
      %v3563 = vpop.f32.mrb[0].mxu0
      %v3564 = vadd.f32 %v3487, %v3563
      %v3565 = vpop.f32.mrb[0].mxu0
      %3566 = vdwg.mxu0
      %v3567 = vld [vmem:[%s15] sm:$0xf]
      %v3568 = vld [vmem:[%s15 + $0x4] sm:$0xf]
      %v3569 = vld [vmem:[%s15 + $0x8] sm:$0xf]
      %v3570 = vld [vmem:[%s15 + $0xc] sm:$0xf]
      %v3571 = vld [vmem:[%s15 + $0x10] sm:$0xf]
      %v3572 = vld [vmem:[%s15 + $0x14] sm:$0xf]
      %v3573 = vld [vmem:[%s15 + $0x18] sm:$0xf]
      %v3574 = vld [vmem:[%s15 + $0x1c] sm:$0xf]
      %v3577 = vrot.slane %v3386, 1
      %v3578 = vrot.slane %v3387, 1
      %v3579 = vsel %vm1402, %v3577, %v3578
      %v3588 = vunpack.c.l.b16 %v3567
      %v3589 = vunpack.c.l.b16 %v3568
      %v3590 = vunpack.c.l.b16 %v3569
      %v3591 = vunpack.c.l.b16 %v3570
      %v3592 = vunpack.c.l.b16 %v3571
      %v3593 = vunpack.c.l.b16 %v3572
      %v3594 = vunpack.c.l.b16 %v3573
      %v3595 = vunpack.c.l.b16 %v3574
      %v3596 = vpack.c.b16 %v3589, %v3588
      %v3597 = vpack.c.b16 %v3591, %v3590
      %v3598 = vpack.c.b16 %v3593, %v3592
      %v3599 = vpack.c.b16 %v3595, %v3594
      %v3605 = vsel %vm2727, %v3579, 0
      %v3608 = vsel %vm2727, %v3578, 0
      %3610 = vmatprep.subr.bf16.mxu0 0
      %3611 = vmatpush1.bf16.msra.mxu0 %v3596
      %3612 = vmatprep.subr.bf16.mxu0 0
      %3613 = vmatpush1.bf16.msra.mxu0 %v3597
      %3614 = vmatprep.subr.bf16.mxu0 0
      %3615 = vmatpush1.bf16.msra.mxu0 %v3598
      %3616 = vmatprep.subr.bf16.mxu0 0
      %3617 = vmatpush1.bf16.msra.mxu0 %v3599
      %3618 = vmatprep.subr.bf16.mxu0 0
      %3619 = vmatpush1.bf16.msra.mxu0 0
      %3620 = vmatprep.subr.bf16.mxu0 0
      %3621 = vmatpush1.bf16.msra.mxu0 0
      %3622 = vmatprep.subr.bf16.mxu0 0
      %3623 = vmatpush1.bf16.msra.mxu0 0
      %3624 = vmatprep.subr.bf16.mxu0 0
      %3625 = vmatpush1.bf16.msra.mxu0 0
      %3626 = vmatprep.subr.bf16.mxu0 0
      %3627 = vmatpush1.bf16.msra.mxu0 0
      %3628 = vmatprep.subr.bf16.mxu0 0
      %3629 = vmatpush1.bf16.msra.mxu0 0
      %3630 = vmatprep.subr.bf16.mxu0 0
      %3631 = vmatpush1.bf16.msra.mxu0 0
      %3632 = vmatprep.subr.bf16.mxu0 0
      %3633 = vmatpush1.bf16.msra.mxu0 0
      %3634 = vmatprep.subr.bf16.mxu0 0
      %3635 = vmatpush1.bf16.msra.mxu0 0
      %3636 = vmatprep.subr.bf16.mxu0 0
      %3637 = vmatpush1.bf16.msra.mxu0 0
      %3638 = vmatprep.subr.bf16.mxu0 0
      %3639 = vmatpush1.bf16.msra.mxu0 0
      %3640 = vmatprep.subr.bf16.mxu0 0
      %3641 = vmatpush1.bf16.msra.mxu0 0
      %3642 = vmatprep.mubr.bf16.mxu0 0
      %3643 = vmatmul.mubr.bf16.gmra.mrb[0].mxu0 %v3605
      %v3644 = vpop.f32.mrb[0].mxu0
      %v3645 = vadd.f32 0.0, %v3644
      %v3646 = vpop.f32.mrb[0].mxu0
      %v3647 = vpop.f32.mrb[0].mxu0
      %v3648 = vadd.f32 0.0, %v3647
      %v3649 = vpop.f32.mrb[0].mxu0
      %3650 = vmatprep.mubr.bf16.mxu0 0
      %3651 = vmatmul.mubr.bf16.gmra.mrb[0].mxu0 %v3608
      %v3652 = vpop.f32.mrb[0].mxu0
      %v3653 = vadd.f32 0.0, %v3652
      %v3654 = vpop.f32.mrb[0].mxu0
      %v3655 = vpop.f32.mrb[0].mxu0
      %v3656 = vadd.f32 0.0, %v3655
      %v3657 = vpop.f32.mrb[0].mxu0
      %3658 = vdwg.mxu0
      %v3659 = vadd.f32 %v3553, %v3645
      %v3660 = vadd.f32 %v3556, %v3648
      %v3661 = vadd.f32 %v3561, %v3653
      %v3662 = vadd.f32 %v3564, %v3656
      %v3663 = vmax.f32 %v3659, 0.0
      %v3664 = vmax.f32 %v3660, 0.0
      %v3665 = vmax.f32 %v3661, 0.0
      %v3666 = vmax.f32 %v3662, 0.0
      %v3667 = vld [vmem:[%s16] sm:$0xf]
      %v3668 = vld [vmem:[%s16 + $0x4] sm:$0xf]
      %v3669 = vld [vmem:[%s16 + $0x8] sm:$0xf]
      %v3670 = vld [vmem:[%s16 + $0xc] sm:$0xf]
      %v3671 = vld [vmem:[%s16 + $0x10] sm:$0xf]
      %v3672 = vld [vmem:[%s16 + $0x14] sm:$0xf]
      %v3673 = vpack.c.bf16 %v3664, %v3663
      %v3674 = vpack.c.bf16 %v3666, %v3665
      %v3675 = vld [vmem:[%s17] sm:$0xf]
      %v3676 = vld [vmem:[%s17 + $0x4] sm:$0xf]
      %v3677 = vld [vmem:[%s17 + $0x8] sm:$0xf]
      %v3678 = vld [vmem:[%s17 + $0xc] sm:$0xf]
      %v3679 = vld [vmem:[%s17 + $0x10] sm:$0xf]
      %v3680 = vld [vmem:[%s17 + $0x14] sm:$0xf]
      %v3682 = vshrl.u32 %v3673, 16
      %v3684 = vshll.u32 %v3673, 16
      %v3686 = vrot.slane %v3684, 1
      %v3687 = vor.u32 %v3682, %v3686
      %v3689 = vshll.u32 %v3674, 16
      %v3691 = vrot.slane %v3689, 1
      %v3692 = vsel %vm896, %v3687, %v3691
      %v3693 = vshrl.u32 %v3674, 16
      %v3695 = vor.u32 %v3693, %v3691
      %v3702 = vunpack.c.l.b16 %v3675
      %v3703 = vunpack.c.l.b16 %v3676
      %v3704 = vunpack.c.l.b16 %v3677
      %v3705 = vunpack.c.l.b16 %v3678
      %v3706 = vunpack.c.l.b16 %v3679
      %v3707 = vunpack.c.l.b16 %v3680
      %v3708 = vpack.c.b16 %v3703, %v3702
      %v3709 = vpack.c.b16 %v3705, %v3704
      %v3710 = vpack.c.b16 %v3707, %v3706
      %v3715 = vsel %vm3007, %v3692, 0
      %v3718 = vsel %vm3007, %v3695, 0
      %3720 = vmatprep.subr.bf16.mxu0 0
      %3721 = vmatpush1.bf16.msra.mxu0 %v3708
      %3722 = vmatprep.subr.bf16.mxu0 0
      %3723 = vmatpush1.bf16.msra.mxu0 %v3709
      %3724 = vmatprep.subr.bf16.mxu0 0
      %3725 = vmatpush1.bf16.msra.mxu0 %v3710
      %3726 = vmatprep.subr.bf16.mxu0 0
      %3727 = vmatpush1.bf16.msra.mxu0 0
      %3728 = vmatprep.subr.bf16.mxu0 0
      %3729 = vmatpush1.bf16.msra.mxu0 0
      %3730 = vmatprep.subr.bf16.mxu0 0
      %3731 = vmatpush1.bf16.msra.mxu0 0
      %3732 = vmatprep.subr.bf16.mxu0 0
      %3733 = vmatpush1.bf16.msra.mxu0 0
      %3734 = vmatprep.subr.bf16.mxu0 0
      %3735 = vmatpush1.bf16.msra.mxu0 0
      %3736 = vmatprep.subr.bf16.mxu0 0
      %3737 = vmatpush1.bf16.msra.mxu0 0
      %3738 = vmatprep.subr.bf16.mxu0 0
      %3739 = vmatpush1.bf16.msra.mxu0 0
      %3740 = vmatprep.subr.bf16.mxu0 0
      %3741 = vmatpush1.bf16.msra.mxu0 0
      %3742 = vmatprep.subr.bf16.mxu0 0
      %3743 = vmatpush1.bf16.msra.mxu0 0
      %3744 = vmatprep.subr.bf16.mxu0 0
      %3745 = vmatpush1.bf16.msra.mxu0 0
      %3746 = vmatprep.subr.bf16.mxu0 0
      %3747 = vmatpush1.bf16.msra.mxu0 0
      %3748 = vmatprep.subr.bf16.mxu0 0
      %3749 = vmatpush1.bf16.msra.mxu0 0
      %3750 = vmatprep.subr.bf16.mxu0 0
      %3751 = vmatpush1.bf16.msra.mxu0 0
      %3752 = vmatprep.mubr.bf16.mxu0 0
      %3753 = vmatmul.mubr.bf16.gmra.mrb[0].mxu0 %v3715
      %v3754 = vpop.f32.mrb[0].mxu0
      %v3755 = vadd.f32 0.0, %v3754
      %v3756 = vpop.f32.mrb[0].mxu0
      %v3757 = vpop.f32.mrb[0].mxu0
      %v3758 = vadd.f32 0.0, %v3757
      %v3759 = vpop.f32.mrb[0].mxu0
      %3760 = vmatprep.mubr.bf16.mxu0 0
      %3761 = vmatmul.mubr.bf16.gmra.mrb[0].mxu0 %v3718
      %v3762 = vpop.f32.mrb[0].mxu0
      %v3763 = vadd.f32 0.0, %v3762
      %v3764 = vpop.f32.mrb[0].mxu0
      %v3765 = vpop.f32.mrb[0].mxu0
      %v3766 = vadd.f32 0.0, %v3765
      %v3767 = vpop.f32.mrb[0].mxu0
      %3768 = vdwg.mxu0
      %v3775 = vunpack.c.l.b16 %v3667
      %v3776 = vunpack.c.l.b16 %v3668
      %v3777 = vunpack.c.l.b16 %v3669
      %v3778 = vunpack.c.l.b16 %v3670
      %v3779 = vunpack.c.l.b16 %v3671
      %v3780 = vunpack.c.l.b16 %v3672
      %v3781 = vpack.c.b16 %v3776, %v3775
      %v3782 = vpack.c.b16 %v3778, %v3777
      %v3783 = vpack.c.b16 %v3780, %v3779
      %v3787 = vsel %vm3007, %v3673, 0
      %v3789 = vsel %vm3007, %v3674, 0
      %3791 = vmatprep.subr.bf16.mxu0 0
      %3792 = vmatpush1.bf16.msra.mxu0 %v3781
      %3793 = vmatprep.subr.bf16.mxu0 0
      %3794 = vmatpush1.bf16.msra.mxu0 %v3782
      %3795 = vmatprep.subr.bf16.mxu0 0
      %3796 = vmatpush1.bf16.msra.mxu0 %v3783
      %3797 = vmatprep.subr.bf16.mxu0 0
      %3798 = vmatpush1.bf16.msra.mxu0 0
      %3799 = vmatprep.subr.bf16.mxu0 0
      %3800 = vmatpush1.bf16.msra.mxu0 0
      %3801 = vmatprep.subr.bf16.mxu0 0
      %3802 = vmatpush1.bf16.msra.mxu0 0
      %3803 = vmatprep.subr.bf16.mxu0 0
      %3804 = vmatpush1.bf16.msra.mxu0 0
      %3805 = vmatprep.subr.bf16.mxu0 0
      %3806 = vmatpush1.bf16.msra.mxu0 0
      %3807 = vmatprep.subr.bf16.mxu0 0
      %3808 = vmatpush1.bf16.msra.mxu0 0
      %3809 = vmatprep.subr.bf16.mxu0 0
      %3810 = vmatpush1.bf16.msra.mxu0 0
      %3811 = vmatprep.subr.bf16.mxu0 0
      %3812 = vmatpush1.bf16.msra.mxu0 0
      %3813 = vmatprep.subr.bf16.mxu0 0
      %3814 = vmatpush1.bf16.msra.mxu0 0
      %3815 = vmatprep.subr.bf16.mxu0 0
      %3816 = vmatpush1.bf16.msra.mxu0 0
      %3817 = vmatprep.subr.bf16.mxu0 0
      %3818 = vmatpush1.bf16.msra.mxu0 0
      %3819 = vmatprep.subr.bf16.mxu0 0
      %3820 = vmatpush1.bf16.msra.mxu0 0
      %3821 = vmatprep.subr.bf16.mxu0 0
      %3822 = vmatpush1.bf16.msra.mxu0 0
      %3823 = vmatprep.mubr.bf16.mxu0 0
      %3824 = vmatmul.mubr.bf16.gmra.mrb[0].mxu0 %v3787
      %v3825 = vpop.f32.mrb[0].mxu0
      %v3826 = vadd.f32 %v3755, %v3825
      %v3827 = vpop.f32.mrb[0].mxu0
      %v3828 = vpop.f32.mrb[0].mxu0
      %v3829 = vadd.f32 %v3758, %v3828
      %v3830 = vpop.f32.mrb[0].mxu0
      %3831 = vmatprep.mubr.bf16.mxu0 0
      %3832 = vmatmul.mubr.bf16.gmra.mrb[0].mxu0 %v3789
      %v3833 = vpop.f32.mrb[0].mxu0
      %v3834 = vadd.f32 %v3763, %v3833
      %v3835 = vpop.f32.mrb[0].mxu0
      %v3836 = vpop.f32.mrb[0].mxu0
      %v3837 = vadd.f32 %v3766, %v3836
      %v3838 = vpop.f32.mrb[0].mxu0
      %3839 = vdwg.mxu0
      %v3840 = vld [vmem:[%s18] sm:$0xf]
      %v3841 = vld [vmem:[%s18 + $0x4] sm:$0xf]
      %v3842 = vld [vmem:[%s18 + $0x8] sm:$0xf]
      %v3843 = vld [vmem:[%s18 + $0xc] sm:$0xf]
      %v3844 = vld [vmem:[%s18 + $0x10] sm:$0xf]
      %v3845 = vld [vmem:[%s18 + $0x14] sm:$0xf]
      %v3848 = vrot.slane %v3673, 1
      %v3849 = vrot.slane %v3674, 1
      %v3850 = vsel %vm1402, %v3848, %v3849
      %v3857 = vunpack.c.l.b16 %v3840
      %v3858 = vunpack.c.l.b16 %v3841
      %v3859 = vunpack.c.l.b16 %v3842
      %v3860 = vunpack.c.l.b16 %v3843
      %v3861 = vunpack.c.l.b16 %v3844
      %v3862 = vunpack.c.l.b16 %v3845
      %v3863 = vpack.c.b16 %v3858, %v3857
      %v3864 = vpack.c.b16 %v3860, %v3859
      %v3865 = vpack.c.b16 %v3862, %v3861
      %v3870 = vsel %vm3007, %v3850, 0
      %v3873 = vsel %vm3007, %v3849, 0
      %3875 = vmatprep.subr.bf16.mxu0 0
      %3876 = vmatpush1.bf16.msra.mxu0 %v3863
      %3877 = vmatprep.subr.bf16.mxu0 0
      %3878 = vmatpush1.bf16.msra.mxu0 %v3864
      %3879 = vmatprep.subr.bf16.mxu0 0
      %3880 = vmatpush1.bf16.msra.mxu0 %v3865
      %3881 = vmatprep.subr.bf16.mxu0 0
      %3882 = vmatpush1.bf16.msra.mxu0 0
      %3883 = vmatprep.subr.bf16.mxu0 0
      %3884 = vmatpush1.bf16.msra.mxu0 0
      %3885 = vmatprep.subr.bf16.mxu0 0
      %3886 = vmatpush1.bf16.msra.mxu0 0
      %3887 = vmatprep.subr.bf16.mxu0 0
      %3888 = vmatpush1.bf16.msra.mxu0 0
      %3889 = vmatprep.subr.bf16.mxu0 0
      %3890 = vmatpush1.bf16.msra.mxu0 0
      %3891 = vmatprep.subr.bf16.mxu0 0
      %3892 = vmatpush1.bf16.msra.mxu0 0
      %3893 = vmatprep.subr.bf16.mxu0 0
      %3894 = vmatpush1.bf16.msra.mxu0 0
      %3895 = vmatprep.subr.bf16.mxu0 0
      %3896 = vmatpush1.bf16.msra.mxu0 0
      %3897 = vmatprep.subr.bf16.mxu0 0
      %3898 = vmatpush1.bf16.msra.mxu0 0
      %3899 = vmatprep.subr.bf16.mxu0 0
      %3900 = vmatpush1.bf16.msra.mxu0 0
      %3901 = vmatprep.subr.bf16.mxu0 0
      %3902 = vmatpush1.bf16.msra.mxu0 0
      %3903 = vmatprep.subr.bf16.mxu0 0
      %3904 = vmatpush1.bf16.msra.mxu0 0
      %3905 = vmatprep.subr.bf16.mxu0 0
      %3906 = vmatpush1.bf16.msra.mxu0 0
      %3907 = vmatprep.mubr.bf16.mxu0 0
      %3908 = vmatmul.mubr.bf16.gmra.mrb[0].mxu0 %v3870
      %v3909 = vpop.f32.mrb[0].mxu0
      %v3910 = vadd.f32 0.0, %v3909
      %v3911 = vpop.f32.mrb[0].mxu0
      %v3912 = vpop.f32.mrb[0].mxu0
      %v3913 = vadd.f32 0.0, %v3912
      %v3914 = vpop.f32.mrb[0].mxu0
      %3915 = vmatprep.mubr.bf16.mxu0 0
      %3916 = vmatmul.mubr.bf16.gmra.mrb[0].mxu0 %v3873
      %v3917 = vpop.f32.mrb[0].mxu0
      %v3918 = vadd.f32 0.0, %v3917
      %v3919 = vpop.f32.mrb[0].mxu0
      %v3920 = vpop.f32.mrb[0].mxu0
      %v3921 = vadd.f32 0.0, %v3920
      %v3922 = vpop.f32.mrb[0].mxu0
      %3923 = vdwg.mxu0
      %v3924 = vadd.f32 %v3826, %v3910
      %v3925 = vadd.f32 %v3829, %v3913
      %v3926 = vadd.f32 %v3834, %v3918
      %v3927 = vadd.f32 %v3837, %v3921
      %v3928 = vmax.f32 %v3924, 0.0
      %v3929 = vmax.f32 %v3925, 0.0
      %v3930 = vmax.f32 %v3926, 0.0
      %v3931 = vmax.f32 %v3927, 0.0
      %v3932 = vld [vmem:[%s25] sm:$0xf]
      %v3933 = vld [vmem:[%s25 + $0x4] sm:$0xf]
      %v3934 = vld [vmem:[%s25 + $0x8] sm:$0xf]
      %v3935 = vld [vmem:[%s25 + $0xc] sm:$0xf]
      %v3936 = vld [vmem:[%s26] sm:$0xf]
      %v3937 = vld [vmem:[%s26 + $0x4] sm:$0xf]
      %v3938 = vld [vmem:[%s26 + $0x8] sm:$0xf]
      %v3939 = vld [vmem:[%s26 + $0xc] sm:$0xf]
      %v3940 = vpack.c.bf16 %v3929, %v3928
      %v3941 = vpack.c.bf16 %v3931, %v3930
      %v3946 = vunpack.c.l.b16 %v3932
      %v3947 = vunpack.c.l.b16 %v3933
      %v3948 = vunpack.c.l.b16 %v3934
      %v3949 = vunpack.c.l.b16 %v3935
      %v3950 = vpack.c.b16 %v3947, %v3946
      %v3951 = vpack.c.b16 %v3949, %v3948
      %v3953 = vsel %vm3246, %v3950, 0
      %v3956 = vsel %vm3246, %v3951, 0
      %v3959 = vsel %vm2348, %v3941, 0
      %3961 = vmatprep.subr.bf16.mxu0 0
      %3962 = vmatpush1.bf16.msra.mxu0 %v3940
      %3963 = vmatprep.subr.bf16.mxu0 0
      %3964 = vmatpush1.bf16.msra.mxu0 %v3959
      %3965 = vmatprep.subr.bf16.mxu0 0
      %3966 = vmatpush1.bf16.msra.mxu0 0
      %3967 = vmatprep.subr.bf16.mxu0 0
      %3968 = vmatpush1.bf16.msra.mxu0 0
      %3969 = vmatprep.subr.bf16.mxu0 0
      %3970 = vmatpush1.bf16.msra.mxu0 0
      %3971 = vmatprep.subr.bf16.mxu0 0
      %3972 = vmatpush1.bf16.msra.mxu0 0
      %3973 = vmatprep.subr.bf16.mxu0 0
      %3974 = vmatpush1.bf16.msra.mxu0 0
      %3975 = vmatprep.subr.bf16.mxu0 0
      %3976 = vmatpush1.bf16.msra.mxu0 0
      %3977 = vmatprep.subr.bf16.mxu0 0
      %3978 = vmatpush1.bf16.msra.mxu0 0
      %3979 = vmatprep.subr.bf16.mxu0 0
      %3980 = vmatpush1.bf16.msra.mxu0 0
      %3981 = vmatprep.subr.bf16.mxu0 0
      %3982 = vmatpush1.bf16.msra.mxu0 0
      %3983 = vmatprep.subr.bf16.mxu0 0
      %3984 = vmatpush1.bf16.msra.mxu0 0
      %3985 = vmatprep.subr.bf16.mxu0 0
      %3986 = vmatpush1.bf16.msra.mxu0 0
      %3987 = vmatprep.subr.bf16.mxu0 0
      %3988 = vmatpush1.bf16.msra.mxu0 0
      %3989 = vmatprep.subr.bf16.mxu0 0
      %3990 = vmatpush1.bf16.msra.mxu0 0
      %3991 = vmatprep.subr.bf16.mxu0 0
      %3992 = vmatpush1.bf16.msra.mxu0 0
      %3993 = vmatprep.mubr.bf16.mxu0 0
      %3994 = vmatmul.mubr.bf16.gmra.mrb[0].mxu0 %v3953
      %v3995 = vpop.f32.mrb[0].mxu0
      %v3996 = vadd.f32 0.0, %v3995
      %v3997 = vpop.f32.mrb[0].mxu0
      %v3998 = vpop.f32.mrb[0].mxu0
      %v3999 = vadd.f32 0.0, %v3998
      %v4000 = vpop.f32.mrb[0].mxu0
      %4001 = vmatprep.mubr.bf16.mxu0 0
      %4002 = vmatmul.mubr.bf16.gmra.mrb[0].mxu0 %v3956
      %v4003 = vpop.f32.mrb[0].mxu0
      %v4004 = vadd.f32 0.0, %v4003
      %v4005 = vpop.f32.mrb[0].mxu0
      %v4006 = vpop.f32.mrb[0].mxu0
      %v4007 = vadd.f32 0.0, %v4006
      %v4008 = vpop.f32.mrb[0].mxu0
      %4009 = vdwg.mxu0
      %v4010 = vpack.c.bf16 %v3999, %v3996
      %v4011 = vpack.c.bf16 %v4007, %v4004
      %v4016 = vunpack.c.l.b16 %v3936
      %v4017 = vunpack.c.l.b16 %v3937
      %v4018 = vunpack.c.l.b16 %v3938
      %v4019 = vunpack.c.l.b16 %v3939
      %v4020 = vpack.c.b16 %v4017, %v4016
      %v4021 = vpack.c.b16 %v4019, %v4018
      %v4025 = vsel %vm1080, %v4010, 0
      %v4028 = vsel %vm1080, %v4011, 0
      %4030 = vmatprep.subr.bf16.mxu0 0
      %4031 = vmatpush1.bf16.msra.mxu0 %v4020
      %4032 = vmatprep.subr.bf16.mxu0 0
      %4033 = vmatpush1.bf16.msra.mxu0 %v4021
      %4034 = vmatprep.subr.bf16.mxu0 0
      %4035 = vmatpush1.bf16.msra.mxu0 0
      %4036 = vmatprep.subr.bf16.mxu0 0
      %4037 = vmatpush1.bf16.msra.mxu0 0
      %4038 = vmatprep.subr.bf16.mxu0 0
      %4039 = vmatpush1.bf16.msra.mxu0 0
      %4040 = vmatprep.subr.bf16.mxu0 0
      %4041 = vmatpush1.bf16.msra.mxu0 0
      %4042 = vmatprep.subr.bf16.mxu0 0
      %4043 = vmatpush1.bf16.msra.mxu0 0
      %4044 = vmatprep.subr.bf16.mxu0 0
      %4045 = vmatpush1.bf16.msra.mxu0 0
      %4046 = vmatprep.subr.bf16.mxu0 0
      %4047 = vmatpush1.bf16.msra.mxu0 0
      %4048 = vmatprep.subr.bf16.mxu0 0
      %4049 = vmatpush1.bf16.msra.mxu0 0
      %4050 = vmatprep.subr.bf16.mxu0 0
      %4051 = vmatpush1.bf16.msra.mxu0 0
      %4052 = vmatprep.subr.bf16.mxu0 0
      %4053 = vmatpush1.bf16.msra.mxu0 0
      %4054 = vmatprep.subr.bf16.mxu0 0
      %4055 = vmatpush1.bf16.msra.mxu0 0
      %4056 = vmatprep.subr.bf16.mxu0 0
      %4057 = vmatpush1.bf16.msra.mxu0 0
      %4058 = vmatprep.subr.bf16.mxu0 0
      %4059 = vmatpush1.bf16.msra.mxu0 0
      %4060 = vmatprep.subr.bf16.mxu0 0
      %4061 = vmatpush1.bf16.msra.mxu0 0
      %4062 = vmatprep.mubr.bf16.mxu0 0
      %4063 = vmatmul.mubr.bf16.gmra.mrb[0].mxu0 %v4025
      %v4064 = vpop.f32.mrb[0].mxu0
      %v4065 = vadd.f32 0.0, %v4064
      %v4066 = vpop.f32.mrb[0].mxu0
      %v4067 = vpop.f32.mrb[0].mxu0
      %v4068 = vadd.f32 0.0, %v4067
      %v4069 = vpop.f32.mrb[0].mxu0
      %4070 = vmatprep.mubr.bf16.mxu0 0
      %4071 = vmatmul.mubr.bf16.gmra.mrb[0].mxu0 %v4028
      %v4072 = vpop.f32.mrb[0].mxu0
      %v4073 = vadd.f32 0.0, %v4072
      %v4074 = vpop.f32.mrb[0].mxu0
      %v4075 = vpop.f32.mrb[0].mxu0
      %v4076 = vadd.f32 0.0, %v4075
      %v4077 = vpop.f32.mrb[0].mxu0
      %4078 = vdwg.mxu0
      %v4079 = vadd.f32 %v2666, %v4065
      %v4080 = vadd.f32 %v2667, %v4068
      %v4081 = vadd.f32 %v2668, %v4073
      %v4082 = vadd.f32 %v2669, %v4076
      %4083 = vst.msk [vmem:[%s823] sm:$0xff] %vm2727, %v4079
      %4084 = vst.msk [vmem:[%s823 + $0x8] sm:$0xff] %vm2727, %v4080
      %4085 = vst.msk [vmem:[%s823 + $0x10] sm:$0xff] %vm2727, %v4081
      %4086 = vst.msk [vmem:[%s823 + $0x18] sm:$0xff] %vm2727, %v4082
      %s4087 = smul.u32 4, %s38
      %p4088 = scmp.lt.s32.totalorder %s4087, 7
      %s4089 = scalar_select %p4088, %s4087, 7
      %s4090 = smul.addr %s4089, 8
      %s4091 = scalar_lea.vmem %s27, %s4090
      // Predicated region
      $region129: #{_lambda_.1} parent=127 // pred_check
        %p4092 = pneg %p628
      $region130: #{_lambda_.1} parent=127 // pred_check_branch
        %4094 = sbr.rel (%p4092) target = $region132
      $region131: #{_lambda_.1} parent=127 // pred_region
        %s4095 = smul.u32 4, %s38
      $region132: #{_lambda_.1} parent=127 // pred_fallthru
        _
    $region128: #{_lambda_.1} parent=5 // pred_fallthru
      _
    %p4096 = scmp.le.s32.totalorder 2, %s33
    // Predicated region
    $region133: #{_lambda_.1} parent=5 // pred_check
      %p4097 = pneg %p4096
    $region134: #{_lambda_.1} parent=5 // pred_check_branch
      %4099 = sbr.rel (%p4097) target = $region136
    $region135: #{_lambda_.1} parent=5 // pred_region
      %s4100 = ssub.s32 %s33, 2
      // Predicated region
      $region137: #{_lambda_.1} parent=135 // pred_check
        %p4101 = pneg %p634
      $region138: #{_lambda_.1} parent=135 // pred_check_branch
        %4103 = sbr.rel (%p4101) target = $region140
      $region139: #{_lambda_.1} parent=135 // pred_region
        %s4104 = smul.u32 4, %s39
        %p4105 = scmp.lt.s32.totalorder %s4104, 7
        %s4106 = scalar_select %p4105, %s4104, 7
        %s4107 = smul.addr %s4106, 8
        %s4108 = scalar_lea.vmem %s27, %s4107
      $region140: #{_lambda_.1} parent=135 // pred_fallthru
        _
    $region136: #{_lambda_.1} parent=5 // pred_fallthru
      _
  $region6: #{_lambda_.1} parent=0 // loop_footer
    %s37 = sadd.s32 1, %s33
  $region7: #{_lambda_.1} parent=0 // loop_footer_branch
    %32 = sbr.rel target = $region3
  $region8: #{_lambda_.1} parent=0 // loop_exit
    _

</llo_original>
